<compile_context>
chip_gen: v6e
topology: v6e:2x2x1
jax: 0.10.0
libtpu: 0.0.40
codegen_flags: <defaults>
</compile_context>

<pallas_src>
import functools

import jax
import jax.numpy as jnp
from jax import lax
from jax.experimental import pallas as pl
from jax.experimental.pallas import tpu as pltpu


def _round_up(x, m):
    return ((x + m - 1) // m) * m


def _round_down(x, m):
    return (x // m) * m


# ---------------------------------------------------------------------------
# Kernel
# ---------------------------------------------------------------------------
def _rvq_kernel(x_ref, emb_ref, e2_ref, q_ref, ind_ref, *,
                bf16_dist, k_chunk, unroll_layers):
    """Fused residual VQ over all n_q layers for one tile of frames.

    x_ref:   [TM, Dp]      f32       frame tile (initial residual)
    emb_ref: [n_q, K, Dp]  f32/bf16  per-layer codebooks (pinned, single-buffered)
    e2_ref:  [n_q, 1, K]   f32       0.5 * ||e||^2 per codeword (pinned)
    q_ref:   [TM, Dp]      f32       sum over layers of quantized vectors
    ind_ref: [n_q, 1, TM]  i32       nearest-codeword indices (lane-dense)
    """
    n_q, K, Dp = emb_ref.shape
    TM = x_ref.shape[0]
    kc = k_chunk
    n_chunks = K // kc
    dist_dtype = jnp.bfloat16 if bf16_dist else jnp.float32

    x0 = x_ref[...].astype(jnp.float32)                        # [TM, Dp]
    # Layer-invariant iota, hoisted out of the layer loop (JAX does not CSE iotas).
    iota = lax.broadcasted_iota(jnp.int32, (TM, kc), 1)

    def layer_body(i, residual):
        xr = residual.astype(dist_dtype)                        # [TM, Dp]

        if n_chunks == 1:
            e = emb_ref[i]                                      # [K, Dp]
            xe = lax.dot_general(xr, e, (((1,), (1,)), ((), ())),
                                 preferred_element_type=jnp.float32)   # [TM, K]
            # argmax of -(||x||^2 - 2 x.e + ||e||^2) == argmax of (x.e - 0.5||e||^2)
            score = xe - e2_ref[i]                              # [TM, K]
            best = jnp.max(score, axis=-1, keepdims=True)       # [TM, 1]
            idx = jnp.min(jnp.where(score == best, iota, K),
                          axis=-1, keepdims=True)               # first-occurrence ties
            onehot = (iota == idx).astype(e.dtype)              # [TM, K]
            quant = jnp.dot(onehot, e,
                            preferred_element_type=jnp.float32)  # [TM, Dp] exact rows
        else:
            # K-chunked search with running (best_score, best_idx) carry: the live
            # working set is [TM, kc] instead of [TM, K] (v5e vreg pressure).
            best = jnp.full((TM, 1), -jnp.inf, jnp.float32)
            idx = jnp.zeros((TM, 1), jnp.int32)
            for c in range(n_chunks):
                e_c = emb_ref[i, pl.ds(c * kc, kc), :]          # [kc, Dp]
                xe = lax.dot_general(xr, e_c, (((1,), (1,)), ((), ())),
                                     preferred_element_type=jnp.float32)
                score = xe - e2_ref[i, :, pl.ds(c * kc, kc)]    # [TM, kc]
                cbest = jnp.max(score, axis=-1, keepdims=True)
                cidx = jnp.min(jnp.where(score == cbest, iota, kc),
                               axis=-1, keepdims=True) + c * kc
                take = cbest > best                             # strict >: first occ.
                idx = jnp.where(take, cidx, idx)
                best = jnp.where(take, cbest, best)
            # Second pass: exact dequant via chunked one-hot matmuls.
            quant = jnp.zeros((TM, Dp), jnp.float32)
            for c in range(n_chunks):
                e_c = emb_ref[i, pl.ds(c * kc, kc), :]
                onehot = (iota == (idx - c * kc)).astype(e_c.dtype)
                quant = quant + jnp.dot(onehot, e_c,
                                        preferred_element_type=jnp.float32)

        # Lane-dense index store.  NOTE: the [TM,1] -> [TM] relayout is one XLU op
        # per layer/tile; only restructure if a bundle dump shows XLU saturated.
        ind_ref[i, 0, :] = idx[:, 0]
        return residual - quant

    if unroll_layers:
        residual = x0
        for i in range(n_q):
            residual = layer_body(i, residual)
    else:
        residual = lax.fori_loop(0, n_q, layer_body, x0)

    # sum_k quantized_k == x - final residual (drops the q accumulator + adds).
    q_ref[...] = (x0 - residual).astype(q_ref.dtype)


# ---------------------------------------------------------------------------
# pallas_call plumbing
# ---------------------------------------------------------------------------
def _pinned_spec(shape):
    """Grid-invariant VMEM-resident block; single-buffered (never re-fetched)."""
    idx_map = lambda m: (0,) * len(shape)
    try:
        return pl.BlockSpec(shape, idx_map, pipeline_mode=pl.Buffered(1))
    except (AttributeError, TypeError):      # older jax without pipeline_mode
        return pl.BlockSpec(shape, idx_map)


def _rvq_pallas(x_pad, embeds, e2_half, tile_m, bf16_dist, k_chunk, unroll_layers,
                vmem_limit):
    Mp, Dp = x_pad.shape
    n_q, K, _ = embeds.shape

    kernel = functools.partial(_rvq_kernel, bf16_dist=bf16_dist,
                               k_chunk=k_chunk, unroll_layers=unroll_layers)
    q, ind = pl.pallas_call(
        kernel,
        out_shape=(
            jax.ShapeDtypeStruct((Mp, Dp), x_pad.dtype),
            jax.ShapeDtypeStruct((n_q, 1, Mp), jnp.int32),
        ),
        grid=(Mp // tile_m,),
        in_specs=[
            pl.BlockSpec((tile_m, Dp), lambda m: (m, 0)),   # frame tile (pipelined)
            _pinned_spec((n_q, K, Dp)),                      # codebooks, pinned
            _pinned_spec((n_q, 1, K)),                       # 0.5*||e||^2, pinned
        ],
        out_specs=(
            pl.BlockSpec((tile_m, Dp), lambda m: (m, 0)),
            pl.BlockSpec((n_q, 1, tile_m), lambda m: (0, 0, m)),  # lane-dense indices
        ),
        compiler_params=pltpu.CompilerParams(
            dimension_semantics=("parallel",),
            vmem_limit_bytes=int(vmem_limit),
        ),
    )(x_pad, embeds, e2_half)
    return q, ind


# ---------------------------------------------------------------------------
# Wrapper (tile / VMEM budgeting + layout plumbing)
# ---------------------------------------------------------------------------
def _vmem_cap_bytes():
    """Per-generation VMEM budget for this kernel (best-effort device sniff)."""
    try:
        kind = jax.devices()[0].device_kind.lower()
    except Exception:
        kind = ""
    if "v7" in kind or "7x" in kind:
        return 56 << 20          # v7x: 64 MiB physical per TensorCore, keep headroom
    return 100 << 20             # v5e / v6e: 128 MiB physical


def _vmem_need_bytes(n_q, K, Dp, tm, cb_itemsize, kc):
    cb = n_q * K * Dp * cb_itemsize          # codebooks (single-buffered)
    e2 = n_q * K * 4
    tiles = 2 * 2 * tm * Dp * 4              # x + q tiles, double-buffered
    ind = 2 * n_q * tm * 4                   # index tile, double-buffered
    work = (5 * kc + 3 * Dp) * tm * 4        # search / dequant intermediates
    return cb + e2 + tiles + ind + work + (4 << 20)


@functools.partial(jax.jit, static_argnames=("n_q", "tile_m", "bf16_dist",
                                             "k_chunk", "unroll_layers"))
def residual_vector_quantization_forward(x, embeds, n_q=None, tile_m=512,
                                         bf16_dist=False, k_chunk=None,
                                         unroll_layers=None):
    """Eval-mode forward of ResidualVectorQuantization.

    x:      [B, D, N] float32    (PyTorch conv layout)
    embeds: [n_layers, K, D]     per-layer codebooks
    Returns (quantized_out [B, D, N], indices [n_q, B, N] i32, losses [n_q, 1]).
    bf16_dist=True uses bf16 codebooks on the MXU (recommended on v6e/v7x); indices
    may then differ from f32 on near-ties.
    """
    B, D, N = x.shape
    n_layers, K, De = embeds.shape
    assert De == D, "codebook dim must match feature dim (project_in is Identity)"
    n_q = n_q or n_layers
    embeds = embeds[:n_q]

    # K-chunk size for the in-kernel argmax working set (v5e vreg pressure).
    if k_chunk is None:
        kc = K if (K <= 512 or K % 512 != 0) else 512
    else:
        assert K % k_chunk == 0, "k_chunk must divide the codebook size"
        kc = k_chunk
    if unroll_layers is None:
        unroll_layers = n_q <= 8

    M = B * N
    Dp = _round_up(D, 128)
    cb_itemsize = 2 if bf16_dist else 4

    # Tile selection: TM % 128 == 0, >= 2 grid steps when possible (megacore / v7x),
    # shrink until the VMEM working set fits the per-generation budget.
    cap = _vmem_cap_bytes()
    Mp128 = _round_up(M, 128)
    TM = max(128, _round_down(min(tile_m, Mp128), 128))
    if Mp128 >= 256 and TM > Mp128 // 2:
        TM = max(128, _round_down(Mp128 // 2, 128))
    while TM > 128 and _vmem_need_bytes(n_q, K, Dp, TM, cb_itemsize, kc) > cap:
        TM = max(128, _round_down(TM // 2, 128))
    vmem_limit = min(max(_vmem_need_bytes(n_q, K, Dp, TM, cb_itemsize, kc),
                         32 << 20), cap)
    Mp = _round_up(M, TM)

    # (B, D, N) -> flat frames [M, D]; zero-pad M and D once (distance/dequant
    # neutral, keeps MXU fed and all stores lane-dense).
    x_flat = jnp.transpose(x, (0, 2, 1)).reshape(M, D)
    x_pad = jnp.pad(x_flat, ((0, Mp - M), (0, Dp - D)))
    e_pad = jnp.pad(embeds.astype(jnp.float32), ((0, 0), (0, 0), (0, Dp - D)))
    e2_half = (0.5 * jnp.sum(e_pad * e_pad, axis=-1))[:, None, :]   # [n_q, 1, K] f32
    cb = e_pad.astype(jnp.bfloat16) if bf16_dist else e_pad

    q_pad, ind_pad = _rvq_pallas(x_pad, cb, e2_half, TM, bf16_dist, kc,
                                 unroll_layers, vmem_limit)

    q_flat = q_pad[:M, :D]
    quantized_out = jnp.transpose(q_flat.reshape(B, N, D), (0, 2, 1))
    indices = ind_pad[:, 0, :M].reshape(n_q, B, N)
    losses = jnp.zeros((n_q, 1), dtype=x.dtype)   # eval mode: per-layer loss = [0.0]
    return quantized_out, indices, losses


# ---------------------------------------------------------------------------
# Pure-JAX reference (mirrors the PyTorch eval-mode forward)
# ---------------------------------------------------------------------------
def _reference_forward(x, embeds, n_q):
    B, D, N = x.shape
    quantized_out = jnp.zeros_like(x)
    residual = x
    inds = []
    for i in range(n_q):
        xt = jnp.transpose(residual, (0, 2, 1)).reshape(B * N, D)
        e = embeds[i]
        dist = -(jnp.sum(xt ** 2, 1, keepdims=True) - 2 * xt @ e.T
                 + jnp.sum(e ** 2, 1)[None, :])
        ind = jnp.argmax(dist, axis=-1)
        q = e[ind]
        quantized = jnp.transpose(q.reshape(B, N, D), (0, 2, 1))
        residual = residual - quantized
        quantized_out = quantized_out + quantized
        inds.append(ind.reshape(B, N))
    return quantized_out, jnp.stack(inds)


if __name__ == "__main__":
    num_quantizers = 4
    B, D, N = 2, 32, 8          # batch, feature dim, sequence length
    K = 256                     # codebook_size

    key = jax.random.PRNGKey(0)
    kx, ke = jax.random.split(key)
    x = jax.random.normal(kx, (B, D, N), dtype=jnp.float32)
    embeds = jax.random.normal(ke, (num_quantizers, K, D), dtype=jnp.float32) * 0.5

    q_want, ind_want = _reference_forward(x, embeds, num_quantizers)

    # 1) default path: layers unrolled, single-pass K search, f32 MXU (bit-exact).
    q1, i1, l1 = residual_vector_quantization_forward(x, embeds)
    jax.block_until_ready((q1, i1, l1))
    assert q1.shape == (B, D, N) and i1.shape == (num_quantizers, B, N)
    assert l1.shape == (num_quantizers, 1)
    assert jnp.array_equal(i1, ind_want), "indices mismatch (default path)"
    assert jnp.allclose(q1, q_want, atol=1e-5), "quantized mismatch (default path)"

    # 2) fori_loop over layers + K-chunked argmax (large n_q / large-K configuration).
    q2, i2, _ = residual_vector_quantization_forward(
        x, embeds, unroll_layers=False, k_chunk=128)
    jax.block_until_ready((q2, i2))
    assert jnp.array_equal(i2, ind_want), "indices mismatch (fori/k-chunk path)"
    assert jnp.allclose(q2, q_want, atol=1e-5), "quantized mismatch (fori/k-chunk path)"

    # 3) bf16 distance/dequant path (v6e/v7x MXU): indices can differ on near-ties,
    #    so only validate shape / finiteness here.
    q3, i3, _ = residual_vector_quantization_forward(x, embeds, bf16_dist=True)
    jax.block_until_ready((q3, i3))
    assert q3.shape == (B, D, N) and i3.shape == (num_quantizers, B, N)
    assert bool(jnp.isfinite(q3).all())

    print("KERNEL_OK")
</pallas_src>

<mosaic_0001>
module attributes {stable_mosaic.version = 11 : i64} {
  func.func @_rvq_kernel(%arg0: i32, %arg1: memref<128x128xf32, #tpu.memory_space<vmem>>, %arg2: memref<4x256x128xf32, #tpu.memory_space<vmem>>, %arg3: memref<4x1x256xf32, #tpu.memory_space<vmem>>, %arg4: memref<128x128xf32, #tpu.memory_space<vmem>>, %arg5: memref<4x1x128xi32, #tpu.memory_space<vmem>>) attributes {dimension_semantics = [#tpu.dimension_semantics<parallel>], iteration_bounds = array<i64: 1>, scalar_prefetch = 0 : i64, scratch_operands = 0 : i64, tpu.core_type = #tpu.core_type<tc>, window_params = [{transform_indices = @transform_0, window_bounds = array<i64: 128, 128>}, {pipeline_mode = #tpu.pipeline_mode<synchronous>, transform_indices = @transform_1, window_bounds = array<i64: 4, 256, 128>}, {pipeline_mode = #tpu.pipeline_mode<synchronous>, transform_indices = @transform_2, window_bounds = array<i64: 4, 1, 256>}, {transform_indices = @transform_3, window_bounds = array<i64: 128, 128>}, {transform_indices = @transform_4, window_bounds = array<i64: 4, 1, 128>}]} {
    %c0 = arith.constant 0 : index
    %c0_0 = arith.constant 0 : index
    %0 = vector.load %arg1[%c0, %c0_0] : memref<128x128xf32, #tpu.memory_space<vmem>>, vector<128x128xf32>
    %1 = tpu.iota {dimensions = array<i32: 1>} : vector<128x256xi32>
    %c0_1 = arith.constant 0 : index
    %c0_2 = arith.constant 0 : index
    %c0_3 = arith.constant 0 : index
    %2 = vector.load %arg2[%c0_1, %c0_2, %c0_3] : memref<4x256x128xf32, #tpu.memory_space<vmem>>, vector<1x256x128xf32>
    %3 = vector.shape_cast %2 : vector<1x256x128xf32> to vector<256x128xf32>
    %cst = arith.constant dense<0.000000e+00> : vector<128x256xf32>
    %4 = tpu.matmul %0, %3, %cst {dimension_numbers = #tpu.dot_dimension_numbers<[1], [1], [0], [0], [0, 0, 1, 0], [], []>} : vector<128x128xf32>, vector<256x128xf32>, vector<128x256xf32> -> vector<128x256xf32>
    %c0_4 = arith.constant 0 : index
    %c0_5 = arith.constant 0 : index
    %c0_6 = arith.constant 0 : index
    %5 = vector.load %arg3[%c0_4, %c0_5, %c0_6] : memref<4x1x256xf32, #tpu.memory_space<vmem>>, vector<1x1x256xf32>
    %6 = vector.shape_cast %5 : vector<1x1x256xf32> to vector<1x256xf32>
    %7 = vector.broadcast %6 : vector<1x256xf32> to vector<128x256xf32>
    %8 = arith.subf %4, %7 : vector<128x256xf32>
    %cst_7 = arith.constant dense<0xFF800000> : vector<128xf32>
    %9 = vector.multi_reduction <maximumf>, %8, %cst_7 [1] : vector<128x256xf32> to vector<128xf32>
    %10 = vector.shape_cast %9 : vector<128xf32> to vector<128x1xf32>
    %11 = vector.broadcast %10 : vector<128x1xf32> to vector<128x256xf32>
    %12 = arith.cmpf oeq, %8, %11 : vector<128x256xf32>
    %c256_i32 = arith.constant 256 : i32
    %13 = vector.broadcast %c256_i32 : i32 to vector<128x256xi32>
    %14 = arith.select %12, %1, %13 : vector<128x256xi1>, vector<128x256xi32>
    %cst_8 = arith.constant dense<2147483647> : vector<128xi32>
    %15 = vector.multi_reduction <minsi>, %14, %cst_8 [1] : vector<128x256xi32> to vector<128xi32>
    %16 = vector.shape_cast %15 : vector<128xi32> to vector<128x1xi32>
    %17 = vector.broadcast %16 : vector<128x1xi32> to vector<128x256xi32>
    %18 = arith.cmpi eq, %1, %17 : vector<128x256xi32>
    %19 = arith.extui %18 : vector<128x256xi1> to vector<128x256xi32>
    %20 = arith.sitofp %19 : vector<128x256xi32> to vector<128x256xf32>
    %cst_9 = arith.constant dense<0.000000e+00> : vector<128x128xf32>
    %21 = tpu.matmul %20, %3, %cst_9 {dimension_numbers = #tpu.dot_dimension_numbers<[1], [0], [0], [1], [0, 0, 1, 1], [], []>} : vector<128x256xf32>, vector<256x128xf32>, vector<128x128xf32> -> vector<128x128xf32>
    %22 = vector.shape_cast %16 : vector<128x1xi32> to vector<128xi32>
    %c0_10 = arith.constant 0 : index
    %c0_11 = arith.constant 0 : index
    %c0_12 = arith.constant 0 : index
    %23 = vector.load %arg5[%c0_10, %c0_11, %c0_12] : memref<4x1x128xi32, #tpu.memory_space<vmem>>, vector<1x1x128xi32>
    %24 = vector.shape_cast %23 : vector<1x1x128xi32> to vector<128xi32>
    %25 = vector.shape_cast %22 : vector<128xi32> to vector<1x1x128xi32>
    tpu.vector_store %arg5[%c0_10, %c0_11, %c0_12], %25 {strides = array<i32>} : memref<4x1x128xi32, #tpu.memory_space<vmem>>, vector<1x1x128xi32>,
    %26 = arith.subf %0, %21 : vector<128x128xf32>
    %c1 = arith.constant 1 : index
    %c0_13 = arith.constant 0 : index
    %c0_14 = arith.constant 0 : index
    %27 = vector.load %arg2[%c1, %c0_13, %c0_14] : memref<4x256x128xf32, #tpu.memory_space<vmem>>, vector<1x256x128xf32>
    %28 = vector.shape_cast %27 : vector<1x256x128xf32> to vector<256x128xf32>
    %cst_15 = arith.constant dense<0.000000e+00> : vector<128x256xf32>
    %29 = tpu.matmul %26, %28, %cst_15 {dimension_numbers = #tpu.dot_dimension_numbers<[1], [1], [0], [0], [0, 0, 1, 0], [], []>} : vector<128x128xf32>, vector<256x128xf32>, vector<128x256xf32> -> vector<128x256xf32>
    %c1_16 = arith.constant 1 : index
    %c0_17 = arith.constant 0 : index
    %c0_18 = arith.constant 0 : index
    %30 = vector.load %arg3[%c1_16, %c0_17, %c0_18] : memref<4x1x256xf32, #tpu.memory_space<vmem>>, vector<1x1x256xf32>
    %31 = vector.shape_cast %30 : vector<1x1x256xf32> to vector<1x256xf32>
    %32 = vector.broadcast %31 : vector<1x256xf32> to vector<128x256xf32>
    %33 = arith.subf %29, %32 : vector<128x256xf32>
    %cst_19 = arith.constant dense<0xFF800000> : vector<128xf32>
    %34 = vector.multi_reduction <maximumf>, %33, %cst_19 [1] : vector<128x256xf32> to vector<128xf32>
    %35 = vector.shape_cast %34 : vector<128xf32> to vector<128x1xf32>
    %36 = vector.broadcast %35 : vector<128x1xf32> to vector<128x256xf32>
    %37 = arith.cmpf oeq, %33, %36 : vector<128x256xf32>
    %c256_i32_20 = arith.constant 256 : i32
    %38 = vector.broadcast %c256_i32_20 : i32 to vector<128x256xi32>
    %39 = arith.select %37, %1, %38 : vector<128x256xi1>, vector<128x256xi32>
    %cst_21 = arith.constant dense<2147483647> : vector<128xi32>
    %40 = vector.multi_reduction <minsi>, %39, %cst_21 [1] : vector<128x256xi32> to vector<128xi32>
    %41 = vector.shape_cast %40 : vector<128xi32> to vector<128x1xi32>
    %42 = vector.broadcast %41 : vector<128x1xi32> to vector<128x256xi32>
    %43 = arith.cmpi eq, %1, %42 : vector<128x256xi32>
    %44 = arith.extui %43 : vector<128x256xi1> to vector<128x256xi32>
    %45 = arith.sitofp %44 : vector<128x256xi32> to vector<128x256xf32>
    %cst_22 = arith.constant dense<0.000000e+00> : vector<128x128xf32>
    %46 = tpu.matmul %45, %28, %cst_22 {dimension_numbers = #tpu.dot_dimension_numbers<[1], [0], [0], [1], [0, 0, 1, 1], [], []>} : vector<128x256xf32>, vector<256x128xf32>, vector<128x128xf32> -> vector<128x128xf32>
    %47 = vector.shape_cast %41 : vector<128x1xi32> to vector<128xi32>
    %c1_23 = arith.constant 1 : index
    %c0_24 = arith.constant 0 : index
    %c0_25 = arith.constant 0 : index
    %48 = vector.load %arg5[%c1_23, %c0_24, %c0_25] : memref<4x1x128xi32, #tpu.memory_space<vmem>>, vector<1x1x128xi32>
    %49 = vector.shape_cast %48 : vector<1x1x128xi32> to vector<128xi32>
    %50 = vector.shape_cast %47 : vector<128xi32> to vector<1x1x128xi32>
    tpu.vector_store %arg5[%c1_23, %c0_24, %c0_25], %50 {strides = array<i32>} : memref<4x1x128xi32, #tpu.memory_space<vmem>>, vector<1x1x128xi32>,
    %51 = arith.subf %26, %46 : vector<128x128xf32>
    %c2 = arith.constant 2 : index
    %c0_26 = arith.constant 0 : index
    %c0_27 = arith.constant 0 : index
    %52 = vector.load %arg2[%c2, %c0_26, %c0_27] : memref<4x256x128xf32, #tpu.memory_space<vmem>>, vector<1x256x128xf32>
    %53 = vector.shape_cast %52 : vector<1x256x128xf32> to vector<256x128xf32>
    %cst_28 = arith.constant dense<0.000000e+00> : vector<128x256xf32>
    %54 = tpu.matmul %51, %53, %cst_28 {dimension_numbers = #tpu.dot_dimension_numbers<[1], [1], [0], [0], [0, 0, 1, 0], [], []>} : vector<128x128xf32>, vector<256x128xf32>, vector<128x256xf32> -> vector<128x256xf32>
    %c2_29 = arith.constant 2 : index
    %c0_30 = arith.constant 0 : index
    %c0_31 = arith.constant 0 : index
    %55 = vector.load %arg3[%c2_29, %c0_30, %c0_31] : memref<4x1x256xf32, #tpu.memory_space<vmem>>, vector<1x1x256xf32>
    %56 = vector.shape_cast %55 : vector<1x1x256xf32> to vector<1x256xf32>
    %57 = vector.broadcast %56 : vector<1x256xf32> to vector<128x256xf32>
    %58 = arith.subf %54, %57 : vector<128x256xf32>
    %cst_32 = arith.constant dense<0xFF800000> : vector<128xf32>
    %59 = vector.multi_reduction <maximumf>, %58, %cst_32 [1] : vector<128x256xf32> to vector<128xf32>
    %60 = vector.shape_cast %59 : vector<128xf32> to vector<128x1xf32>
    %61 = vector.broadcast %60 : vector<128x1xf32> to vector<128x256xf32>
    %62 = arith.cmpf oeq, %58, %61 : vector<128x256xf32>
    %c256_i32_33 = arith.constant 256 : i32
    %63 = vector.broadcast %c256_i32_33 : i32 to vector<128x256xi32>
    %64 = arith.select %62, %1, %63 : vector<128x256xi1>, vector<128x256xi32>
    %cst_34 = arith.constant dense<2147483647> : vector<128xi32>
    %65 = vector.multi_reduction <minsi>, %64, %cst_34 [1] : vector<128x256xi32> to vector<128xi32>
    %66 = vector.shape_cast %65 : vector<128xi32> to vector<128x1xi32>
    %67 = vector.broadcast %66 : vector<128x1xi32> to vector<128x256xi32>
    %68 = arith.cmpi eq, %1, %67 : vector<128x256xi32>
    %69 = arith.extui %68 : vector<128x256xi1> to vector<128x256xi32>
    %70 = arith.sitofp %69 : vector<128x256xi32> to vector<128x256xf32>
    %cst_35 = arith.constant dense<0.000000e+00> : vector<128x128xf32>
    %71 = tpu.matmul %70, %53, %cst_35 {dimension_numbers = #tpu.dot_dimension_numbers<[1], [0], [0], [1], [0, 0, 1, 1], [], []>} : vector<128x256xf32>, vector<256x128xf32>, vector<128x128xf32> -> vector<128x128xf32>
    %72 = vector.shape_cast %66 : vector<128x1xi32> to vector<128xi32>
    %c2_36 = arith.constant 2 : index
    %c0_37 = arith.constant 0 : index
    %c0_38 = arith.constant 0 : index
    %73 = vector.load %arg5[%c2_36, %c0_37, %c0_38] : memref<4x1x128xi32, #tpu.memory_space<vmem>>, vector<1x1x128xi32>
    %74 = vector.shape_cast %73 : vector<1x1x128xi32> to vector<128xi32>
    %75 = vector.shape_cast %72 : vector<128xi32> to vector<1x1x128xi32>
    tpu.vector_store %arg5[%c2_36, %c0_37, %c0_38], %75 {strides = array<i32>} : memref<4x1x128xi32, #tpu.memory_space<vmem>>, vector<1x1x128xi32>,
    %76 = arith.subf %51, %71 : vector<128x128xf32>
    %c3 = arith.constant 3 : index
    %c0_39 = arith.constant 0 : index
    %c0_40 = arith.constant 0 : index
    %77 = vector.load %arg2[%c3, %c0_39, %c0_40] : memref<4x256x128xf32, #tpu.memory_space<vmem>>, vector<1x256x128xf32>
    %78 = vector.shape_cast %77 : vector<1x256x128xf32> to vector<256x128xf32>
    %cst_41 = arith.constant dense<0.000000e+00> : vector<128x256xf32>
    %79 = tpu.matmul %76, %78, %cst_41 {dimension_numbers = #tpu.dot_dimension_numbers<[1], [1], [0], [0], [0, 0, 1, 0], [], []>} : vector<128x128xf32>, vector<256x128xf32>, vector<128x256xf32> -> vector<128x256xf32>
    %c3_42 = arith.constant 3 : index
    %c0_43 = arith.constant 0 : index
    %c0_44 = arith.constant 0 : index
    %80 = vector.load %arg3[%c3_42, %c0_43, %c0_44] : memref<4x1x256xf32, #tpu.memory_space<vmem>>, vector<1x1x256xf32>
    %81 = vector.shape_cast %80 : vector<1x1x256xf32> to vector<1x256xf32>
    %82 = vector.broadcast %81 : vector<1x256xf32> to vector<128x256xf32>
    %83 = arith.subf %79, %82 : vector<128x256xf32>
    %cst_45 = arith.constant dense<0xFF800000> : vector<128xf32>
    %84 = vector.multi_reduction <maximumf>, %83, %cst_45 [1] : vector<128x256xf32> to vector<128xf32>
    %85 = vector.shape_cast %84 : vector<128xf32> to vector<128x1xf32>
    %86 = vector.broadcast %85 : vector<128x1xf32> to vector<128x256xf32>
    %87 = arith.cmpf oeq, %83, %86 : vector<128x256xf32>
    %c256_i32_46 = arith.constant 256 : i32
    %88 = vector.broadcast %c256_i32_46 : i32 to vector<128x256xi32>
    %89 = arith.select %87, %1, %88 : vector<128x256xi1>, vector<128x256xi32>
    %cst_47 = arith.constant dense<2147483647> : vector<128xi32>
    %90 = vector.multi_reduction <minsi>, %89, %cst_47 [1] : vector<128x256xi32> to vector<128xi32>
    %91 = vector.shape_cast %90 : vector<128xi32> to vector<128x1xi32>
    %92 = vector.broadcast %91 : vector<128x1xi32> to vector<128x256xi32>
    %93 = arith.cmpi eq, %1, %92 : vector<128x256xi32>
    %94 = arith.extui %93 : vector<128x256xi1> to vector<128x256xi32>
    %95 = arith.sitofp %94 : vector<128x256xi32> to vector<128x256xf32>
    %cst_48 = arith.constant dense<0.000000e+00> : vector<128x128xf32>
    %96 = tpu.matmul %95, %78, %cst_48 {dimension_numbers = #tpu.dot_dimension_numbers<[1], [0], [0], [1], [0, 0, 1, 1], [], []>} : vector<128x256xf32>, vector<256x128xf32>, vector<128x128xf32> -> vector<128x128xf32>
    %97 = vector.shape_cast %91 : vector<128x1xi32> to vector<128xi32>
    %c3_49 = arith.constant 3 : index
    %c0_50 = arith.constant 0 : index
    %c0_51 = arith.constant 0 : index
    %98 = vector.load %arg5[%c3_49, %c0_50, %c0_51] : memref<4x1x128xi32, #tpu.memory_space<vmem>>, vector<1x1x128xi32>
    %99 = vector.shape_cast %98 : vector<1x1x128xi32> to vector<128xi32>
    %100 = vector.shape_cast %97 : vector<128xi32> to vector<1x1x128xi32>
    tpu.vector_store %arg5[%c3_49, %c0_50, %c0_51], %100 {strides = array<i32>} : memref<4x1x128xi32, #tpu.memory_space<vmem>>, vector<1x1x128xi32>,
    %101 = arith.subf %76, %96 : vector<128x128xf32>
    %102 = arith.subf %0, %101 : vector<128x128xf32>
    %c0_52 = arith.constant 0 : index
    %c0_53 = arith.constant 0 : index
    %103 = vector.load %arg4[%c0_52, %c0_53] : memref<128x128xf32, #tpu.memory_space<vmem>>, vector<128x128xf32>
    tpu.vector_store %arg4[%c0_52, %c0_53], %102 {strides = array<i32>} : memref<128x128xf32, #tpu.memory_space<vmem>>, vector<128x128xf32>,
    return
  }
  func.func @transform_0(%arg0: i32) -> (i32, i32) {
    %c0_i32 = arith.constant 0 : i32
    %c0_i32_0 = arith.constant 0 : i32
    return %arg0, %c0_i32 : i32, i32
  }
  func.func @transform_1(%arg0: i32) -> (i32, i32, i32) {
    %c0_i32 = arith.constant 0 : i32
    %c0_i32_0 = arith.constant 0 : i32
    %c0_i32_1 = arith.constant 0 : i32
    %c0_i32_2 = arith.constant 0 : i32
    return %c0_i32, %c0_i32_0, %c0_i32_1 : i32, i32, i32
  }
  func.func @transform_2(%arg0: i32) -> (i32, i32, i32) {
    %c0_i32 = arith.constant 0 : i32
    %c0_i32_0 = arith.constant 0 : i32
    %c0_i32_1 = arith.constant 0 : i32
    %c0_i32_2 = arith.constant 0 : i32
    return %c0_i32, %c0_i32_0, %c0_i32_1 : i32, i32, i32
  }
  func.func @transform_3(%arg0: i32) -> (i32, i32) {
    %c0_i32 = arith.constant 0 : i32
    %c0_i32_0 = arith.constant 0 : i32
    return %arg0, %c0_i32 : i32, i32
  }
  func.func @transform_4(%arg0: i32) -> (i32, i32, i32) {
    %c0_i32 = arith.constant 0 : i32
    %c0_i32_0 = arith.constant 0 : i32
    %c0_i32_1 = arith.constant 0 : i32
    return %c0_i32, %c0_i32_0, %arg0 : i32, i32, i32
  }
}

</mosaic_0001>

<llo_original>
// kernel: squeeze.1
$region0: #{squeeze.1}
  %s0 = inlined_call_operand.vmem [shape: s32[4,16], index: 0, kind: input, shape index: {}]
  %s1 = inlined_call_operand.hbm [shape: s32[4,2,8], index: 1, kind: output, shape index: {}]
  $region1: #{squeeze.1} parent=0
    #allocation0 [shape = 'u8[4096]{0}', space=vmem, size = 0x1000, scoped, tag = 'operand span for operand 1']
    #allocation1 [shape = 's32[1]{0}', space=sflag, size = 0x4, scoped, tag = 'scoped memory for squeeze.1']
    #allocation2 [shape = 'u8[16384]{0}', space=vmem, size = 0x4000, scoped, tag = 'scoped mem for output reshape']
    #allocation3 [shape = 'u8[4096]{0}', space=vmem, size = 0x1000, scoped, tag = 'scoped mem for input reshape']
    %2 = vsyncpa [#allocation1], 0
    %s4 = sshll.u32 1, 4
    %s5 = ssub.s32 %s4, 1
    %v6 = vld [vmem:[%s0] sm:%s5]
    %7 = vst [vmem:[#allocation3] sm:%s5] %v6
    %v8 = vld [vmem:[#allocation3] sm:$0xf]
    %vm9 = vcmask 64512
    %10 = vst.msk [vmem:[#allocation2] ss:$8 sm:$0xf] %vm9, %v8
    %v11 = vld [vmem:[#allocation3] sm:$0xf]
    %12 = vrot.lane.b32.xlu0 %v11, 120
    %v13 = vpop.permute.xlu0 %12
    %vm14 = vcmask 64512
    %s15 = scalar_lea.vmem [#allocation2], 1
    %16 = vst.msk [vmem:[%s15] ss:$8 sm:$0xf] %vm14, %v13
    %s18 = sshll.u32 1, 2
    %s19 = ssub.s32 %s18, 1
    %v21 = vld [vmem:[#allocation2] sm:%s19]
    %s22 = sshll.u32 1, 2
    %s23 = ssub.s32 %s22, 1
    %24 = vst [vmem:[#allocation0] sm:%s23] %v21
    %s25 = scalar_lea.vmem [#allocation2], 8
    %v26 = vld [vmem:[%s25] sm:%s19]
    %s27 = sshll.u32 1, 2
    %s28 = ssub.s32 %s27, 1
    %s29 = scalar_lea.vmem [#allocation0], 2
    %30 = vst [vmem:[%s29] sm:%s28] %v26
    %s31 = scalar_lea.vmem [#allocation2], 16
    %v32 = vld [vmem:[%s31] sm:%s19]
    %s33 = sshll.u32 1, 2
    %s34 = ssub.s32 %s33, 1
    %s35 = smul.addr 2, 2
    %s36 = scalar_lea.vmem [#allocation0], %s35
    %37 = vst [vmem:[%s36] sm:%s34] %v32
    %s38 = scalar_lea.vmem [#allocation2], 24
    %v39 = vld [vmem:[%s38] sm:%s19]
    %s40 = sshll.u32 1, 2
    %s41 = ssub.s32 %s40, 1
    %s42 = smul.addr 2, 3
    %s43 = scalar_lea.vmem [#allocation0], %s42
    %44 = vst [vmem:[%s43] sm:%s41] %v39
    %s46 = ssub.s32 128, 128
    %47 = vsyncadd [#allocation1], %s46
    %s49 = sshll.u32 [#allocation0], 4
    %s50 = int_to_ptr.vmem [resolvable:$true] %s49
    %52 = dma.vmem_to_hbm [thread:$0]  %s50, 128, %s1, [#allocation1]
    %53 = dma.done [#allocation1], 128
    %54 = vsyncpa [#allocation1], 1

// kernel: residual_vector_quantization_forward.1
$region0: #{residual_vector_quantization_forward.1}
  #allocation0 [shape = 'u32[]', space=smem, size = 0x4, offset = 0x4, fixed_abs, tag = 'smem constant byte address 0x4 - core index']
  #allocation1 [shape = 'u32[144,128]{1,0:T(1,128)}', space=vmem, size = 0x12000, scoped, tag = 'internal scratch']
  %s0 = inlined_call_operand.vmem [shape: f32[128,128], index: 0, kind: input, shape index: {}]
  %s1 = inlined_call_operand.vmem [shape: f32[4,256,128], index: 1, kind: input, shape index: {}]
  %s2 = inlined_call_operand.vmem [shape: f32[4,1,256], index: 2, kind: input, shape index: {}]
  %s3 = inlined_call_operand.vmem [shape: f32[128,128], index: 3, kind: output, shape index: {0}]
  %s4 = inlined_call_operand.vmem [shape: s32[4,1,128], index: 4, kind: output, shape index: {1}]
  %5 = xla_tuple %s3, %s4
  %s6 = sld [smem:[#allocation0]]
  $region30: #{residual_vector_quantization_forward.1} parent=0
    _
  %s8 = ssub.s32 1, %s6
  %s9 = scalar_select 0, %s8, %s6
  // Predicated region
  $region2: #{residual_vector_quantization_forward.1} parent=0 // pred_check
    _
  $region3: #{residual_vector_quantization_forward.1} parent=0 // pred_check_branch
    %11 = sbr.rel (0) target = $region5
  $region4: #{residual_vector_quantization_forward.1} parent=0 // pred_region
    _
  $region5: #{residual_vector_quantization_forward.1} parent=0 // pred_fallthru
    _
  // Predicated region
  $region6: #{residual_vector_quantization_forward.1} parent=0 // pred_check
    _
  $region7: #{residual_vector_quantization_forward.1} parent=0 // pred_check_branch
    %13 = sbr.rel (0) target = $region9
  $region8: #{residual_vector_quantization_forward.1} parent=0 // pred_region
    _
  $region9: #{residual_vector_quantization_forward.1} parent=0 // pred_fallthru
    _
  // Predicated region
  $region10: #{residual_vector_quantization_forward.1} parent=0 // pred_check
    _
  $region11: #{residual_vector_quantization_forward.1} parent=0 // pred_check_branch
    %15 = sbr.rel (0) target = $region13
  $region12: #{residual_vector_quantization_forward.1} parent=0 // pred_region
    _
  $region13: #{residual_vector_quantization_forward.1} parent=0 // pred_fallthru
    _
  %v16 = vld [vmem:[%s0] sm:$0xff]
  %v17 = vld [vmem:[%s0 + $0x8] sm:$0xff]
  %v18 = vld [vmem:[%s0 + $0x10] sm:$0xff]
  %v19 = vld [vmem:[%s0 + $0x18] sm:$0xff]
  %v20 = vld [vmem:[%s0 + $0x20] sm:$0xff]
  %v21 = vld [vmem:[%s0 + $0x28] sm:$0xff]
  %v22 = vld [vmem:[%s0 + $0x30] sm:$0xff]
  %v23 = vld [vmem:[%s0 + $0x38] sm:$0xff]
  %v24 = vld [vmem:[%s0 + $0x40] sm:$0xff]
  %v25 = vld [vmem:[%s0 + $0x48] sm:$0xff]
  %v26 = vld [vmem:[%s0 + $0x50] sm:$0xff]
  %v27 = vld [vmem:[%s0 + $0x58] sm:$0xff]
  %v28 = vld [vmem:[%s0 + $0x60] sm:$0xff]
  %v29 = vld [vmem:[%s0 + $0x68] sm:$0xff]
  %v30 = vld [vmem:[%s0 + $0x70] sm:$0xff]
  %v31 = vld [vmem:[%s0 + $0x78] sm:$0xff]
  %v32 = vlaneseq
  %v33 = vand.u32 %v32, 127
  %v34 = vadd.s32 %v33, 128
  %v35 = vld [vmem:[%s1] sm:$0xff]
  %v36 = vld [vmem:[%s1 + $0x8] sm:$0xff]
  %v37 = vld [vmem:[%s1 + $0x10] sm:$0xff]
  %v38 = vld [vmem:[%s1 + $0x18] sm:$0xff]
  %v39 = vld [vmem:[%s1 + $0x20] sm:$0xff]
  %v40 = vld [vmem:[%s1 + $0x28] sm:$0xff]
  %v41 = vld [vmem:[%s1 + $0x30] sm:$0xff]
  %v42 = vld [vmem:[%s1 + $0x38] sm:$0xff]
  %v43 = vld [vmem:[%s1 + $0x40] sm:$0xff]
  %v44 = vld [vmem:[%s1 + $0x48] sm:$0xff]
  %v45 = vld [vmem:[%s1 + $0x50] sm:$0xff]
  %v46 = vld [vmem:[%s1 + $0x58] sm:$0xff]
  %v47 = vld [vmem:[%s1 + $0x60] sm:$0xff]
  %v48 = vld [vmem:[%s1 + $0x68] sm:$0xff]
  %v49 = vld [vmem:[%s1 + $0x70] sm:$0xff]
  %v50 = vld [vmem:[%s1 + $0x78] sm:$0xff]
  %v51 = vld [vmem:[%s1 + $0x80] sm:$0xff]
  %v52 = vld [vmem:[%s1 + $0x88] sm:$0xff]
  %v53 = vld [vmem:[%s1 + $0x90] sm:$0xff]
  %v54 = vld [vmem:[%s1 + $0x98] sm:$0xff]
  %v55 = vld [vmem:[%s1 + $0xa0] sm:$0xff]
  %v56 = vld [vmem:[%s1 + $0xa8] sm:$0xff]
  %v57 = vld [vmem:[%s1 + $0xb0] sm:$0xff]
  %v58 = vld [vmem:[%s1 + $0xb8] sm:$0xff]
  %v59 = vld [vmem:[%s1 + $0xc0] sm:$0xff]
  %v60 = vld [vmem:[%s1 + $0xc8] sm:$0xff]
  %v61 = vld [vmem:[%s1 + $0xd0] sm:$0xff]
  %v62 = vld [vmem:[%s1 + $0xd8] sm:$0xff]
  %v63 = vld [vmem:[%s1 + $0xe0] sm:$0xff]
  %v64 = vld [vmem:[%s1 + $0xe8] sm:$0xff]
  %v65 = vld [vmem:[%s1 + $0xf0] sm:$0xff]
  %v66 = vld [vmem:[%s1 + $0xf8] sm:$0xff]
  %67 = vmatprep.subr.mxu0 0.0
  %68 = vmatpush1.xpose.msra.mxu0 %v50
  %69 = vmatprep.subr.mxu0 0.0
  %70 = vmatpush1.xpose.msra.mxu0 %v49
  %71 = vmatprep.subr.mxu0 0.0
  %72 = vmatpush1.xpose.msra.mxu0 %v48
  %73 = vmatprep.subr.mxu0 0.0
  %74 = vmatpush1.xpose.msra.mxu0 %v47
  %75 = vmatprep.subr.mxu0 0.0
  %76 = vmatpush1.xpose.msra.mxu0 %v46
  %77 = vmatprep.subr.mxu0 0.0
  %78 = vmatpush1.xpose.msra.mxu0 %v45
  %79 = vmatprep.subr.mxu0 0.0
  %80 = vmatpush1.xpose.msra.mxu0 %v44
  %81 = vmatprep.subr.mxu0 0.0
  %82 = vmatpush1.xpose.msra.mxu0 %v43
  %83 = vmatprep.subr.mxu0 0.0
  %84 = vmatpush1.xpose.msra.mxu0 %v42
  %85 = vmatprep.subr.mxu0 0.0
  %86 = vmatpush1.xpose.msra.mxu0 %v41
  %87 = vmatprep.subr.mxu0 0.0
  %88 = vmatpush1.xpose.msra.mxu0 %v40
  %89 = vmatprep.subr.mxu0 0.0
  %90 = vmatpush1.xpose.msra.mxu0 %v39
  %91 = vmatprep.subr.mxu0 0.0
  %92 = vmatpush1.xpose.msra.mxu0 %v38
  %93 = vmatprep.subr.mxu0 0.0
  %94 = vmatpush1.xpose.msra.mxu0 %v37
  %95 = vmatprep.subr.mxu0 0.0
  %96 = vmatpush1.xpose.msra.mxu0 %v36
  %97 = vmatprep.subr.mxu0 0.0
  %98 = vmatpush1.xpose.msra.mxu0 %v35
  %99 = vmatprep.subr.mxu0 0.0
  %100 = vmatpush2.xpose.msra.mxu0 %v66
  %101 = vmatprep.subr.mxu0 0.0
  %102 = vmatpush2.xpose.msra.mxu0 %v65
  %103 = vmatprep.subr.mxu0 0.0
  %104 = vmatpush2.xpose.msra.mxu0 %v64
  %105 = vmatprep.subr.mxu0 0.0
  %106 = vmatpush2.xpose.msra.mxu0 %v63
  %107 = vmatprep.subr.mxu0 0.0
  %108 = vmatpush2.xpose.msra.mxu0 %v62
  %109 = vmatprep.subr.mxu0 0.0
  %110 = vmatpush2.xpose.msra.mxu0 %v61
  %111 = vmatprep.subr.mxu0 0.0
  %112 = vmatpush2.xpose.msra.mxu0 %v60
  %113 = vmatprep.subr.mxu0 0.0
  %114 = vmatpush2.xpose.msra.mxu0 %v59
  %115 = vmatprep.subr.mxu0 0.0
  %116 = vmatpush2.xpose.msra.mxu0 %v58
  %117 = vmatprep.subr.mxu0 0.0
  %118 = vmatpush2.xpose.msra.mxu0 %v57
  %119 = vmatprep.subr.mxu0 0.0
  %120 = vmatpush2.xpose.msra.mxu0 %v56
  %121 = vmatprep.subr.mxu0 0.0
  %122 = vmatpush2.xpose.msra.mxu0 %v55
  %123 = vmatprep.subr.mxu0 0.0
  %124 = vmatpush2.xpose.msra.mxu0 %v54
  %125 = vmatprep.subr.mxu0 0.0
  %126 = vmatpush2.xpose.msra.mxu0 %v53
  %127 = vmatprep.subr.mxu0 0.0
  %128 = vmatpush2.xpose.msra.mxu0 %v52
  %129 = vmatprep.subr.mxu0 0.0
  %130 = vmatpush2.xpose.msra.mxu0 %v51
  %131 = vmatprep.mubr.f32.mxu0 0.0
  %132 = vmatmul.mubr.f32.gmra.mxu0 %v16
  %v133 = vpop.f32.mrf.mxu0
  %v134 = vadd.f32 0.0, %v133
  %v135 = vpop.f32.mrf.mxu0
  %v136 = vadd.f32 0.0, %v135
  %137 = vmatprep.mubr.f32.mxu0 0.0
  %138 = vmatmul.mubr.f32.gmra.mxu0 %v17
  %v139 = vpop.f32.mrf.mxu0
  %v140 = vadd.f32 0.0, %v139
  %v141 = vpop.f32.mrf.mxu0
  %v142 = vadd.f32 0.0, %v141
  %143 = vmatprep.mubr.f32.mxu0 0.0
  %144 = vmatmul.mubr.f32.gmra.mxu0 %v18
  %v145 = vpop.f32.mrf.mxu0
  %v146 = vadd.f32 0.0, %v145
  %v147 = vpop.f32.mrf.mxu0
  %v148 = vadd.f32 0.0, %v147
  %149 = vmatprep.mubr.f32.mxu0 0.0
  %150 = vmatmul.mubr.f32.gmra.mxu0 %v19
  %v151 = vpop.f32.mrf.mxu0
  %v152 = vadd.f32 0.0, %v151
  %v153 = vpop.f32.mrf.mxu0
  %v154 = vadd.f32 0.0, %v153
  %155 = vmatprep.mubr.f32.mxu0 0.0
  %156 = vmatmul.mubr.f32.gmra.mxu0 %v20
  %v157 = vpop.f32.mrf.mxu0
  %v158 = vadd.f32 0.0, %v157
  %v159 = vpop.f32.mrf.mxu0
  %v160 = vadd.f32 0.0, %v159
  %161 = vmatprep.mubr.f32.mxu0 0.0
  %162 = vmatmul.mubr.f32.gmra.mxu0 %v21
  %v163 = vpop.f32.mrf.mxu0
  %v164 = vadd.f32 0.0, %v163
  %v165 = vpop.f32.mrf.mxu0
  %v166 = vadd.f32 0.0, %v165
  %167 = vmatprep.mubr.f32.mxu0 0.0
  %168 = vmatmul.mubr.f32.gmra.mxu0 %v22
  %v169 = vpop.f32.mrf.mxu0
  %v170 = vadd.f32 0.0, %v169
  %v171 = vpop.f32.mrf.mxu0
  %v172 = vadd.f32 0.0, %v171
  %173 = vmatprep.mubr.f32.mxu0 0.0
  %174 = vmatmul.mubr.f32.gmra.mxu0 %v23
  %v175 = vpop.f32.mrf.mxu0
  %v176 = vadd.f32 0.0, %v175
  %v177 = vpop.f32.mrf.mxu0
  %v178 = vadd.f32 0.0, %v177
  %179 = vmatprep.mubr.f32.mxu0 0.0
  %180 = vmatmul.mubr.f32.gmra.mxu0 %v24
  %v181 = vpop.f32.mrf.mxu0
  %v182 = vadd.f32 0.0, %v181
  %v183 = vpop.f32.mrf.mxu0
  %v184 = vadd.f32 0.0, %v183
  %185 = vmatprep.mubr.f32.mxu0 0.0
  %186 = vmatmul.mubr.f32.gmra.mxu0 %v25
  %v187 = vpop.f32.mrf.mxu0
  %v188 = vadd.f32 0.0, %v187
  %v189 = vpop.f32.mrf.mxu0
  %v190 = vadd.f32 0.0, %v189
  %191 = vmatprep.mubr.f32.mxu0 0.0
  %192 = vmatmul.mubr.f32.gmra.mxu0 %v26
  %v193 = vpop.f32.mrf.mxu0
  %v194 = vadd.f32 0.0, %v193
  %v195 = vpop.f32.mrf.mxu0
  %v196 = vadd.f32 0.0, %v195
  %197 = vmatprep.mubr.f32.mxu0 0.0
  %198 = vmatmul.mubr.f32.gmra.mxu0 %v27
  %v199 = vpop.f32.mrf.mxu0
  %v200 = vadd.f32 0.0, %v199
  %v201 = vpop.f32.mrf.mxu0
  %v202 = vadd.f32 0.0, %v201
  %203 = vmatprep.mubr.f32.mxu0 0.0
  %204 = vmatmul.mubr.f32.gmra.mxu0 %v28
  %v205 = vpop.f32.mrf.mxu0
  %v206 = vadd.f32 0.0, %v205
  %v207 = vpop.f32.mrf.mxu0
  %v208 = vadd.f32 0.0, %v207
  %209 = vmatprep.mubr.f32.mxu0 0.0
  %210 = vmatmul.mubr.f32.gmra.mxu0 %v29
  %v211 = vpop.f32.mrf.mxu0
  %v212 = vadd.f32 0.0, %v211
  %v213 = vpop.f32.mrf.mxu0
  %v214 = vadd.f32 0.0, %v213
  %215 = vmatprep.mubr.f32.mxu0 0.0
  %216 = vmatmul.mubr.f32.gmra.mxu0 %v30
  %v217 = vpop.f32.mrf.mxu0
  %v218 = vadd.f32 0.0, %v217
  %v219 = vpop.f32.mrf.mxu0
  %v220 = vadd.f32 0.0, %v219
  %221 = vmatprep.mubr.f32.mxu0 0.0
  %222 = vmatmul.mubr.f32.gmra.mxu0 %v31
  %v223 = vpop.f32.mrf.mxu0
  %v224 = vadd.f32 0.0, %v223
  %v225 = vpop.f32.mrf.mxu0
  %v226 = vadd.f32 0.0, %v225
  %227 = vdwg.mxu0
  %v228 = vld [vmem:[%s2] sm:$0x3]
  %v230 = vlaneseq
  %v231 = vshrl.u32 %v230, 7
  %v232 = vsub.s32 0, %v231
  %v233 = vrot.slane %v228, %v232
  %v234 = vlaneseq
  %v235 = vshrl.u32 %v234, 7
  %v236 = vsub.s32 1, %v235
  %v237 = vrot.slane %v228, %v236
  %v240 = vsub.f32 %v134, %v233
  %v241 = vsub.f32 %v136, %v237
  %v242 = vsub.f32 %v140, %v233
  %v243 = vsub.f32 %v142, %v237
  %v244 = vsub.f32 %v146, %v233
  %v245 = vsub.f32 %v148, %v237
  %v246 = vsub.f32 %v152, %v233
  %v247 = vsub.f32 %v154, %v237
  %v248 = vsub.f32 %v158, %v233
  %v249 = vsub.f32 %v160, %v237
  %v250 = vsub.f32 %v164, %v233
  %v251 = vsub.f32 %v166, %v237
  %v252 = vsub.f32 %v170, %v233
  %v253 = vsub.f32 %v172, %v237
  %v254 = vsub.f32 %v176, %v233
  %v255 = vsub.f32 %v178, %v237
  %v256 = vsub.f32 %v182, %v233
  %v257 = vsub.f32 %v184, %v237
  %v258 = vsub.f32 %v188, %v233
  %v259 = vsub.f32 %v190, %v237
  %v260 = vsub.f32 %v194, %v233
  %v261 = vsub.f32 %v196, %v237
  %v262 = vsub.f32 %v200, %v233
  %v263 = vsub.f32 %v202, %v237
  %v264 = vsub.f32 %v206, %v233
  %v265 = vsub.f32 %v208, %v237
  %v266 = vsub.f32 %v212, %v233
  %v267 = vsub.f32 %v214, %v237
  %v268 = vsub.f32 %v218, %v233
  %v269 = vsub.f32 %v220, %v237
  %v270 = vsub.f32 %v224, %v233
  %v271 = vsub.f32 %v226, %v237
  %v272 = vmax.f32 %v240, %v241
  %273 = vmax.xlane.f32.xlu0 %v272
  %v274 = vpop.xlane.xlu0 %273
  %v275 = vmax.f32 %v242, %v243
  %276 = vmax.xlane.f32.xlu0 %v275
  %v277 = vpop.xlane.xlu0 %276
  %v278 = vmax.f32 %v244, %v245
  %279 = vmax.xlane.f32.xlu0 %v278
  %v280 = vpop.xlane.xlu0 %279
  %v281 = vmax.f32 %v246, %v247
  %282 = vmax.xlane.f32.xlu0 %v281
  %v283 = vpop.xlane.xlu0 %282
  %v284 = vmax.f32 %v248, %v249
  %285 = vmax.xlane.f32.xlu0 %v284
  %v286 = vpop.xlane.xlu0 %285
  %v287 = vmax.f32 %v250, %v251
  %288 = vmax.xlane.f32.xlu0 %v287
  %v289 = vpop.xlane.xlu0 %288
  %v290 = vmax.f32 %v252, %v253
  %291 = vmax.xlane.f32.xlu0 %v290
  %v292 = vpop.xlane.xlu0 %291
  %v293 = vmax.f32 %v254, %v255
  %294 = vmax.xlane.f32.xlu0 %v293
  %v295 = vpop.xlane.xlu0 %294
  %v296 = vmax.f32 %v256, %v257
  %297 = vmax.xlane.f32.xlu0 %v296
  %v298 = vpop.xlane.xlu0 %297
  %v299 = vmax.f32 %v258, %v259
  %300 = vmax.xlane.f32.xlu0 %v299
  %v301 = vpop.xlane.xlu0 %300
  %v302 = vmax.f32 %v260, %v261
  %303 = vmax.xlane.f32.xlu0 %v302
  %v304 = vpop.xlane.xlu0 %303
  %v305 = vmax.f32 %v262, %v263
  %306 = vmax.xlane.f32.xlu0 %v305
  %v307 = vpop.xlane.xlu0 %306
  %v308 = vmax.f32 %v264, %v265
  %309 = vmax.xlane.f32.xlu0 %v308
  %v310 = vpop.xlane.xlu0 %309
  %v311 = vmax.f32 %v266, %v267
  %312 = vmax.xlane.f32.xlu0 %v311
  %v313 = vpop.xlane.xlu0 %312
  %v314 = vmax.f32 %v268, %v269
  %315 = vmax.xlane.f32.xlu0 %v314
  %v316 = vpop.xlane.xlu0 %315
  %v317 = vmax.f32 %v270, %v271
  %318 = vmax.xlane.f32.xlu0 %v317
  %v319 = vpop.xlane.xlu0 %318
  %vm320 = vcmp.eq.f32.partialorder %v240, %v274
  %vm321 = vcmp.eq.f32.partialorder %v241, %v274
  %vm322 = vcmp.eq.f32.partialorder %v242, %v277
  %vm323 = vcmp.eq.f32.partialorder %v243, %v277
  %vm324 = vcmp.eq.f32.partialorder %v244, %v280
  %vm325 = vcmp.eq.f32.partialorder %v245, %v280
  %vm326 = vcmp.eq.f32.partialorder %v246, %v283
  %vm327 = vcmp.eq.f32.partialorder %v247, %v283
  %vm328 = vcmp.eq.f32.partialorder %v248, %v286
  %vm329 = vcmp.eq.f32.partialorder %v249, %v286
  %vm330 = vcmp.eq.f32.partialorder %v250, %v289
  %vm331 = vcmp.eq.f32.partialorder %v251, %v289
  %vm332 = vcmp.eq.f32.partialorder %v252, %v292
  %vm333 = vcmp.eq.f32.partialorder %v253, %v292
  %vm334 = vcmp.eq.f32.partialorder %v254, %v295
  %vm335 = vcmp.eq.f32.partialorder %v255, %v295
  %vm336 = vcmp.eq.f32.partialorder %v256, %v298
  %vm337 = vcmp.eq.f32.partialorder %v257, %v298
  %vm338 = vcmp.eq.f32.partialorder %v258, %v301
  %vm339 = vcmp.eq.f32.partialorder %v259, %v301
  %vm340 = vcmp.eq.f32.partialorder %v260, %v304
  %vm341 = vcmp.eq.f32.partialorder %v261, %v304
  %vm342 = vcmp.eq.f32.partialorder %v262, %v307
  %vm343 = vcmp.eq.f32.partialorder %v263, %v307
  %vm344 = vcmp.eq.f32.partialorder %v264, %v310
  %vm345 = vcmp.eq.f32.partialorder %v265, %v310
  %vm346 = vcmp.eq.f32.partialorder %v266, %v313
  %vm347 = vcmp.eq.f32.partialorder %v267, %v313
  %vm348 = vcmp.eq.f32.partialorder %v268, %v316
  %vm349 = vcmp.eq.f32.partialorder %v269, %v316
  %vm350 = vcmp.eq.f32.partialorder %v270, %v319
  %vm351 = vcmp.eq.f32.partialorder %v271, %v319
  %v352 = vsel %vm320, %v33, 256
  %v353 = vsel %vm321, %v34, 256
  %v354 = vsel %vm322, %v33, 256
  %v355 = vsel %vm323, %v34, 256
  %v356 = vsel %vm324, %v33, 256
  %v357 = vsel %vm325, %v34, 256
  %v358 = vsel %vm326, %v33, 256
  %v359 = vsel %vm327, %v34, 256
  %v360 = vsel %vm328, %v33, 256
  %v361 = vsel %vm329, %v34, 256
  %v362 = vsel %vm330, %v33, 256
  %v363 = vsel %vm331, %v34, 256
  %v364 = vsel %vm332, %v33, 256
  %v365 = vsel %vm333, %v34, 256
  %v366 = vsel %vm334, %v33, 256
  %v367 = vsel %vm335, %v34, 256
  %v368 = vsel %vm336, %v33, 256
  %v369 = vsel %vm337, %v34, 256
  %v370 = vsel %vm338, %v33, 256
  %v371 = vsel %vm339, %v34, 256
  %v372 = vsel %vm340, %v33, 256
  %v373 = vsel %vm341, %v34, 256
  %v374 = vsel %vm342, %v33, 256
  %v375 = vsel %vm343, %v34, 256
  %v376 = vsel %vm344, %v33, 256
  %v377 = vsel %vm345, %v34, 256
  %v378 = vsel %vm346, %v33, 256
  %v379 = vsel %vm347, %v34, 256
  %v380 = vsel %vm348, %v33, 256
  %v381 = vsel %vm349, %v34, 256
  %v382 = vsel %vm350, %v33, 256
  %v383 = vsel %vm351, %v34, 256
  %vm384 = vcmp.lt.s32.totalorder %v352, %v353
  %v385 = vsel %vm384, %v352, %v353
  %v386 = vand.u32 %v385, 65535
  %v387 = vshra.s32 %v385, 16
  %v388 = vcvt.s32.f32 %v386
  %v389 = vcvt.s32.f32 %v387
  %390 = vmin.xlane.f32.xlu0 %v389
  %v391 = vpop.xlane.xlu0 %390
  %vm392 = vcmp.eq.f32.partialorder %v389, %v391
  %v393 = vsel %vm392, %v388, inf
  %394 = vmin.xlane.f32.xlu0 %v393
  %v395 = vpop.xlane.xlu0 %394
  %v396 = vcvt.f32.s32 %v395
  %v397 = vcvt.f32.s32 %v391
  %v398 = vshll.u32 %v397, 16
  %v399 = vadd.s32 %v398, %v396
  %vm400 = vcmp.lt.s32.totalorder %v354, %v355
  %v401 = vsel %vm400, %v354, %v355
  %v402 = vand.u32 %v401, 65535
  %v403 = vshra.s32 %v401, 16
  %v404 = vcvt.s32.f32 %v402
  %v405 = vcvt.s32.f32 %v403
  %406 = vmin.xlane.f32.xlu0 %v405
  %v407 = vpop.xlane.xlu0 %406
  %vm408 = vcmp.eq.f32.partialorder %v405, %v407
  %v409 = vsel %vm408, %v404, inf
  %410 = vmin.xlane.f32.xlu0 %v409
  %v411 = vpop.xlane.xlu0 %410
  %v412 = vcvt.f32.s32 %v411
  %v413 = vcvt.f32.s32 %v407
  %v414 = vshll.u32 %v413, 16
  %v415 = vadd.s32 %v414, %v412
  %vm416 = vcmp.lt.s32.totalorder %v356, %v357
  %v417 = vsel %vm416, %v356, %v357
  %v418 = vand.u32 %v417, 65535
  %v419 = vshra.s32 %v417, 16
  %v420 = vcvt.s32.f32 %v418
  %v421 = vcvt.s32.f32 %v419
  %422 = vmin.xlane.f32.xlu0 %v421
  %v423 = vpop.xlane.xlu0 %422
  %vm424 = vcmp.eq.f32.partialorder %v421, %v423
  %v425 = vsel %vm424, %v420, inf
  %426 = vmin.xlane.f32.xlu0 %v425
  %v427 = vpop.xlane.xlu0 %426
  %v428 = vcvt.f32.s32 %v427
  %v429 = vcvt.f32.s32 %v423
  %v430 = vshll.u32 %v429, 16
  %v431 = vadd.s32 %v430, %v428
  %vm432 = vcmp.lt.s32.totalorder %v358, %v359
  %v433 = vsel %vm432, %v358, %v359
  %v434 = vand.u32 %v433, 65535
  %v435 = vshra.s32 %v433, 16
  %v436 = vcvt.s32.f32 %v434
  %v437 = vcvt.s32.f32 %v435
  %438 = vmin.xlane.f32.xlu0 %v437
  %v439 = vpop.xlane.xlu0 %438
  %vm440 = vcmp.eq.f32.partialorder %v437, %v439
  %v441 = vsel %vm440, %v436, inf
  %442 = vmin.xlane.f32.xlu0 %v441
  %v443 = vpop.xlane.xlu0 %442
  %v444 = vcvt.f32.s32 %v443
  %v445 = vcvt.f32.s32 %v439
  %v446 = vshll.u32 %v445, 16
  %v447 = vadd.s32 %v446, %v444
  %vm448 = vcmp.lt.s32.totalorder %v360, %v361
  %v449 = vsel %vm448, %v360, %v361
  %v450 = vand.u32 %v449, 65535
  %v451 = vshra.s32 %v449, 16
  %v452 = vcvt.s32.f32 %v450
  %v453 = vcvt.s32.f32 %v451
  %454 = vmin.xlane.f32.xlu0 %v453
  %v455 = vpop.xlane.xlu0 %454
  %vm456 = vcmp.eq.f32.partialorder %v453, %v455
  %v457 = vsel %vm456, %v452, inf
  %458 = vmin.xlane.f32.xlu0 %v457
  %v459 = vpop.xlane.xlu0 %458
  %v460 = vcvt.f32.s32 %v459
  %v461 = vcvt.f32.s32 %v455
  %v462 = vshll.u32 %v461, 16
  %v463 = vadd.s32 %v462, %v460
  %vm464 = vcmp.lt.s32.totalorder %v362, %v363
  %v465 = vsel %vm464, %v362, %v363
  %v466 = vand.u32 %v465, 65535
  %v467 = vshra.s32 %v465, 16
  %v468 = vcvt.s32.f32 %v466
  %v469 = vcvt.s32.f32 %v467
  %470 = vmin.xlane.f32.xlu0 %v469
  %v471 = vpop.xlane.xlu0 %470
  %vm472 = vcmp.eq.f32.partialorder %v469, %v471
  %v473 = vsel %vm472, %v468, inf
  %474 = vmin.xlane.f32.xlu0 %v473
  %v475 = vpop.xlane.xlu0 %474
  %v476 = vcvt.f32.s32 %v475
  %v477 = vcvt.f32.s32 %v471
  %v478 = vshll.u32 %v477, 16
  %v479 = vadd.s32 %v478, %v476
  %vm480 = vcmp.lt.s32.totalorder %v364, %v365
  %v481 = vsel %vm480, %v364, %v365
  %v482 = vand.u32 %v481, 65535
  %v483 = vshra.s32 %v481, 16
  %v484 = vcvt.s32.f32 %v482
  %v485 = vcvt.s32.f32 %v483
  %486 = vmin.xlane.f32.xlu0 %v485
  %v487 = vpop.xlane.xlu0 %486
  %vm488 = vcmp.eq.f32.partialorder %v485, %v487
  %v489 = vsel %vm488, %v484, inf
  %490 = vmin.xlane.f32.xlu0 %v489
  %v491 = vpop.xlane.xlu0 %490
  %v492 = vcvt.f32.s32 %v491
  %v493 = vcvt.f32.s32 %v487
  %v494 = vshll.u32 %v493, 16
  %v495 = vadd.s32 %v494, %v492
  %vm496 = vcmp.lt.s32.totalorder %v366, %v367
  %v497 = vsel %vm496, %v366, %v367
  %v498 = vand.u32 %v497, 65535
  %v499 = vshra.s32 %v497, 16
  %v500 = vcvt.s32.f32 %v498
  %v501 = vcvt.s32.f32 %v499
  %502 = vmin.xlane.f32.xlu0 %v501
  %v503 = vpop.xlane.xlu0 %502
  %vm504 = vcmp.eq.f32.partialorder %v501, %v503
  %v505 = vsel %vm504, %v500, inf
  %506 = vmin.xlane.f32.xlu0 %v505
  %v507 = vpop.xlane.xlu0 %506
  %v508 = vcvt.f32.s32 %v507
  %v509 = vcvt.f32.s32 %v503
  %v510 = vshll.u32 %v509, 16
  %v511 = vadd.s32 %v510, %v508
  %vm512 = vcmp.lt.s32.totalorder %v368, %v369
  %v513 = vsel %vm512, %v368, %v369
  %v514 = vand.u32 %v513, 65535
  %v515 = vshra.s32 %v513, 16
  %v516 = vcvt.s32.f32 %v514
  %v517 = vcvt.s32.f32 %v515
  %518 = vmin.xlane.f32.xlu0 %v517
  %v519 = vpop.xlane.xlu0 %518
  %vm520 = vcmp.eq.f32.partialorder %v517, %v519
  %v521 = vsel %vm520, %v516, inf
  %522 = vmin.xlane.f32.xlu0 %v521
  %v523 = vpop.xlane.xlu0 %522
  %v524 = vcvt.f32.s32 %v523
  %v525 = vcvt.f32.s32 %v519
  %v526 = vshll.u32 %v525, 16
  %v527 = vadd.s32 %v526, %v524
  %vm528 = vcmp.lt.s32.totalorder %v370, %v371
  %v529 = vsel %vm528, %v370, %v371
  %v530 = vand.u32 %v529, 65535
  %v531 = vshra.s32 %v529, 16
  %v532 = vcvt.s32.f32 %v530
  %v533 = vcvt.s32.f32 %v531
  %534 = vmin.xlane.f32.xlu0 %v533
  %v535 = vpop.xlane.xlu0 %534
  %vm536 = vcmp.eq.f32.partialorder %v533, %v535
  %v537 = vsel %vm536, %v532, inf
  %538 = vmin.xlane.f32.xlu0 %v537
  %v539 = vpop.xlane.xlu0 %538
  %v540 = vcvt.f32.s32 %v539
  %v541 = vcvt.f32.s32 %v535
  %v542 = vshll.u32 %v541, 16
  %v543 = vadd.s32 %v542, %v540
  %vm544 = vcmp.lt.s32.totalorder %v372, %v373
  %v545 = vsel %vm544, %v372, %v373
  %v546 = vand.u32 %v545, 65535
  %v547 = vshra.s32 %v545, 16
  %v548 = vcvt.s32.f32 %v546
  %v549 = vcvt.s32.f32 %v547
  %550 = vmin.xlane.f32.xlu0 %v549
  %v551 = vpop.xlane.xlu0 %550
  %vm552 = vcmp.eq.f32.partialorder %v549, %v551
  %v553 = vsel %vm552, %v548, inf
  %554 = vmin.xlane.f32.xlu0 %v553
  %v555 = vpop.xlane.xlu0 %554
  %v556 = vcvt.f32.s32 %v555
  %v557 = vcvt.f32.s32 %v551
  %v558 = vshll.u32 %v557, 16
  %v559 = vadd.s32 %v558, %v556
  %vm560 = vcmp.lt.s32.totalorder %v374, %v375
  %v561 = vsel %vm560, %v374, %v375
  %v562 = vand.u32 %v561, 65535
  %v563 = vshra.s32 %v561, 16
  %v564 = vcvt.s32.f32 %v562
  %v565 = vcvt.s32.f32 %v563
  %566 = vmin.xlane.f32.xlu0 %v565
  %v567 = vpop.xlane.xlu0 %566
  %vm568 = vcmp.eq.f32.partialorder %v565, %v567
  %v569 = vsel %vm568, %v564, inf
  %570 = vmin.xlane.f32.xlu0 %v569
  %v571 = vpop.xlane.xlu0 %570
  %v572 = vcvt.f32.s32 %v571
  %v573 = vcvt.f32.s32 %v567
  %v574 = vshll.u32 %v573, 16
  %v575 = vadd.s32 %v574, %v572
  %vm576 = vcmp.lt.s32.totalorder %v376, %v377
  %v577 = vsel %vm576, %v376, %v377
  %v578 = vand.u32 %v577, 65535
  %v579 = vshra.s32 %v577, 16
  %v580 = vcvt.s32.f32 %v578
  %v581 = vcvt.s32.f32 %v579
  %582 = vmin.xlane.f32.xlu0 %v581
  %v583 = vpop.xlane.xlu0 %582
  %vm584 = vcmp.eq.f32.partialorder %v581, %v583
  %v585 = vsel %vm584, %v580, inf
  %586 = vmin.xlane.f32.xlu0 %v585
  %v587 = vpop.xlane.xlu0 %586
  %v588 = vcvt.f32.s32 %v587
  %v589 = vcvt.f32.s32 %v583
  %v590 = vshll.u32 %v589, 16
  %v591 = vadd.s32 %v590, %v588
  %vm592 = vcmp.lt.s32.totalorder %v378, %v379
  %v593 = vsel %vm592, %v378, %v379
  %v594 = vand.u32 %v593, 65535
  %v595 = vshra.s32 %v593, 16
  %v596 = vcvt.s32.f32 %v594
  %v597 = vcvt.s32.f32 %v595
  %598 = vmin.xlane.f32.xlu0 %v597
  %v599 = vpop.xlane.xlu0 %598
  %vm600 = vcmp.eq.f32.partialorder %v597, %v599
  %v601 = vsel %vm600, %v596, inf
  %602 = vmin.xlane.f32.xlu0 %v601
  %v603 = vpop.xlane.xlu0 %602
  %v604 = vcvt.f32.s32 %v603
  %v605 = vcvt.f32.s32 %v599
  %v606 = vshll.u32 %v605, 16
  %v607 = vadd.s32 %v606, %v604
  %vm608 = vcmp.lt.s32.totalorder %v380, %v381
  %v609 = vsel %vm608, %v380, %v381
  %v610 = vand.u32 %v609, 65535
  %v611 = vshra.s32 %v609, 16
  %v612 = vcvt.s32.f32 %v610
  %v613 = vcvt.s32.f32 %v611
  %614 = vmin.xlane.f32.xlu0 %v613
  %v615 = vpop.xlane.xlu0 %614
  %vm616 = vcmp.eq.f32.partialorder %v613, %v615
  %v617 = vsel %vm616, %v612, inf
  %618 = vmin.xlane.f32.xlu0 %v617
  %v619 = vpop.xlane.xlu0 %618
  %v620 = vcvt.f32.s32 %v619
  %v621 = vcvt.f32.s32 %v615
  %v622 = vshll.u32 %v621, 16
  %v623 = vadd.s32 %v622, %v620
  %vm624 = vcmp.lt.s32.totalorder %v382, %v383
  %v625 = vsel %vm624, %v382, %v383
  %v626 = vand.u32 %v625, 65535
  %v627 = vshra.s32 %v625, 16
  %v628 = vcvt.s32.f32 %v626
  %v629 = vcvt.s32.f32 %v627
  %630 = vmin.xlane.f32.xlu0 %v629
  %v631 = vpop.xlane.xlu0 %630
  %vm632 = vcmp.eq.f32.partialorder %v629, %v631
  %v633 = vsel %vm632, %v628, inf
  %634 = vmin.xlane.f32.xlu0 %v633
  %v635 = vpop.xlane.xlu0 %634
  %v636 = vcvt.f32.s32 %v635
  %v637 = vcvt.f32.s32 %v631
  %v638 = vshll.u32 %v637, 16
  %v639 = vadd.s32 %v638, %v636
  %vm640 = vcmp.eq.s32.totalorder %v33, %v399
  %vm641 = vcmp.eq.s32.totalorder %v34, %v399
  %vm642 = vcmp.eq.s32.totalorder %v33, %v415
  %vm643 = vcmp.eq.s32.totalorder %v34, %v415
  %vm644 = vcmp.eq.s32.totalorder %v33, %v431
  %vm645 = vcmp.eq.s32.totalorder %v34, %v431
  %vm646 = vcmp.eq.s32.totalorder %v33, %v447
  %vm647 = vcmp.eq.s32.totalorder %v34, %v447
  %vm648 = vcmp.eq.s32.totalorder %v33, %v463
  %vm649 = vcmp.eq.s32.totalorder %v34, %v463
  %vm650 = vcmp.eq.s32.totalorder %v33, %v479
  %vm651 = vcmp.eq.s32.totalorder %v34, %v479
  %vm652 = vcmp.eq.s32.totalorder %v33, %v495
  %vm653 = vcmp.eq.s32.totalorder %v34, %v495
  %vm654 = vcmp.eq.s32.totalorder %v33, %v511
  %vm655 = vcmp.eq.s32.totalorder %v34, %v511
  %vm656 = vcmp.eq.s32.totalorder %v33, %v527
  %vm657 = vcmp.eq.s32.totalorder %v34, %v527
  %vm658 = vcmp.eq.s32.totalorder %v33, %v543
  %vm659 = vcmp.eq.s32.totalorder %v34, %v543
  %vm660 = vcmp.eq.s32.totalorder %v33, %v559
  %vm661 = vcmp.eq.s32.totalorder %v34, %v559
  %vm662 = vcmp.eq.s32.totalorder %v33, %v575
  %vm663 = vcmp.eq.s32.totalorder %v34, %v575
  %vm664 = vcmp.eq.s32.totalorder %v33, %v591
  %vm665 = vcmp.eq.s32.totalorder %v34, %v591
  %vm666 = vcmp.eq.s32.totalorder %v33, %v607
  %vm667 = vcmp.eq.s32.totalorder %v34, %v607
  %vm668 = vcmp.eq.s32.totalorder %v33, %v623
  %vm669 = vcmp.eq.s32.totalorder %v34, %v623
  %vm670 = vcmp.eq.s32.totalorder %v33, %v639
  %vm671 = vcmp.eq.s32.totalorder %v34, %v639
  %v672 = vsel %vm640, 1, 0
  %v673 = vsel %vm641, 1, 0
  %v674 = vsel %vm642, 1, 0
  %v675 = vsel %vm643, 1, 0
  %v676 = vsel %vm644, 1, 0
  %v677 = vsel %vm645, 1, 0
  %v678 = vsel %vm646, 1, 0
  %v679 = vsel %vm647, 1, 0
  %v680 = vsel %vm648, 1, 0
  %v681 = vsel %vm649, 1, 0
  %v682 = vsel %vm650, 1, 0
  %v683 = vsel %vm651, 1, 0
  %v684 = vsel %vm652, 1, 0
  %v685 = vsel %vm653, 1, 0
  %v686 = vsel %vm654, 1, 0
  %v687 = vsel %vm655, 1, 0
  %v688 = vsel %vm656, 1, 0
  %v689 = vsel %vm657, 1, 0
  %v690 = vsel %vm658, 1, 0
  %v691 = vsel %vm659, 1, 0
  %v692 = vsel %vm660, 1, 0
  %v693 = vsel %vm661, 1, 0
  %v694 = vsel %vm662, 1, 0
  %v695 = vsel %vm663, 1, 0
  %v696 = vsel %vm664, 1, 0
  %v697 = vsel %vm665, 1, 0
  %v698 = vsel %vm666, 1, 0
  %v699 = vsel %vm667, 1, 0
  %v700 = vsel %vm668, 1, 0
  %v701 = vsel %vm669, 1, 0
  %v702 = vsel %vm670, 1, 0
  %v703 = vsel %vm671, 1, 0
  %v704 = vcvt.s32.f32 %v672
  %v705 = vcvt.s32.f32 %v673
  %v706 = vcvt.s32.f32 %v674
  %v707 = vcvt.s32.f32 %v675
  %v708 = vcvt.s32.f32 %v676
  %v709 = vcvt.s32.f32 %v677
  %v710 = vcvt.s32.f32 %v678
  %v711 = vcvt.s32.f32 %v679
  %v712 = vcvt.s32.f32 %v680
  %v713 = vcvt.s32.f32 %v681
  %v714 = vcvt.s32.f32 %v682
  %v715 = vcvt.s32.f32 %v683
  %v716 = vcvt.s32.f32 %v684
  %v717 = vcvt.s32.f32 %v685
  %v718 = vcvt.s32.f32 %v686
  %v719 = vcvt.s32.f32 %v687
  %v720 = vcvt.s32.f32 %v688
  %v721 = vcvt.s32.f32 %v689
  %v722 = vcvt.s32.f32 %v690
  %v723 = vcvt.s32.f32 %v691
  %v724 = vcvt.s32.f32 %v692
  %v725 = vcvt.s32.f32 %v693
  %v726 = vcvt.s32.f32 %v694
  %v727 = vcvt.s32.f32 %v695
  %v728 = vcvt.s32.f32 %v696
  %v729 = vcvt.s32.f32 %v697
  %v730 = vcvt.s32.f32 %v698
  %v731 = vcvt.s32.f32 %v699
  %v732 = vcvt.s32.f32 %v700
  %v733 = vcvt.s32.f32 %v701
  %v734 = vcvt.s32.f32 %v702
  %v735 = vcvt.s32.f32 %v703
  %736 = vmatprep.subr.mxu0 0.0
  %737 = vmatpush1.msra.mxu0 %v50
  %738 = vmatprep.subr.mxu0 0.0
  %739 = vmatpush1.msra.mxu0 %v49
  %740 = vmatprep.subr.mxu0 0.0
  %741 = vmatpush1.msra.mxu0 %v48
  %742 = vmatprep.subr.mxu0 0.0
  %743 = vmatpush1.msra.mxu0 %v47
  %744 = vmatprep.subr.mxu0 0.0
  %745 = vmatpush1.msra.mxu0 %v46
  %746 = vmatprep.subr.mxu0 0.0
  %747 = vmatpush1.msra.mxu0 %v45
  %748 = vmatprep.subr.mxu0 0.0
  %749 = vmatpush1.msra.mxu0 %v44
  %750 = vmatprep.subr.mxu0 0.0
  %751 = vmatpush1.msra.mxu0 %v43
  %752 = vmatprep.subr.mxu0 0.0
  %753 = vmatpush1.msra.mxu0 %v42
  %754 = vmatprep.subr.mxu0 0.0
  %755 = vmatpush1.msra.mxu0 %v41
  %756 = vmatprep.subr.mxu0 0.0
  %757 = vmatpush1.msra.mxu0 %v40
  %758 = vmatprep.subr.mxu0 0.0
  %759 = vmatpush1.msra.mxu0 %v39
  %760 = vmatprep.subr.mxu0 0.0
  %761 = vmatpush1.msra.mxu0 %v38
  %762 = vmatprep.subr.mxu0 0.0
  %763 = vmatpush1.msra.mxu0 %v37
  %764 = vmatprep.subr.mxu0 0.0
  %765 = vmatpush1.msra.mxu0 %v36
  %766 = vmatprep.subr.mxu0 0.0
  %767 = vmatpush1.msra.mxu0 %v35
  %768 = vmatprep.subr.mxu0 0.0
  %769 = vmatpush2.msra.mxu0 %v66
  %770 = vmatprep.subr.mxu0 0.0
  %771 = vmatpush2.msra.mxu0 %v65
  %772 = vmatprep.subr.mxu0 0.0
  %773 = vmatpush2.msra.mxu0 %v64
  %774 = vmatprep.subr.mxu0 0.0
  %775 = vmatpush2.msra.mxu0 %v63
  %776 = vmatprep.subr.mxu0 0.0
  %777 = vmatpush2.msra.mxu0 %v62
  %778 = vmatprep.subr.mxu0 0.0
  %779 = vmatpush2.msra.mxu0 %v61
  %780 = vmatprep.subr.mxu0 0.0
  %781 = vmatpush2.msra.mxu0 %v60
  %782 = vmatprep.subr.mxu0 0.0
  %783 = vmatpush2.msra.mxu0 %v59
  %784 = vmatprep.subr.mxu0 0.0
  %785 = vmatpush2.msra.mxu0 %v58
  %786 = vmatprep.subr.mxu0 0.0
  %787 = vmatpush2.msra.mxu0 %v57
  %788 = vmatprep.subr.mxu0 0.0
  %789 = vmatpush2.msra.mxu0 %v56
  %790 = vmatprep.subr.mxu0 0.0
  %791 = vmatpush2.msra.mxu0 %v55
  %792 = vmatprep.subr.mxu0 0.0
  %793 = vmatpush2.msra.mxu0 %v54
  %794 = vmatprep.subr.mxu0 0.0
  %795 = vmatpush2.msra.mxu0 %v53
  %796 = vmatprep.subr.mxu0 0.0
  %797 = vmatpush2.msra.mxu0 %v52
  %798 = vmatprep.subr.mxu0 0.0
  %799 = vmatpush2.msra.mxu0 %v51
  %800 = vmatprep.mubr.f32.mxu0 %v705
  %801 = vmatmul.mubr.f32.gmra.mxu0 %v704
  %v802 = vpop.f32.mrf.mxu0
  %v803 = vadd.f32 0.0, %v802
  %v804 = vpop.f32.mrf.mxu0
  %805 = vmatprep.mubr.f32.mxu0 %v707
  %806 = vmatmul.mubr.f32.gmra.mxu0 %v706
  %v807 = vpop.f32.mrf.mxu0
  %v808 = vadd.f32 0.0, %v807
  %v809 = vpop.f32.mrf.mxu0
  %810 = vmatprep.mubr.f32.mxu0 %v709
  %811 = vmatmul.mubr.f32.gmra.mxu0 %v708
  %v812 = vpop.f32.mrf.mxu0
  %v813 = vadd.f32 0.0, %v812
  %v814 = vpop.f32.mrf.mxu0
  %815 = vmatprep.mubr.f32.mxu0 %v711
  %816 = vmatmul.mubr.f32.gmra.mxu0 %v710
  %v817 = vpop.f32.mrf.mxu0
  %v818 = vadd.f32 0.0, %v817
  %v819 = vpop.f32.mrf.mxu0
  %820 = vmatprep.mubr.f32.mxu0 %v713
  %821 = vmatmul.mubr.f32.gmra.mxu0 %v712
  %v822 = vpop.f32.mrf.mxu0
  %v823 = vadd.f32 0.0, %v822
  %v824 = vpop.f32.mrf.mxu0
  %825 = vmatprep.mubr.f32.mxu0 %v715
  %826 = vmatmul.mubr.f32.gmra.mxu0 %v714
  %v827 = vpop.f32.mrf.mxu0
  %v828 = vadd.f32 0.0, %v827
  %v829 = vpop.f32.mrf.mxu0
  %830 = vmatprep.mubr.f32.mxu0 %v717
  %831 = vmatmul.mubr.f32.gmra.mxu0 %v716
  %v832 = vpop.f32.mrf.mxu0
  %v833 = vadd.f32 0.0, %v832
  %v834 = vpop.f32.mrf.mxu0
  %835 = vmatprep.mubr.f32.mxu0 %v719
  %836 = vmatmul.mubr.f32.gmra.mxu0 %v718
  %v837 = vpop.f32.mrf.mxu0
  %v838 = vadd.f32 0.0, %v837
  %v839 = vpop.f32.mrf.mxu0
  %840 = vmatprep.mubr.f32.mxu0 %v721
  %841 = vmatmul.mubr.f32.gmra.mxu0 %v720
  %v842 = vpop.f32.mrf.mxu0
  %v843 = vadd.f32 0.0, %v842
  %v844 = vpop.f32.mrf.mxu0
  %845 = vmatprep.mubr.f32.mxu0 %v723
  %846 = vmatmul.mubr.f32.gmra.mxu0 %v722
  %v847 = vpop.f32.mrf.mxu0
  %v848 = vadd.f32 0.0, %v847
  %v849 = vpop.f32.mrf.mxu0
  %850 = vmatprep.mubr.f32.mxu0 %v725
  %851 = vmatmul.mubr.f32.gmra.mxu0 %v724
  %v852 = vpop.f32.mrf.mxu0
  %v853 = vadd.f32 0.0, %v852
  %v854 = vpop.f32.mrf.mxu0
  %855 = vmatprep.mubr.f32.mxu0 %v727
  %856 = vmatmul.mubr.f32.gmra.mxu0 %v726
  %v857 = vpop.f32.mrf.mxu0
  %v858 = vadd.f32 0.0, %v857
  %v859 = vpop.f32.mrf.mxu0
  %860 = vmatprep.mubr.f32.mxu0 %v729
  %861 = vmatmul.mubr.f32.gmra.mxu0 %v728
  %v862 = vpop.f32.mrf.mxu0
  %v863 = vadd.f32 0.0, %v862
  %v864 = vpop.f32.mrf.mxu0
  %865 = vmatprep.mubr.f32.mxu0 %v731
  %866 = vmatmul.mubr.f32.gmra.mxu0 %v730
  %v867 = vpop.f32.mrf.mxu0
  %v868 = vadd.f32 0.0, %v867
  %v869 = vpop.f32.mrf.mxu0
  %870 = vmatprep.mubr.f32.mxu0 %v733
  %871 = vmatmul.mubr.f32.gmra.mxu0 %v732
  %v872 = vpop.f32.mrf.mxu0
  %v873 = vadd.f32 0.0, %v872
  %v874 = vpop.f32.mrf.mxu0
  %875 = vmatprep.mubr.f32.mxu0 %v735
  %876 = vmatmul.mubr.f32.gmra.mxu0 %v734
  %v877 = vpop.f32.mrf.mxu0
  %v878 = vadd.f32 0.0, %v877
  %v879 = vpop.f32.mrf.mxu0
  %880 = vdwg.mxu0
  %v881 = vlaneseq
  %v882 = vshrl.u32 %v881, 7
  %v883 = vsub.s32 %v33, %v882
  %v884 = vrot.slane %v399, %v883
  %v885 = vadd.s32 %v33, 4294967288
  %v886 = vlaneseq
  %v887 = vshrl.u32 %v886, 7
  %v888 = vsub.s32 %v885, %v887
  %v889 = vrot.slane %v415, %v888
  %vm890 = vcmask 130112
  %v891 = vsel %vm890, %v889, %v884
  %v892 = vadd.s32 %v33, 4294967280
  %v893 = vlaneseq
  %v894 = vshrl.u32 %v893, 7
  %v895 = vsub.s32 %v892, %v894
  %v896 = vrot.slane %v431, %v895
  %vm897 = vcmask 195712
  %v898 = vsel %vm897, %v896, %v891
  %v899 = vadd.s32 %v33, 4294967272
  %v900 = vlaneseq
  %v901 = vshrl.u32 %v900, 7
  %v902 = vsub.s32 %v899, %v901
  %v903 = vrot.slane %v447, %v902
  %vm904 = vcmask 261312
  %v905 = vsel %vm904, %v903, %v898
  %v906 = vadd.s32 %v33, 4294967264
  %v907 = vlaneseq
  %v908 = vshrl.u32 %v907, 7
  %v909 = vsub.s32 %v906, %v908
  %v910 = vrot.slane %v463, %v909
  %vm911 = vcmask 326912
  %v912 = vsel %vm911, %v910, %v905
  %v913 = vadd.s32 %v33, 4294967256
  %v914 = vlaneseq
  %v915 = vshrl.u32 %v914, 7
  %v916 = vsub.s32 %v913, %v915
  %v917 = vrot.slane %v479, %v916
  %vm918 = vcmask 392512
  %v919 = vsel %vm918, %v917, %v912
  %v920 = vadd.s32 %v33, 4294967248
  %v921 = vlaneseq
  %v922 = vshrl.u32 %v921, 7
  %v923 = vsub.s32 %v920, %v922
  %v924 = vrot.slane %v495, %v923
  %vm925 = vcmask 458112
  %v926 = vsel %vm925, %v924, %v919
  %v927 = vadd.s32 %v33, 4294967240
  %v928 = vlaneseq
  %v929 = vshrl.u32 %v928, 7
  %v930 = vsub.s32 %v927, %v929
  %v931 = vrot.slane %v511, %v930
  %vm932 = vcmask 523712
  %v933 = vsel %vm932, %v931, %v926
  %v934 = vadd.s32 %v33, 4294967232
  %v935 = vlaneseq
  %v936 = vshrl.u32 %v935, 7
  %v937 = vsub.s32 %v934, %v936
  %v938 = vrot.slane %v527, %v937
  %vm939 = vcmask 589312
  %v940 = vsel %vm939, %v938, %v933
  %v941 = vadd.s32 %v33, 4294967224
  %v942 = vlaneseq
  %v943 = vshrl.u32 %v942, 7
  %v944 = vsub.s32 %v941, %v943
  %v945 = vrot.slane %v543, %v944
  %vm946 = vcmask 654912
  %v947 = vsel %vm946, %v945, %v940
  %v948 = vadd.s32 %v33, 4294967216
  %v949 = vlaneseq
  %v950 = vshrl.u32 %v949, 7
  %v951 = vsub.s32 %v948, %v950
  %v952 = vrot.slane %v559, %v951
  %vm953 = vcmask 720512
  %v954 = vsel %vm953, %v952, %v947
  %v955 = vadd.s32 %v33, 4294967208
  %v956 = vlaneseq
  %v957 = vshrl.u32 %v956, 7
  %v958 = vsub.s32 %v955, %v957
  %v959 = vrot.slane %v575, %v958
  %vm960 = vcmask 786112
  %v961 = vsel %vm960, %v959, %v954
  %v962 = vadd.s32 %v33, 4294967200
  %v963 = vlaneseq
  %v964 = vshrl.u32 %v963, 7
  %v965 = vsub.s32 %v962, %v964
  %v966 = vrot.slane %v591, %v965
  %vm967 = vcmask 851712
  %v968 = vsel %vm967, %v966, %v961
  %v969 = vadd.s32 %v33, 4294967192
  %v970 = vlaneseq
  %v971 = vshrl.u32 %v970, 7
  %v972 = vsub.s32 %v969, %v971
  %v973 = vrot.slane %v607, %v972
  %vm974 = vcmask 917312
  %v975 = vsel %vm974, %v973, %v968
  %v976 = vadd.s32 %v33, 4294967184
  %v977 = vlaneseq
  %v978 = vshrl.u32 %v977, 7
  %v979 = vsub.s32 %v976, %v978
  %v980 = vrot.slane %v623, %v979
  %vm981 = vcmask 982912
  %v982 = vsel %vm981, %v980, %v975
  %v983 = vadd.s32 %v33, 4294967176
  %v984 = vlaneseq
  %v985 = vshrl.u32 %v984, 7
  %v986 = vsub.s32 %v983, %v985
  %v987 = vrot.slane %v639, %v986
  %vm988 = vcmask 1048512
  %v989 = vsel %vm988, %v987, %v982
  %990 = vst [vmem:[%s4] sm:$0x1] %v989
  %v991 = vsub.f32 %v16, %v803
  %v992 = vsub.f32 %v17, %v808
  %v993 = vsub.f32 %v18, %v813
  %v994 = vsub.f32 %v19, %v818
  %v995 = vsub.f32 %v20, %v823
  %v996 = vsub.f32 %v21, %v828
  %v997 = vsub.f32 %v22, %v833
  %v998 = vsub.f32 %v23, %v838
  %v999 = vsub.f32 %v24, %v843
  %v1000 = vsub.f32 %v25, %v848
  %v1001 = vsub.f32 %v26, %v853
  %v1002 = vsub.f32 %v27, %v858
  %v1003 = vsub.f32 %v28, %v863
  %v1004 = vsub.f32 %v29, %v868
  %v1005 = vsub.f32 %v30, %v873
  %v1006 = vsub.f32 %v31, %v878
  %s1007 = scalar_lea.vmem %s1, 256
  %v1008 = vld [vmem:[%s1007] sm:$0xff]
  %v1009 = vld [vmem:[%s1007 + $0x8] sm:$0xff]
  %v1010 = vld [vmem:[%s1007 + $0x10] sm:$0xff]
  %v1011 = vld [vmem:[%s1007 + $0x18] sm:$0xff]
  %v1012 = vld [vmem:[%s1007 + $0x20] sm:$0xff]
  %v1013 = vld [vmem:[%s1007 + $0x28] sm:$0xff]
  %v1014 = vld [vmem:[%s1007 + $0x30] sm:$0xff]
  %v1015 = vld [vmem:[%s1007 + $0x38] sm:$0xff]
  %v1016 = vld [vmem:[%s1007 + $0x40] sm:$0xff]
  %v1017 = vld [vmem:[%s1007 + $0x48] sm:$0xff]
  %v1018 = vld [vmem:[%s1007 + $0x50] sm:$0xff]
  %v1019 = vld [vmem:[%s1007 + $0x58] sm:$0xff]
  %v1020 = vld [vmem:[%s1007 + $0x60] sm:$0xff]
  %v1021 = vld [vmem:[%s1007 + $0x68] sm:$0xff]
  %v1022 = vld [vmem:[%s1007 + $0x70] sm:$0xff]
  %v1023 = vld [vmem:[%s1007 + $0x78] sm:$0xff]
  %v1024 = vld [vmem:[%s1007 + $0x80] sm:$0xff]
  %v1025 = vld [vmem:[%s1007 + $0x88] sm:$0xff]
  %v1026 = vld [vmem:[%s1007 + $0x90] sm:$0xff]
  %v1027 = vld [vmem:[%s1007 + $0x98] sm:$0xff]
  %v1028 = vld [vmem:[%s1007 + $0xa0] sm:$0xff]
  %v1029 = vld [vmem:[%s1007 + $0xa8] sm:$0xff]
  %v1030 = vld [vmem:[%s1007 + $0xb0] sm:$0xff]
  %v1031 = vld [vmem:[%s1007 + $0xb8] sm:$0xff]
  %v1032 = vld [vmem:[%s1007 + $0xc0] sm:$0xff]
  %v1033 = vld [vmem:[%s1007 + $0xc8] sm:$0xff]
  %v1034 = vld [vmem:[%s1007 + $0xd0] sm:$0xff]
  %v1035 = vld [vmem:[%s1007 + $0xd8] sm:$0xff]
  %v1036 = vld [vmem:[%s1007 + $0xe0] sm:$0xff]
  %v1037 = vld [vmem:[%s1007 + $0xe8] sm:$0xff]
  %v1038 = vld [vmem:[%s1007 + $0xf0] sm:$0xff]
  %v1039 = vld [vmem:[%s1007 + $0xf8] sm:$0xff]
  %1040 = vmatprep.subr.mxu0 0.0
  %1041 = vmatpush1.xpose.msra.mxu0 %v1023
  %1042 = vmatprep.subr.mxu0 0.0
  %1043 = vmatpush1.xpose.msra.mxu0 %v1022
  %1044 = vmatprep.subr.mxu0 0.0
  %1045 = vmatpush1.xpose.msra.mxu0 %v1021
  %1046 = vmatprep.subr.mxu0 0.0
  %1047 = vmatpush1.xpose.msra.mxu0 %v1020
  %1048 = vmatprep.subr.mxu0 0.0
  %1049 = vmatpush1.xpose.msra.mxu0 %v1019
  %1050 = vmatprep.subr.mxu0 0.0
  %1051 = vmatpush1.xpose.msra.mxu0 %v1018
  %1052 = vmatprep.subr.mxu0 0.0
  %1053 = vmatpush1.xpose.msra.mxu0 %v1017
  %1054 = vmatprep.subr.mxu0 0.0
  %1055 = vmatpush1.xpose.msra.mxu0 %v1016
  %1056 = vmatprep.subr.mxu0 0.0
  %1057 = vmatpush1.xpose.msra.mxu0 %v1015
  %1058 = vmatprep.subr.mxu0 0.0
  %1059 = vmatpush1.xpose.msra.mxu0 %v1014
  %1060 = vmatprep.subr.mxu0 0.0
  %1061 = vmatpush1.xpose.msra.mxu0 %v1013
  %1062 = vmatprep.subr.mxu0 0.0
  %1063 = vmatpush1.xpose.msra.mxu0 %v1012
  %1064 = vmatprep.subr.mxu0 0.0
  %1065 = vmatpush1.xpose.msra.mxu0 %v1011
  %1066 = vmatprep.subr.mxu0 0.0
  %1067 = vmatpush1.xpose.msra.mxu0 %v1010
  %1068 = vmatprep.subr.mxu0 0.0
  %1069 = vmatpush1.xpose.msra.mxu0 %v1009
  %1070 = vmatprep.subr.mxu0 0.0
  %1071 = vmatpush1.xpose.msra.mxu0 %v1008
  %1072 = vmatprep.subr.mxu0 0.0
  %1073 = vmatpush2.xpose.msra.mxu0 %v1039
  %1074 = vmatprep.subr.mxu0 0.0
  %1075 = vmatpush2.xpose.msra.mxu0 %v1038
  %1076 = vmatprep.subr.mxu0 0.0
  %1077 = vmatpush2.xpose.msra.mxu0 %v1037
  %1078 = vmatprep.subr.mxu0 0.0
  %1079 = vmatpush2.xpose.msra.mxu0 %v1036
  %1080 = vmatprep.subr.mxu0 0.0
  %1081 = vmatpush2.xpose.msra.mxu0 %v1035
  %1082 = vmatprep.subr.mxu0 0.0
  %1083 = vmatpush2.xpose.msra.mxu0 %v1034
  %1084 = vmatprep.subr.mxu0 0.0
  %1085 = vmatpush2.xpose.msra.mxu0 %v1033
  %1086 = vmatprep.subr.mxu0 0.0
  %1087 = vmatpush2.xpose.msra.mxu0 %v1032
  %1088 = vmatprep.subr.mxu0 0.0
  %1089 = vmatpush2.xpose.msra.mxu0 %v1031
  %1090 = vmatprep.subr.mxu0 0.0
  %1091 = vmatpush2.xpose.msra.mxu0 %v1030
  %1092 = vmatprep.subr.mxu0 0.0
  %1093 = vmatpush2.xpose.msra.mxu0 %v1029
  %1094 = vmatprep.subr.mxu0 0.0
  %1095 = vmatpush2.xpose.msra.mxu0 %v1028
  %1096 = vmatprep.subr.mxu0 0.0
  %1097 = vmatpush2.xpose.msra.mxu0 %v1027
  %1098 = vmatprep.subr.mxu0 0.0
  %1099 = vmatpush2.xpose.msra.mxu0 %v1026
  %1100 = vmatprep.subr.mxu0 0.0
  %1101 = vmatpush2.xpose.msra.mxu0 %v1025
  %1102 = vmatprep.subr.mxu0 0.0
  %1103 = vmatpush2.xpose.msra.mxu0 %v1024
  %1104 = vmatprep.mubr.f32.mxu0 0.0
  %1105 = vmatmul.mubr.f32.gmra.mxu0 %v991
  %v1106 = vpop.f32.mrf.mxu0
  %v1107 = vadd.f32 0.0, %v1106
  %v1108 = vpop.f32.mrf.mxu0
  %v1109 = vadd.f32 0.0, %v1108
  %1110 = vmatprep.mubr.f32.mxu0 0.0
  %1111 = vmatmul.mubr.f32.gmra.mxu0 %v992
  %v1112 = vpop.f32.mrf.mxu0
  %v1113 = vadd.f32 0.0, %v1112
  %v1114 = vpop.f32.mrf.mxu0
  %v1115 = vadd.f32 0.0, %v1114
  %1116 = vmatprep.mubr.f32.mxu0 0.0
  %1117 = vmatmul.mubr.f32.gmra.mxu0 %v993
  %v1118 = vpop.f32.mrf.mxu0
  %v1119 = vadd.f32 0.0, %v1118
  %v1120 = vpop.f32.mrf.mxu0
  %v1121 = vadd.f32 0.0, %v1120
  %1122 = vmatprep.mubr.f32.mxu0 0.0
  %1123 = vmatmul.mubr.f32.gmra.mxu0 %v994
  %v1124 = vpop.f32.mrf.mxu0
  %v1125 = vadd.f32 0.0, %v1124
  %v1126 = vpop.f32.mrf.mxu0
  %v1127 = vadd.f32 0.0, %v1126
  %1128 = vmatprep.mubr.f32.mxu0 0.0
  %1129 = vmatmul.mubr.f32.gmra.mxu0 %v995
  %v1130 = vpop.f32.mrf.mxu0
  %v1131 = vadd.f32 0.0, %v1130
  %v1132 = vpop.f32.mrf.mxu0
  %v1133 = vadd.f32 0.0, %v1132
  %1134 = vmatprep.mubr.f32.mxu0 0.0
  %1135 = vmatmul.mubr.f32.gmra.mxu0 %v996
  %v1136 = vpop.f32.mrf.mxu0
  %v1137 = vadd.f32 0.0, %v1136
  %v1138 = vpop.f32.mrf.mxu0
  %v1139 = vadd.f32 0.0, %v1138
  %1140 = vmatprep.mubr.f32.mxu0 0.0
  %1141 = vmatmul.mubr.f32.gmra.mxu0 %v997
  %v1142 = vpop.f32.mrf.mxu0
  %v1143 = vadd.f32 0.0, %v1142
  %v1144 = vpop.f32.mrf.mxu0
  %v1145 = vadd.f32 0.0, %v1144
  %1146 = vmatprep.mubr.f32.mxu0 0.0
  %1147 = vmatmul.mubr.f32.gmra.mxu0 %v998
  %v1148 = vpop.f32.mrf.mxu0
  %v1149 = vadd.f32 0.0, %v1148
  %v1150 = vpop.f32.mrf.mxu0
  %v1151 = vadd.f32 0.0, %v1150
  %1152 = vmatprep.mubr.f32.mxu0 0.0
  %1153 = vmatmul.mubr.f32.gmra.mxu0 %v999
  %v1154 = vpop.f32.mrf.mxu0
  %v1155 = vadd.f32 0.0, %v1154
  %v1156 = vpop.f32.mrf.mxu0
  %v1157 = vadd.f32 0.0, %v1156
  %1158 = vmatprep.mubr.f32.mxu0 0.0
  %1159 = vmatmul.mubr.f32.gmra.mxu0 %v1000
  %v1160 = vpop.f32.mrf.mxu0
  %v1161 = vadd.f32 0.0, %v1160
  %v1162 = vpop.f32.mrf.mxu0
  %v1163 = vadd.f32 0.0, %v1162
  %1164 = vmatprep.mubr.f32.mxu0 0.0
  %1165 = vmatmul.mubr.f32.gmra.mxu0 %v1001
  %v1166 = vpop.f32.mrf.mxu0
  %v1167 = vadd.f32 0.0, %v1166
  %v1168 = vpop.f32.mrf.mxu0
  %v1169 = vadd.f32 0.0, %v1168
  %1170 = vmatprep.mubr.f32.mxu0 0.0
  %1171 = vmatmul.mubr.f32.gmra.mxu0 %v1002
  %v1172 = vpop.f32.mrf.mxu0
  %v1173 = vadd.f32 0.0, %v1172
  %v1174 = vpop.f32.mrf.mxu0
  %v1175 = vadd.f32 0.0, %v1174
  %1176 = vmatprep.mubr.f32.mxu0 0.0
  %1177 = vmatmul.mubr.f32.gmra.mxu0 %v1003
  %v1178 = vpop.f32.mrf.mxu0
  %v1179 = vadd.f32 0.0, %v1178
  %v1180 = vpop.f32.mrf.mxu0
  %v1181 = vadd.f32 0.0, %v1180
  %1182 = vmatprep.mubr.f32.mxu0 0.0
  %1183 = vmatmul.mubr.f32.gmra.mxu0 %v1004
  %v1184 = vpop.f32.mrf.mxu0
  %v1185 = vadd.f32 0.0, %v1184
  %v1186 = vpop.f32.mrf.mxu0
  %v1187 = vadd.f32 0.0, %v1186
  %1188 = vmatprep.mubr.f32.mxu0 0.0
  %1189 = vmatmul.mubr.f32.gmra.mxu0 %v1005
  %v1190 = vpop.f32.mrf.mxu0
  %v1191 = vadd.f32 0.0, %v1190
  %v1192 = vpop.f32.mrf.mxu0
  %v1193 = vadd.f32 0.0, %v1192
  %1194 = vmatprep.mubr.f32.mxu0 0.0
  %1195 = vmatmul.mubr.f32.gmra.mxu0 %v1006
  %v1196 = vpop.f32.mrf.mxu0
  %v1197 = vadd.f32 0.0, %v1196
  %v1198 = vpop.f32.mrf.mxu0
  %v1199 = vadd.f32 0.0, %v1198
  %1200 = vdwg.mxu0
  %s1201 = scalar_lea.vmem %s2, 2
  %v1202 = vld [vmem:[%s1201] sm:$0x3]
  %v1204 = vlaneseq
  %v1205 = vshrl.u32 %v1204, 7
  %v1206 = vsub.s32 0, %v1205
  %v1207 = vrot.slane %v1202, %v1206
  %v1208 = vlaneseq
  %v1209 = vshrl.u32 %v1208, 7
  %v1210 = vsub.s32 1, %v1209
  %v1211 = vrot.slane %v1202, %v1210
  %v1214 = vsub.f32 %v1107, %v1207
  %v1215 = vsub.f32 %v1109, %v1211
  %v1216 = vsub.f32 %v1113, %v1207
  %v1217 = vsub.f32 %v1115, %v1211
  %v1218 = vsub.f32 %v1119, %v1207
  %v1219 = vsub.f32 %v1121, %v1211
  %v1220 = vsub.f32 %v1125, %v1207
  %v1221 = vsub.f32 %v1127, %v1211
  %v1222 = vsub.f32 %v1131, %v1207
  %v1223 = vsub.f32 %v1133, %v1211
  %v1224 = vsub.f32 %v1137, %v1207
  %v1225 = vsub.f32 %v1139, %v1211
  %v1226 = vsub.f32 %v1143, %v1207
  %v1227 = vsub.f32 %v1145, %v1211
  %v1228 = vsub.f32 %v1149, %v1207
  %v1229 = vsub.f32 %v1151, %v1211
  %v1230 = vsub.f32 %v1155, %v1207
  %v1231 = vsub.f32 %v1157, %v1211
  %v1232 = vsub.f32 %v1161, %v1207
  %v1233 = vsub.f32 %v1163, %v1211
  %v1234 = vsub.f32 %v1167, %v1207
  %v1235 = vsub.f32 %v1169, %v1211
  %v1236 = vsub.f32 %v1173, %v1207
  %v1237 = vsub.f32 %v1175, %v1211
  %v1238 = vsub.f32 %v1179, %v1207
  %v1239 = vsub.f32 %v1181, %v1211
  %v1240 = vsub.f32 %v1185, %v1207
  %v1241 = vsub.f32 %v1187, %v1211
  %v1242 = vsub.f32 %v1191, %v1207
  %v1243 = vsub.f32 %v1193, %v1211
  %v1244 = vsub.f32 %v1197, %v1207
  %v1245 = vsub.f32 %v1199, %v1211
  %v1246 = vmax.f32 %v1214, %v1215
  %1247 = vmax.xlane.f32.xlu0 %v1246
  %v1248 = vpop.xlane.xlu0 %1247
  %v1249 = vmax.f32 %v1216, %v1217
  %1250 = vmax.xlane.f32.xlu0 %v1249
  %v1251 = vpop.xlane.xlu0 %1250
  %v1252 = vmax.f32 %v1218, %v1219
  %1253 = vmax.xlane.f32.xlu0 %v1252
  %v1254 = vpop.xlane.xlu0 %1253
  %v1255 = vmax.f32 %v1220, %v1221
  %1256 = vmax.xlane.f32.xlu0 %v1255
  %v1257 = vpop.xlane.xlu0 %1256
  %v1258 = vmax.f32 %v1222, %v1223
  %1259 = vmax.xlane.f32.xlu0 %v1258
  %v1260 = vpop.xlane.xlu0 %1259
  %v1261 = vmax.f32 %v1224, %v1225
  %1262 = vmax.xlane.f32.xlu0 %v1261
  %v1263 = vpop.xlane.xlu0 %1262
  %v1264 = vmax.f32 %v1226, %v1227
  %1265 = vmax.xlane.f32.xlu0 %v1264
  %v1266 = vpop.xlane.xlu0 %1265
  %v1267 = vmax.f32 %v1228, %v1229
  %1268 = vmax.xlane.f32.xlu0 %v1267
  %v1269 = vpop.xlane.xlu0 %1268
  %v1270 = vmax.f32 %v1230, %v1231
  %1271 = vmax.xlane.f32.xlu0 %v1270
  %v1272 = vpop.xlane.xlu0 %1271
  %v1273 = vmax.f32 %v1232, %v1233
  %1274 = vmax.xlane.f32.xlu0 %v1273
  %v1275 = vpop.xlane.xlu0 %1274
  %v1276 = vmax.f32 %v1234, %v1235
  %1277 = vmax.xlane.f32.xlu0 %v1276
  %v1278 = vpop.xlane.xlu0 %1277
  %v1279 = vmax.f32 %v1236, %v1237
  %1280 = vmax.xlane.f32.xlu0 %v1279
  %v1281 = vpop.xlane.xlu0 %1280
  %v1282 = vmax.f32 %v1238, %v1239
  %1283 = vmax.xlane.f32.xlu0 %v1282
  %v1284 = vpop.xlane.xlu0 %1283
  %v1285 = vmax.f32 %v1240, %v1241
  %1286 = vmax.xlane.f32.xlu0 %v1285
  %v1287 = vpop.xlane.xlu0 %1286
  %v1288 = vmax.f32 %v1242, %v1243
  %1289 = vmax.xlane.f32.xlu0 %v1288
  %v1290 = vpop.xlane.xlu0 %1289
  %v1291 = vmax.f32 %v1244, %v1245
  %1292 = vmax.xlane.f32.xlu0 %v1291
  %v1293 = vpop.xlane.xlu0 %1292
  %vm1294 = vcmp.eq.f32.partialorder %v1214, %v1248
  %vm1295 = vcmp.eq.f32.partialorder %v1215, %v1248
  %vm1296 = vcmp.eq.f32.partialorder %v1216, %v1251
  %vm1297 = vcmp.eq.f32.partialorder %v1217, %v1251
  %vm1298 = vcmp.eq.f32.partialorder %v1218, %v1254
  %vm1299 = vcmp.eq.f32.partialorder %v1219, %v1254
  %vm1300 = vcmp.eq.f32.partialorder %v1220, %v1257
  %vm1301 = vcmp.eq.f32.partialorder %v1221, %v1257
  %vm1302 = vcmp.eq.f32.partialorder %v1222, %v1260
  %vm1303 = vcmp.eq.f32.partialorder %v1223, %v1260
  %vm1304 = vcmp.eq.f32.partialorder %v1224, %v1263
  %vm1305 = vcmp.eq.f32.partialorder %v1225, %v1263
  %vm1306 = vcmp.eq.f32.partialorder %v1226, %v1266
  %vm1307 = vcmp.eq.f32.partialorder %v1227, %v1266
  %vm1308 = vcmp.eq.f32.partialorder %v1228, %v1269
  %vm1309 = vcmp.eq.f32.partialorder %v1229, %v1269
  %vm1310 = vcmp.eq.f32.partialorder %v1230, %v1272
  %vm1311 = vcmp.eq.f32.partialorder %v1231, %v1272
  %vm1312 = vcmp.eq.f32.partialorder %v1232, %v1275
  %vm1313 = vcmp.eq.f32.partialorder %v1233, %v1275
  %vm1314 = vcmp.eq.f32.partialorder %v1234, %v1278
  %vm1315 = vcmp.eq.f32.partialorder %v1235, %v1278
  %vm1316 = vcmp.eq.f32.partialorder %v1236, %v1281
  %vm1317 = vcmp.eq.f32.partialorder %v1237, %v1281
  %vm1318 = vcmp.eq.f32.partialorder %v1238, %v1284
  %vm1319 = vcmp.eq.f32.partialorder %v1239, %v1284
  %vm1320 = vcmp.eq.f32.partialorder %v1240, %v1287
  %vm1321 = vcmp.eq.f32.partialorder %v1241, %v1287
  %vm1322 = vcmp.eq.f32.partialorder %v1242, %v1290
  %vm1323 = vcmp.eq.f32.partialorder %v1243, %v1290
  %vm1324 = vcmp.eq.f32.partialorder %v1244, %v1293
  %vm1325 = vcmp.eq.f32.partialorder %v1245, %v1293
  %v1326 = vsel %vm1294, %v33, 256
  %v1327 = vsel %vm1295, %v34, 256
  %v1328 = vsel %vm1296, %v33, 256
  %v1329 = vsel %vm1297, %v34, 256
  %v1330 = vsel %vm1298, %v33, 256
  %v1331 = vsel %vm1299, %v34, 256
  %v1332 = vsel %vm1300, %v33, 256
  %v1333 = vsel %vm1301, %v34, 256
  %v1334 = vsel %vm1302, %v33, 256
  %v1335 = vsel %vm1303, %v34, 256
  %v1336 = vsel %vm1304, %v33, 256
  %v1337 = vsel %vm1305, %v34, 256
  %v1338 = vsel %vm1306, %v33, 256
  %v1339 = vsel %vm1307, %v34, 256
  %v1340 = vsel %vm1308, %v33, 256
  %v1341 = vsel %vm1309, %v34, 256
  %v1342 = vsel %vm1310, %v33, 256
  %v1343 = vsel %vm1311, %v34, 256
  %v1344 = vsel %vm1312, %v33, 256
  %v1345 = vsel %vm1313, %v34, 256
  %v1346 = vsel %vm1314, %v33, 256
  %v1347 = vsel %vm1315, %v34, 256
  %v1348 = vsel %vm1316, %v33, 256
  %v1349 = vsel %vm1317, %v34, 256
  %v1350 = vsel %vm1318, %v33, 256
  %v1351 = vsel %vm1319, %v34, 256
  %v1352 = vsel %vm1320, %v33, 256
  %v1353 = vsel %vm1321, %v34, 256
  %v1354 = vsel %vm1322, %v33, 256
  %v1355 = vsel %vm1323, %v34, 256
  %v1356 = vsel %vm1324, %v33, 256
  %v1357 = vsel %vm1325, %v34, 256
  %vm1358 = vcmp.lt.s32.totalorder %v1326, %v1327
  %v1359 = vsel %vm1358, %v1326, %v1327
  %v1360 = vand.u32 %v1359, 65535
  %v1361 = vshra.s32 %v1359, 16
  %v1362 = vcvt.s32.f32 %v1360
  %v1363 = vcvt.s32.f32 %v1361
  %1364 = vmin.xlane.f32.xlu0 %v1363
  %v1365 = vpop.xlane.xlu0 %1364
  %vm1366 = vcmp.eq.f32.partialorder %v1363, %v1365
  %v1367 = vsel %vm1366, %v1362, inf
  %1368 = vmin.xlane.f32.xlu0 %v1367
  %v1369 = vpop.xlane.xlu0 %1368
  %v1370 = vcvt.f32.s32 %v1369
  %v1371 = vcvt.f32.s32 %v1365
  %v1372 = vshll.u32 %v1371, 16
  %v1373 = vadd.s32 %v1372, %v1370
  %vm1374 = vcmp.lt.s32.totalorder %v1328, %v1329
  %v1375 = vsel %vm1374, %v1328, %v1329
  %v1376 = vand.u32 %v1375, 65535
  %v1377 = vshra.s32 %v1375, 16
  %v1378 = vcvt.s32.f32 %v1376
  %v1379 = vcvt.s32.f32 %v1377
  %1380 = vmin.xlane.f32.xlu0 %v1379
  %v1381 = vpop.xlane.xlu0 %1380
  %vm1382 = vcmp.eq.f32.partialorder %v1379, %v1381
  %v1383 = vsel %vm1382, %v1378, inf
  %1384 = vmin.xlane.f32.xlu0 %v1383
  %v1385 = vpop.xlane.xlu0 %1384
  %v1386 = vcvt.f32.s32 %v1385
  %v1387 = vcvt.f32.s32 %v1381
  %v1388 = vshll.u32 %v1387, 16
  %v1389 = vadd.s32 %v1388, %v1386
  %vm1390 = vcmp.lt.s32.totalorder %v1330, %v1331
  %v1391 = vsel %vm1390, %v1330, %v1331
  %v1392 = vand.u32 %v1391, 65535
  %v1393 = vshra.s32 %v1391, 16
  %v1394 = vcvt.s32.f32 %v1392
  %v1395 = vcvt.s32.f32 %v1393
  %1396 = vmin.xlane.f32.xlu0 %v1395
  %v1397 = vpop.xlane.xlu0 %1396
  %vm1398 = vcmp.eq.f32.partialorder %v1395, %v1397
  %v1399 = vsel %vm1398, %v1394, inf
  %1400 = vmin.xlane.f32.xlu0 %v1399
  %v1401 = vpop.xlane.xlu0 %1400
  %v1402 = vcvt.f32.s32 %v1401
  %v1403 = vcvt.f32.s32 %v1397
  %v1404 = vshll.u32 %v1403, 16
  %v1405 = vadd.s32 %v1404, %v1402
  %vm1406 = vcmp.lt.s32.totalorder %v1332, %v1333
  %v1407 = vsel %vm1406, %v1332, %v1333
  %v1408 = vand.u32 %v1407, 65535
  %v1409 = vshra.s32 %v1407, 16
  %v1410 = vcvt.s32.f32 %v1408
  %v1411 = vcvt.s32.f32 %v1409
  %1412 = vmin.xlane.f32.xlu0 %v1411
  %v1413 = vpop.xlane.xlu0 %1412
  %vm1414 = vcmp.eq.f32.partialorder %v1411, %v1413
  %v1415 = vsel %vm1414, %v1410, inf
  %1416 = vmin.xlane.f32.xlu0 %v1415
  %v1417 = vpop.xlane.xlu0 %1416
  %v1418 = vcvt.f32.s32 %v1417
  %v1419 = vcvt.f32.s32 %v1413
  %v1420 = vshll.u32 %v1419, 16
  %v1421 = vadd.s32 %v1420, %v1418
  %vm1422 = vcmp.lt.s32.totalorder %v1334, %v1335
  %v1423 = vsel %vm1422, %v1334, %v1335
  %v1424 = vand.u32 %v1423, 65535
  %v1425 = vshra.s32 %v1423, 16
  %v1426 = vcvt.s32.f32 %v1424
  %v1427 = vcvt.s32.f32 %v1425
  %1428 = vmin.xlane.f32.xlu0 %v1427
  %v1429 = vpop.xlane.xlu0 %1428
  %vm1430 = vcmp.eq.f32.partialorder %v1427, %v1429
  %v1431 = vsel %vm1430, %v1426, inf
  %1432 = vmin.xlane.f32.xlu0 %v1431
  %v1433 = vpop.xlane.xlu0 %1432
  %v1434 = vcvt.f32.s32 %v1433
  %v1435 = vcvt.f32.s32 %v1429
  %v1436 = vshll.u32 %v1435, 16
  %v1437 = vadd.s32 %v1436, %v1434
  %vm1438 = vcmp.lt.s32.totalorder %v1336, %v1337
  %v1439 = vsel %vm1438, %v1336, %v1337
  %v1440 = vand.u32 %v1439, 65535
  %v1441 = vshra.s32 %v1439, 16
  %v1442 = vcvt.s32.f32 %v1440
  %v1443 = vcvt.s32.f32 %v1441
  %1444 = vmin.xlane.f32.xlu0 %v1443
  %v1445 = vpop.xlane.xlu0 %1444
  %vm1446 = vcmp.eq.f32.partialorder %v1443, %v1445
  %v1447 = vsel %vm1446, %v1442, inf
  %1448 = vmin.xlane.f32.xlu0 %v1447
  %v1449 = vpop.xlane.xlu0 %1448
  %v1450 = vcvt.f32.s32 %v1449
  %v1451 = vcvt.f32.s32 %v1445
  %v1452 = vshll.u32 %v1451, 16
  %v1453 = vadd.s32 %v1452, %v1450
  %vm1454 = vcmp.lt.s32.totalorder %v1338, %v1339
  %v1455 = vsel %vm1454, %v1338, %v1339
  %v1456 = vand.u32 %v1455, 65535
  %v1457 = vshra.s32 %v1455, 16
  %v1458 = vcvt.s32.f32 %v1456
  %v1459 = vcvt.s32.f32 %v1457
  %1460 = vmin.xlane.f32.xlu0 %v1459
  %v1461 = vpop.xlane.xlu0 %1460
  %vm1462 = vcmp.eq.f32.partialorder %v1459, %v1461
  %v1463 = vsel %vm1462, %v1458, inf
  %1464 = vmin.xlane.f32.xlu0 %v1463
  %v1465 = vpop.xlane.xlu0 %1464
  %v1466 = vcvt.f32.s32 %v1465
  %v1467 = vcvt.f32.s32 %v1461
  %v1468 = vshll.u32 %v1467, 16
  %v1469 = vadd.s32 %v1468, %v1466
  %vm1470 = vcmp.lt.s32.totalorder %v1340, %v1341
  %v1471 = vsel %vm1470, %v1340, %v1341
  %v1472 = vand.u32 %v1471, 65535
  %v1473 = vshra.s32 %v1471, 16
  %v1474 = vcvt.s32.f32 %v1472
  %v1475 = vcvt.s32.f32 %v1473
  %1476 = vmin.xlane.f32.xlu0 %v1475
  %v1477 = vpop.xlane.xlu0 %1476
  %vm1478 = vcmp.eq.f32.partialorder %v1475, %v1477
  %v1479 = vsel %vm1478, %v1474, inf
  %1480 = vmin.xlane.f32.xlu0 %v1479
  %v1481 = vpop.xlane.xlu0 %1480
  %v1482 = vcvt.f32.s32 %v1481
  %v1483 = vcvt.f32.s32 %v1477
  %v1484 = vshll.u32 %v1483, 16
  %v1485 = vadd.s32 %v1484, %v1482
  %vm1486 = vcmp.lt.s32.totalorder %v1342, %v1343
  %v1487 = vsel %vm1486, %v1342, %v1343
  %v1488 = vand.u32 %v1487, 65535
  %v1489 = vshra.s32 %v1487, 16
  %v1490 = vcvt.s32.f32 %v1488
  %v1491 = vcvt.s32.f32 %v1489
  %1492 = vmin.xlane.f32.xlu0 %v1491
  %v1493 = vpop.xlane.xlu0 %1492
  %vm1494 = vcmp.eq.f32.partialorder %v1491, %v1493
  %v1495 = vsel %vm1494, %v1490, inf
  %1496 = vmin.xlane.f32.xlu0 %v1495
  %v1497 = vpop.xlane.xlu0 %1496
  %v1498 = vcvt.f32.s32 %v1497
  %v1499 = vcvt.f32.s32 %v1493
  %v1500 = vshll.u32 %v1499, 16
  %v1501 = vadd.s32 %v1500, %v1498
  %vm1502 = vcmp.lt.s32.totalorder %v1344, %v1345
  %v1503 = vsel %vm1502, %v1344, %v1345
  %v1504 = vand.u32 %v1503, 65535
  %v1505 = vshra.s32 %v1503, 16
  %v1506 = vcvt.s32.f32 %v1504
  %v1507 = vcvt.s32.f32 %v1505
  %1508 = vmin.xlane.f32.xlu0 %v1507
  %v1509 = vpop.xlane.xlu0 %1508
  %vm1510 = vcmp.eq.f32.partialorder %v1507, %v1509
  %v1511 = vsel %vm1510, %v1506, inf
  %1512 = vmin.xlane.f32.xlu0 %v1511
  %v1513 = vpop.xlane.xlu0 %1512
  %v1514 = vcvt.f32.s32 %v1513
  %v1515 = vcvt.f32.s32 %v1509
  %v1516 = vshll.u32 %v1515, 16
  %v1517 = vadd.s32 %v1516, %v1514
  %vm1518 = vcmp.lt.s32.totalorder %v1346, %v1347
  %v1519 = vsel %vm1518, %v1346, %v1347
  %v1520 = vand.u32 %v1519, 65535
  %v1521 = vshra.s32 %v1519, 16
  %v1522 = vcvt.s32.f32 %v1520
  %v1523 = vcvt.s32.f32 %v1521
  %1524 = vmin.xlane.f32.xlu0 %v1523
  %v1525 = vpop.xlane.xlu0 %1524
  %vm1526 = vcmp.eq.f32.partialorder %v1523, %v1525
  %v1527 = vsel %vm1526, %v1522, inf
  %1528 = vmin.xlane.f32.xlu0 %v1527
  %v1529 = vpop.xlane.xlu0 %1528
  %v1530 = vcvt.f32.s32 %v1529
  %v1531 = vcvt.f32.s32 %v1525
  %v1532 = vshll.u32 %v1531, 16
  %v1533 = vadd.s32 %v1532, %v1530
  %vm1534 = vcmp.lt.s32.totalorder %v1348, %v1349
  %v1535 = vsel %vm1534, %v1348, %v1349
  %v1536 = vand.u32 %v1535, 65535
  %v1537 = vshra.s32 %v1535, 16
  %v1538 = vcvt.s32.f32 %v1536
  %v1539 = vcvt.s32.f32 %v1537
  %1540 = vmin.xlane.f32.xlu0 %v1539
  %v1541 = vpop.xlane.xlu0 %1540
  %vm1542 = vcmp.eq.f32.partialorder %v1539, %v1541
  %v1543 = vsel %vm1542, %v1538, inf
  %1544 = vmin.xlane.f32.xlu0 %v1543
  %v1545 = vpop.xlane.xlu0 %1544
  %v1546 = vcvt.f32.s32 %v1545
  %v1547 = vcvt.f32.s32 %v1541
  %v1548 = vshll.u32 %v1547, 16
  %v1549 = vadd.s32 %v1548, %v1546
  %vm1550 = vcmp.lt.s32.totalorder %v1350, %v1351
  %v1551 = vsel %vm1550, %v1350, %v1351
  %v1552 = vand.u32 %v1551, 65535
  %v1553 = vshra.s32 %v1551, 16
  %v1554 = vcvt.s32.f32 %v1552
  %v1555 = vcvt.s32.f32 %v1553
  %1556 = vmin.xlane.f32.xlu0 %v1555
  %v1557 = vpop.xlane.xlu0 %1556
  %vm1558 = vcmp.eq.f32.partialorder %v1555, %v1557
  %v1559 = vsel %vm1558, %v1554, inf
  %1560 = vmin.xlane.f32.xlu0 %v1559
  %v1561 = vpop.xlane.xlu0 %1560
  %v1562 = vcvt.f32.s32 %v1561
  %v1563 = vcvt.f32.s32 %v1557
  %v1564 = vshll.u32 %v1563, 16
  %v1565 = vadd.s32 %v1564, %v1562
  %vm1566 = vcmp.lt.s32.totalorder %v1352, %v1353
  %v1567 = vsel %vm1566, %v1352, %v1353
  %v1568 = vand.u32 %v1567, 65535
  %v1569 = vshra.s32 %v1567, 16
  %v1570 = vcvt.s32.f32 %v1568
  %v1571 = vcvt.s32.f32 %v1569
  %1572 = vmin.xlane.f32.xlu0 %v1571
  %v1573 = vpop.xlane.xlu0 %1572
  %vm1574 = vcmp.eq.f32.partialorder %v1571, %v1573
  %v1575 = vsel %vm1574, %v1570, inf
  %1576 = vmin.xlane.f32.xlu0 %v1575
  %v1577 = vpop.xlane.xlu0 %1576
  %v1578 = vcvt.f32.s32 %v1577
  %v1579 = vcvt.f32.s32 %v1573
  %v1580 = vshll.u32 %v1579, 16
  %v1581 = vadd.s32 %v1580, %v1578
  %vm1582 = vcmp.lt.s32.totalorder %v1354, %v1355
  %v1583 = vsel %vm1582, %v1354, %v1355
  %v1584 = vand.u32 %v1583, 65535
  %v1585 = vshra.s32 %v1583, 16
  %v1586 = vcvt.s32.f32 %v1584
  %v1587 = vcvt.s32.f32 %v1585
  %1588 = vmin.xlane.f32.xlu0 %v1587
  %v1589 = vpop.xlane.xlu0 %1588
  %vm1590 = vcmp.eq.f32.partialorder %v1587, %v1589
  %v1591 = vsel %vm1590, %v1586, inf
  %1592 = vmin.xlane.f32.xlu0 %v1591
  %v1593 = vpop.xlane.xlu0 %1592
  %v1594 = vcvt.f32.s32 %v1593
  %v1595 = vcvt.f32.s32 %v1589
  %v1596 = vshll.u32 %v1595, 16
  %v1597 = vadd.s32 %v1596, %v1594
  %vm1598 = vcmp.lt.s32.totalorder %v1356, %v1357
  %v1599 = vsel %vm1598, %v1356, %v1357
  %v1600 = vand.u32 %v1599, 65535
  %v1601 = vshra.s32 %v1599, 16
  %v1602 = vcvt.s32.f32 %v1600
  %v1603 = vcvt.s32.f32 %v1601
  %1604 = vmin.xlane.f32.xlu0 %v1603
  %v1605 = vpop.xlane.xlu0 %1604
  %vm1606 = vcmp.eq.f32.partialorder %v1603, %v1605
  %v1607 = vsel %vm1606, %v1602, inf
  %1608 = vmin.xlane.f32.xlu0 %v1607
  %v1609 = vpop.xlane.xlu0 %1608
  %v1610 = vcvt.f32.s32 %v1609
  %v1611 = vcvt.f32.s32 %v1605
  %v1612 = vshll.u32 %v1611, 16
  %v1613 = vadd.s32 %v1612, %v1610
  %vm1614 = vcmp.eq.s32.totalorder %v33, %v1373
  %vm1615 = vcmp.eq.s32.totalorder %v34, %v1373
  %vm1616 = vcmp.eq.s32.totalorder %v33, %v1389
  %vm1617 = vcmp.eq.s32.totalorder %v34, %v1389
  %vm1618 = vcmp.eq.s32.totalorder %v33, %v1405
  %vm1619 = vcmp.eq.s32.totalorder %v34, %v1405
  %vm1620 = vcmp.eq.s32.totalorder %v33, %v1421
  %vm1621 = vcmp.eq.s32.totalorder %v34, %v1421
  %vm1622 = vcmp.eq.s32.totalorder %v33, %v1437
  %vm1623 = vcmp.eq.s32.totalorder %v34, %v1437
  %vm1624 = vcmp.eq.s32.totalorder %v33, %v1453
  %vm1625 = vcmp.eq.s32.totalorder %v34, %v1453
  %vm1626 = vcmp.eq.s32.totalorder %v33, %v1469
  %vm1627 = vcmp.eq.s32.totalorder %v34, %v1469
  %vm1628 = vcmp.eq.s32.totalorder %v33, %v1485
  %vm1629 = vcmp.eq.s32.totalorder %v34, %v1485
  %vm1630 = vcmp.eq.s32.totalorder %v33, %v1501
  %vm1631 = vcmp.eq.s32.totalorder %v34, %v1501
  %vm1632 = vcmp.eq.s32.totalorder %v33, %v1517
  %vm1633 = vcmp.eq.s32.totalorder %v34, %v1517
  %vm1634 = vcmp.eq.s32.totalorder %v33, %v1533
  %vm1635 = vcmp.eq.s32.totalorder %v34, %v1533
  %vm1636 = vcmp.eq.s32.totalorder %v33, %v1549
  %vm1637 = vcmp.eq.s32.totalorder %v34, %v1549
  %vm1638 = vcmp.eq.s32.totalorder %v33, %v1565
  %vm1639 = vcmp.eq.s32.totalorder %v34, %v1565
  %vm1640 = vcmp.eq.s32.totalorder %v33, %v1581
  %vm1641 = vcmp.eq.s32.totalorder %v34, %v1581
  %vm1642 = vcmp.eq.s32.totalorder %v33, %v1597
  %vm1643 = vcmp.eq.s32.totalorder %v34, %v1597
  %vm1644 = vcmp.eq.s32.totalorder %v33, %v1613
  %vm1645 = vcmp.eq.s32.totalorder %v34, %v1613
  %v1646 = vsel %vm1614, 1, 0
  %v1647 = vsel %vm1615, 1, 0
  %v1648 = vsel %vm1616, 1, 0
  %v1649 = vsel %vm1617, 1, 0
  %v1650 = vsel %vm1618, 1, 0
  %v1651 = vsel %vm1619, 1, 0
  %v1652 = vsel %vm1620, 1, 0
  %v1653 = vsel %vm1621, 1, 0
  %v1654 = vsel %vm1622, 1, 0
  %v1655 = vsel %vm1623, 1, 0
  %v1656 = vsel %vm1624, 1, 0
  %v1657 = vsel %vm1625, 1, 0
  %v1658 = vsel %vm1626, 1, 0
  %v1659 = vsel %vm1627, 1, 0
  %v1660 = vsel %vm1628, 1, 0
  %v1661 = vsel %vm1629, 1, 0
  %v1662 = vsel %vm1630, 1, 0
  %v1663 = vsel %vm1631, 1, 0
  %v1664 = vsel %vm1632, 1, 0
  %v1665 = vsel %vm1633, 1, 0
  %v1666 = vsel %vm1634, 1, 0
  %v1667 = vsel %vm1635, 1, 0
  %v1668 = vsel %vm1636, 1, 0
  %v1669 = vsel %vm1637, 1, 0
  %v1670 = vsel %vm1638, 1, 0
  %v1671 = vsel %vm1639, 1, 0
  %v1672 = vsel %vm1640, 1, 0
  %v1673 = vsel %vm1641, 1, 0
  %v1674 = vsel %vm1642, 1, 0
  %v1675 = vsel %vm1643, 1, 0
  %v1676 = vsel %vm1644, 1, 0
  %v1677 = vsel %vm1645, 1, 0
  %v1678 = vcvt.s32.f32 %v1646
  %v1679 = vcvt.s32.f32 %v1647
  %v1680 = vcvt.s32.f32 %v1648
  %v1681 = vcvt.s32.f32 %v1649
  %v1682 = vcvt.s32.f32 %v1650
  %v1683 = vcvt.s32.f32 %v1651
  %v1684 = vcvt.s32.f32 %v1652
  %v1685 = vcvt.s32.f32 %v1653
  %v1686 = vcvt.s32.f32 %v1654
  %v1687 = vcvt.s32.f32 %v1655
  %v1688 = vcvt.s32.f32 %v1656
  %v1689 = vcvt.s32.f32 %v1657
  %v1690 = vcvt.s32.f32 %v1658
  %v1691 = vcvt.s32.f32 %v1659
  %v1692 = vcvt.s32.f32 %v1660
  %v1693 = vcvt.s32.f32 %v1661
  %v1694 = vcvt.s32.f32 %v1662
  %v1695 = vcvt.s32.f32 %v1663
  %v1696 = vcvt.s32.f32 %v1664
  %v1697 = vcvt.s32.f32 %v1665
  %v1698 = vcvt.s32.f32 %v1666
  %v1699 = vcvt.s32.f32 %v1667
  %v1700 = vcvt.s32.f32 %v1668
  %v1701 = vcvt.s32.f32 %v1669
  %v1702 = vcvt.s32.f32 %v1670
  %v1703 = vcvt.s32.f32 %v1671
  %v1704 = vcvt.s32.f32 %v1672
  %v1705 = vcvt.s32.f32 %v1673
  %v1706 = vcvt.s32.f32 %v1674
  %v1707 = vcvt.s32.f32 %v1675
  %v1708 = vcvt.s32.f32 %v1676
  %v1709 = vcvt.s32.f32 %v1677
  %1710 = vmatprep.subr.mxu0 0.0
  %1711 = vmatpush1.msra.mxu0 %v1023
  %1712 = vmatprep.subr.mxu0 0.0
  %1713 = vmatpush1.msra.mxu0 %v1022
  %1714 = vmatprep.subr.mxu0 0.0
  %1715 = vmatpush1.msra.mxu0 %v1021
  %1716 = vmatprep.subr.mxu0 0.0
  %1717 = vmatpush1.msra.mxu0 %v1020
  %1718 = vmatprep.subr.mxu0 0.0
  %1719 = vmatpush1.msra.mxu0 %v1019
  %1720 = vmatprep.subr.mxu0 0.0
  %1721 = vmatpush1.msra.mxu0 %v1018
  %1722 = vmatprep.subr.mxu0 0.0
  %1723 = vmatpush1.msra.mxu0 %v1017
  %1724 = vmatprep.subr.mxu0 0.0
  %1725 = vmatpush1.msra.mxu0 %v1016
  %1726 = vmatprep.subr.mxu0 0.0
  %1727 = vmatpush1.msra.mxu0 %v1015
  %1728 = vmatprep.subr.mxu0 0.0
  %1729 = vmatpush1.msra.mxu0 %v1014
  %1730 = vmatprep.subr.mxu0 0.0
  %1731 = vmatpush1.msra.mxu0 %v1013
  %1732 = vmatprep.subr.mxu0 0.0
  %1733 = vmatpush1.msra.mxu0 %v1012
  %1734 = vmatprep.subr.mxu0 0.0
  %1735 = vmatpush1.msra.mxu0 %v1011
  %1736 = vmatprep.subr.mxu0 0.0
  %1737 = vmatpush1.msra.mxu0 %v1010
  %1738 = vmatprep.subr.mxu0 0.0
  %1739 = vmatpush1.msra.mxu0 %v1009
  %1740 = vmatprep.subr.mxu0 0.0
  %1741 = vmatpush1.msra.mxu0 %v1008
  %1742 = vmatprep.subr.mxu0 0.0
  %1743 = vmatpush2.msra.mxu0 %v1039
  %1744 = vmatprep.subr.mxu0 0.0
  %1745 = vmatpush2.msra.mxu0 %v1038
  %1746 = vmatprep.subr.mxu0 0.0
  %1747 = vmatpush2.msra.mxu0 %v1037
  %1748 = vmatprep.subr.mxu0 0.0
  %1749 = vmatpush2.msra.mxu0 %v1036
  %1750 = vmatprep.subr.mxu0 0.0
  %1751 = vmatpush2.msra.mxu0 %v1035
  %1752 = vmatprep.subr.mxu0 0.0
  %1753 = vmatpush2.msra.mxu0 %v1034
  %1754 = vmatprep.subr.mxu0 0.0
  %1755 = vmatpush2.msra.mxu0 %v1033
  %1756 = vmatprep.subr.mxu0 0.0
  %1757 = vmatpush2.msra.mxu0 %v1032
  %1758 = vmatprep.subr.mxu0 0.0
  %1759 = vmatpush2.msra.mxu0 %v1031
  %1760 = vmatprep.subr.mxu0 0.0
  %1761 = vmatpush2.msra.mxu0 %v1030
  %1762 = vmatprep.subr.mxu0 0.0
  %1763 = vmatpush2.msra.mxu0 %v1029
  %1764 = vmatprep.subr.mxu0 0.0
  %1765 = vmatpush2.msra.mxu0 %v1028
  %1766 = vmatprep.subr.mxu0 0.0
  %1767 = vmatpush2.msra.mxu0 %v1027
  %1768 = vmatprep.subr.mxu0 0.0
  %1769 = vmatpush2.msra.mxu0 %v1026
  %1770 = vmatprep.subr.mxu0 0.0
  %1771 = vmatpush2.msra.mxu0 %v1025
  %1772 = vmatprep.subr.mxu0 0.0
  %1773 = vmatpush2.msra.mxu0 %v1024
  %1774 = vmatprep.mubr.f32.mxu0 %v1679
  %1775 = vmatmul.mubr.f32.gmra.mxu0 %v1678
  %v1776 = vpop.f32.mrf.mxu0
  %v1777 = vadd.f32 0.0, %v1776
  %v1778 = vpop.f32.mrf.mxu0
  %1779 = vmatprep.mubr.f32.mxu0 %v1681
  %1780 = vmatmul.mubr.f32.gmra.mxu0 %v1680
  %v1781 = vpop.f32.mrf.mxu0
  %v1782 = vadd.f32 0.0, %v1781
  %v1783 = vpop.f32.mrf.mxu0
  %1784 = vmatprep.mubr.f32.mxu0 %v1683
  %1785 = vmatmul.mubr.f32.gmra.mxu0 %v1682
  %v1786 = vpop.f32.mrf.mxu0
  %v1787 = vadd.f32 0.0, %v1786
  %v1788 = vpop.f32.mrf.mxu0
  %1789 = vmatprep.mubr.f32.mxu0 %v1685
  %1790 = vmatmul.mubr.f32.gmra.mxu0 %v1684
  %v1791 = vpop.f32.mrf.mxu0
  %v1792 = vadd.f32 0.0, %v1791
  %v1793 = vpop.f32.mrf.mxu0
  %1794 = vmatprep.mubr.f32.mxu0 %v1687
  %1795 = vmatmul.mubr.f32.gmra.mxu0 %v1686
  %v1796 = vpop.f32.mrf.mxu0
  %v1797 = vadd.f32 0.0, %v1796
  %v1798 = vpop.f32.mrf.mxu0
  %1799 = vmatprep.mubr.f32.mxu0 %v1689
  %1800 = vmatmul.mubr.f32.gmra.mxu0 %v1688
  %v1801 = vpop.f32.mrf.mxu0
  %v1802 = vadd.f32 0.0, %v1801
  %v1803 = vpop.f32.mrf.mxu0
  %1804 = vmatprep.mubr.f32.mxu0 %v1691
  %1805 = vmatmul.mubr.f32.gmra.mxu0 %v1690
  %v1806 = vpop.f32.mrf.mxu0
  %v1807 = vadd.f32 0.0, %v1806
  %v1808 = vpop.f32.mrf.mxu0
  %1809 = vmatprep.mubr.f32.mxu0 %v1693
  %1810 = vmatmul.mubr.f32.gmra.mxu0 %v1692
  %v1811 = vpop.f32.mrf.mxu0
  %v1812 = vadd.f32 0.0, %v1811
  %v1813 = vpop.f32.mrf.mxu0
  %1814 = vmatprep.mubr.f32.mxu0 %v1695
  %1815 = vmatmul.mubr.f32.gmra.mxu0 %v1694
  %v1816 = vpop.f32.mrf.mxu0
  %v1817 = vadd.f32 0.0, %v1816
  %v1818 = vpop.f32.mrf.mxu0
  %1819 = vmatprep.mubr.f32.mxu0 %v1697
  %1820 = vmatmul.mubr.f32.gmra.mxu0 %v1696
  %v1821 = vpop.f32.mrf.mxu0
  %v1822 = vadd.f32 0.0, %v1821
  %v1823 = vpop.f32.mrf.mxu0
  %1824 = vmatprep.mubr.f32.mxu0 %v1699
  %1825 = vmatmul.mubr.f32.gmra.mxu0 %v1698
  %v1826 = vpop.f32.mrf.mxu0
  %v1827 = vadd.f32 0.0, %v1826
  %v1828 = vpop.f32.mrf.mxu0
  %1829 = vmatprep.mubr.f32.mxu0 %v1701
  %1830 = vmatmul.mubr.f32.gmra.mxu0 %v1700
  %v1831 = vpop.f32.mrf.mxu0
  %v1832 = vadd.f32 0.0, %v1831
  %v1833 = vpop.f32.mrf.mxu0
  %1834 = vmatprep.mubr.f32.mxu0 %v1703
  %1835 = vmatmul.mubr.f32.gmra.mxu0 %v1702
  %v1836 = vpop.f32.mrf.mxu0
  %v1837 = vadd.f32 0.0, %v1836
  %v1838 = vpop.f32.mrf.mxu0
  %1839 = vmatprep.mubr.f32.mxu0 %v1705
  %1840 = vmatmul.mubr.f32.gmra.mxu0 %v1704
  %v1841 = vpop.f32.mrf.mxu0
  %v1842 = vadd.f32 0.0, %v1841
  %v1843 = vpop.f32.mrf.mxu0
  %1844 = vmatprep.mubr.f32.mxu0 %v1707
  %1845 = vmatmul.mubr.f32.gmra.mxu0 %v1706
  %v1846 = vpop.f32.mrf.mxu0
  %v1847 = vadd.f32 0.0, %v1846
  %v1848 = vpop.f32.mrf.mxu0
  %1849 = vmatprep.mubr.f32.mxu0 %v1709
  %1850 = vmatmul.mubr.f32.gmra.mxu0 %v1708
  %v1851 = vpop.f32.mrf.mxu0
  %v1852 = vadd.f32 0.0, %v1851
  %v1853 = vpop.f32.mrf.mxu0
  %1854 = vdwg.mxu0
  %v1855 = vlaneseq
  %v1856 = vshrl.u32 %v1855, 7
  %v1857 = vsub.s32 %v33, %v1856
  %v1858 = vrot.slane %v1373, %v1857
  %v1859 = vlaneseq
  %v1860 = vshrl.u32 %v1859, 7
  %v1861 = vsub.s32 %v885, %v1860
  %v1862 = vrot.slane %v1389, %v1861
  %v1863 = vsel %vm890, %v1862, %v1858
  %v1864 = vlaneseq
  %v1865 = vshrl.u32 %v1864, 7
  %v1866 = vsub.s32 %v892, %v1865
  %v1867 = vrot.slane %v1405, %v1866
  %v1868 = vsel %vm897, %v1867, %v1863
  %v1869 = vlaneseq
  %v1870 = vshrl.u32 %v1869, 7
  %v1871 = vsub.s32 %v899, %v1870
  %v1872 = vrot.slane %v1421, %v1871
  %v1873 = vsel %vm904, %v1872, %v1868
  %v1874 = vlaneseq
  %v1875 = vshrl.u32 %v1874, 7
  %v1876 = vsub.s32 %v906, %v1875
  %v1877 = vrot.slane %v1437, %v1876
  %v1878 = vsel %vm911, %v1877, %v1873
  %v1879 = vlaneseq
  %v1880 = vshrl.u32 %v1879, 7
  %v1881 = vsub.s32 %v913, %v1880
  %v1882 = vrot.slane %v1453, %v1881
  %v1883 = vsel %vm918, %v1882, %v1878
  %v1884 = vlaneseq
  %v1885 = vshrl.u32 %v1884, 7
  %v1886 = vsub.s32 %v920, %v1885
  %v1887 = vrot.slane %v1469, %v1886
  %v1888 = vsel %vm925, %v1887, %v1883
  %v1889 = vlaneseq
  %v1890 = vshrl.u32 %v1889, 7
  %v1891 = vsub.s32 %v927, %v1890
  %v1892 = vrot.slane %v1485, %v1891
  %v1893 = vsel %vm932, %v1892, %v1888
  %v1894 = vlaneseq
  %v1895 = vshrl.u32 %v1894, 7
  %v1896 = vsub.s32 %v934, %v1895
  %v1897 = vrot.slane %v1501, %v1896
  %v1898 = vsel %vm939, %v1897, %v1893
  %v1899 = vlaneseq
  %v1900 = vshrl.u32 %v1899, 7
  %v1901 = vsub.s32 %v941, %v1900
  %v1902 = vrot.slane %v1517, %v1901
  %v1903 = vsel %vm946, %v1902, %v1898
  %v1904 = vlaneseq
  %v1905 = vshrl.u32 %v1904, 7
  %v1906 = vsub.s32 %v948, %v1905
  %v1907 = vrot.slane %v1533, %v1906
  %v1908 = vsel %vm953, %v1907, %v1903
  %v1909 = vlaneseq
  %v1910 = vshrl.u32 %v1909, 7
  %v1911 = vsub.s32 %v955, %v1910
  %v1912 = vrot.slane %v1549, %v1911
  %v1913 = vsel %vm960, %v1912, %v1908
  %v1914 = vlaneseq
  %v1915 = vshrl.u32 %v1914, 7
  %v1916 = vsub.s32 %v962, %v1915
  %v1917 = vrot.slane %v1565, %v1916
  %v1918 = vsel %vm967, %v1917, %v1913
  %v1919 = vlaneseq
  %v1920 = vshrl.u32 %v1919, 7
  %v1921 = vsub.s32 %v969, %v1920
  %v1922 = vrot.slane %v1581, %v1921
  %v1923 = vsel %vm974, %v1922, %v1918
  %v1924 = vlaneseq
  %v1925 = vshrl.u32 %v1924, 7
  %v1926 = vsub.s32 %v976, %v1925
  %v1927 = vrot.slane %v1597, %v1926
  %v1928 = vsel %vm981, %v1927, %v1923
  %v1929 = vlaneseq
  %v1930 = vshrl.u32 %v1929, 7
  %v1931 = vsub.s32 %v983, %v1930
  %v1932 = vrot.slane %v1613, %v1931
  %v1933 = vsel %vm988, %v1932, %v1928
  %s1934 = scalar_lea.vmem %s4, 1
  %1935 = vst [vmem:[%s1934] sm:$0x1] %v1933
  %v1936 = vsub.f32 %v991, %v1777
  %v1937 = vsub.f32 %v992, %v1782
  %v1938 = vsub.f32 %v993, %v1787
  %v1939 = vsub.f32 %v994, %v1792
  %v1940 = vsub.f32 %v995, %v1797
  %v1941 = vsub.f32 %v996, %v1802
  %v1942 = vsub.f32 %v997, %v1807
  %v1943 = vsub.f32 %v998, %v1812
  %v1944 = vsub.f32 %v999, %v1817
  %v1945 = vsub.f32 %v1000, %v1822
  %v1946 = vsub.f32 %v1001, %v1827
  %v1947 = vsub.f32 %v1002, %v1832
  %v1948 = vsub.f32 %v1003, %v1837
  %v1949 = vsub.f32 %v1004, %v1842
  %v1950 = vsub.f32 %v1005, %v1847
  %v1951 = vsub.f32 %v1006, %v1852
  %s1952 = scalar_lea.vmem %s1, 512
  %v1953 = vld [vmem:[%s1952] sm:$0xff]
  %v1954 = vld [vmem:[%s1952 + $0x8] sm:$0xff]
  %v1955 = vld [vmem:[%s1952 + $0x10] sm:$0xff]
  %v1956 = vld [vmem:[%s1952 + $0x18] sm:$0xff]
  %v1957 = vld [vmem:[%s1952 + $0x20] sm:$0xff]
  %v1958 = vld [vmem:[%s1952 + $0x28] sm:$0xff]
  %v1959 = vld [vmem:[%s1952 + $0x30] sm:$0xff]
  %v1960 = vld [vmem:[%s1952 + $0x38] sm:$0xff]
  %v1961 = vld [vmem:[%s1952 + $0x40] sm:$0xff]
  %v1962 = vld [vmem:[%s1952 + $0x48] sm:$0xff]
  %v1963 = vld [vmem:[%s1952 + $0x50] sm:$0xff]
  %v1964 = vld [vmem:[%s1952 + $0x58] sm:$0xff]
  %v1965 = vld [vmem:[%s1952 + $0x60] sm:$0xff]
  %v1966 = vld [vmem:[%s1952 + $0x68] sm:$0xff]
  %v1967 = vld [vmem:[%s1952 + $0x70] sm:$0xff]
  %v1968 = vld [vmem:[%s1952 + $0x78] sm:$0xff]
  %v1969 = vld [vmem:[%s1952 + $0x80] sm:$0xff]
  %v1970 = vld [vmem:[%s1952 + $0x88] sm:$0xff]
  %v1971 = vld [vmem:[%s1952 + $0x90] sm:$0xff]
  %v1972 = vld [vmem:[%s1952 + $0x98] sm:$0xff]
  %v1973 = vld [vmem:[%s1952 + $0xa0] sm:$0xff]
  %v1974 = vld [vmem:[%s1952 + $0xa8] sm:$0xff]
  %v1975 = vld [vmem:[%s1952 + $0xb0] sm:$0xff]
  %v1976 = vld [vmem:[%s1952 + $0xb8] sm:$0xff]
  %v1977 = vld [vmem:[%s1952 + $0xc0] sm:$0xff]
  %v1978 = vld [vmem:[%s1952 + $0xc8] sm:$0xff]
  %v1979 = vld [vmem:[%s1952 + $0xd0] sm:$0xff]
  %v1980 = vld [vmem:[%s1952 + $0xd8] sm:$0xff]
  %v1981 = vld [vmem:[%s1952 + $0xe0] sm:$0xff]
  %v1982 = vld [vmem:[%s1952 + $0xe8] sm:$0xff]
  %v1983 = vld [vmem:[%s1952 + $0xf0] sm:$0xff]
  %v1984 = vld [vmem:[%s1952 + $0xf8] sm:$0xff]
  %1985 = vmatprep.subr.mxu0 0.0
  %1986 = vmatpush1.xpose.msra.mxu0 %v1968
  %1987 = vmatprep.subr.mxu0 0.0
  %1988 = vmatpush1.xpose.msra.mxu0 %v1967
  %1989 = vmatprep.subr.mxu0 0.0
  %1990 = vmatpush1.xpose.msra.mxu0 %v1966
  %1991 = vmatprep.subr.mxu0 0.0
  %1992 = vmatpush1.xpose.msra.mxu0 %v1965
  %1993 = vmatprep.subr.mxu0 0.0
  %1994 = vmatpush1.xpose.msra.mxu0 %v1964
  %1995 = vmatprep.subr.mxu0 0.0
  %1996 = vmatpush1.xpose.msra.mxu0 %v1963
  %1997 = vmatprep.subr.mxu0 0.0
  %1998 = vmatpush1.xpose.msra.mxu0 %v1962
  %1999 = vmatprep.subr.mxu0 0.0
  %2000 = vmatpush1.xpose.msra.mxu0 %v1961
  %2001 = vmatprep.subr.mxu0 0.0
  %2002 = vmatpush1.xpose.msra.mxu0 %v1960
  %2003 = vmatprep.subr.mxu0 0.0
  %2004 = vmatpush1.xpose.msra.mxu0 %v1959
  %2005 = vmatprep.subr.mxu0 0.0
  %2006 = vmatpush1.xpose.msra.mxu0 %v1958
  %2007 = vmatprep.subr.mxu0 0.0
  %2008 = vmatpush1.xpose.msra.mxu0 %v1957
  %2009 = vmatprep.subr.mxu0 0.0
  %2010 = vmatpush1.xpose.msra.mxu0 %v1956
  %2011 = vmatprep.subr.mxu0 0.0
  %2012 = vmatpush1.xpose.msra.mxu0 %v1955
  %2013 = vmatprep.subr.mxu0 0.0
  %2014 = vmatpush1.xpose.msra.mxu0 %v1954
  %2015 = vmatprep.subr.mxu0 0.0
  %2016 = vmatpush1.xpose.msra.mxu0 %v1953
  %2017 = vmatprep.subr.mxu0 0.0
  %2018 = vmatpush2.xpose.msra.mxu0 %v1984
  %2019 = vmatprep.subr.mxu0 0.0
  %2020 = vmatpush2.xpose.msra.mxu0 %v1983
  %2021 = vmatprep.subr.mxu0 0.0
  %2022 = vmatpush2.xpose.msra.mxu0 %v1982
  %2023 = vmatprep.subr.mxu0 0.0
  %2024 = vmatpush2.xpose.msra.mxu0 %v1981
  %2025 = vmatprep.subr.mxu0 0.0
  %2026 = vmatpush2.xpose.msra.mxu0 %v1980
  %2027 = vmatprep.subr.mxu0 0.0
  %2028 = vmatpush2.xpose.msra.mxu0 %v1979
  %2029 = vmatprep.subr.mxu0 0.0
  %2030 = vmatpush2.xpose.msra.mxu0 %v1978
  %2031 = vmatprep.subr.mxu0 0.0
  %2032 = vmatpush2.xpose.msra.mxu0 %v1977
  %2033 = vmatprep.subr.mxu0 0.0
  %2034 = vmatpush2.xpose.msra.mxu0 %v1976
  %2035 = vmatprep.subr.mxu0 0.0
  %2036 = vmatpush2.xpose.msra.mxu0 %v1975
  %2037 = vmatprep.subr.mxu0 0.0
  %2038 = vmatpush2.xpose.msra.mxu0 %v1974
  %2039 = vmatprep.subr.mxu0 0.0
  %2040 = vmatpush2.xpose.msra.mxu0 %v1973
  %2041 = vmatprep.subr.mxu0 0.0
  %2042 = vmatpush2.xpose.msra.mxu0 %v1972
  %2043 = vmatprep.subr.mxu0 0.0
  %2044 = vmatpush2.xpose.msra.mxu0 %v1971
  %2045 = vmatprep.subr.mxu0 0.0
  %2046 = vmatpush2.xpose.msra.mxu0 %v1970
  %2047 = vmatprep.subr.mxu0 0.0
  %2048 = vmatpush2.xpose.msra.mxu0 %v1969
  %2049 = vmatprep.mubr.f32.mxu0 0.0
  %2050 = vmatmul.mubr.f32.gmra.mxu0 %v1936
  %v2051 = vpop.f32.mrf.mxu0
  %v2052 = vadd.f32 0.0, %v2051
  %v2053 = vpop.f32.mrf.mxu0
  %v2054 = vadd.f32 0.0, %v2053
  %2055 = vmatprep.mubr.f32.mxu0 0.0
  %2056 = vmatmul.mubr.f32.gmra.mxu0 %v1937
  %v2057 = vpop.f32.mrf.mxu0
  %v2058 = vadd.f32 0.0, %v2057
  %v2059 = vpop.f32.mrf.mxu0
  %v2060 = vadd.f32 0.0, %v2059
  %2061 = vmatprep.mubr.f32.mxu0 0.0
  %2062 = vmatmul.mubr.f32.gmra.mxu0 %v1938
  %v2063 = vpop.f32.mrf.mxu0
  %v2064 = vadd.f32 0.0, %v2063
  %v2065 = vpop.f32.mrf.mxu0
  %v2066 = vadd.f32 0.0, %v2065
  %2067 = vmatprep.mubr.f32.mxu0 0.0
  %2068 = vmatmul.mubr.f32.gmra.mxu0 %v1939
  %v2069 = vpop.f32.mrf.mxu0
  %v2070 = vadd.f32 0.0, %v2069
  %v2071 = vpop.f32.mrf.mxu0
  %v2072 = vadd.f32 0.0, %v2071
  %2073 = vmatprep.mubr.f32.mxu0 0.0
  %2074 = vmatmul.mubr.f32.gmra.mxu0 %v1940
  %v2075 = vpop.f32.mrf.mxu0
  %v2076 = vadd.f32 0.0, %v2075
  %v2077 = vpop.f32.mrf.mxu0
  %v2078 = vadd.f32 0.0, %v2077
  %2079 = vmatprep.mubr.f32.mxu0 0.0
  %2080 = vmatmul.mubr.f32.gmra.mxu0 %v1941
  %v2081 = vpop.f32.mrf.mxu0
  %v2082 = vadd.f32 0.0, %v2081
  %v2083 = vpop.f32.mrf.mxu0
  %v2084 = vadd.f32 0.0, %v2083
  %2085 = vmatprep.mubr.f32.mxu0 0.0
  %2086 = vmatmul.mubr.f32.gmra.mxu0 %v1942
  %v2087 = vpop.f32.mrf.mxu0
  %v2088 = vadd.f32 0.0, %v2087
  %v2089 = vpop.f32.mrf.mxu0
  %v2090 = vadd.f32 0.0, %v2089
  %2091 = vmatprep.mubr.f32.mxu0 0.0
  %2092 = vmatmul.mubr.f32.gmra.mxu0 %v1943
  %v2093 = vpop.f32.mrf.mxu0
  %v2094 = vadd.f32 0.0, %v2093
  %v2095 = vpop.f32.mrf.mxu0
  %v2096 = vadd.f32 0.0, %v2095
  %2097 = vmatprep.mubr.f32.mxu0 0.0
  %2098 = vmatmul.mubr.f32.gmra.mxu0 %v1944
  %v2099 = vpop.f32.mrf.mxu0
  %v2100 = vadd.f32 0.0, %v2099
  %v2101 = vpop.f32.mrf.mxu0
  %v2102 = vadd.f32 0.0, %v2101
  %2103 = vmatprep.mubr.f32.mxu0 0.0
  %2104 = vmatmul.mubr.f32.gmra.mxu0 %v1945
  %v2105 = vpop.f32.mrf.mxu0
  %v2106 = vadd.f32 0.0, %v2105
  %v2107 = vpop.f32.mrf.mxu0
  %v2108 = vadd.f32 0.0, %v2107
  %2109 = vmatprep.mubr.f32.mxu0 0.0
  %2110 = vmatmul.mubr.f32.gmra.mxu0 %v1946
  %v2111 = vpop.f32.mrf.mxu0
  %v2112 = vadd.f32 0.0, %v2111
  %v2113 = vpop.f32.mrf.mxu0
  %v2114 = vadd.f32 0.0, %v2113
  %2115 = vmatprep.mubr.f32.mxu0 0.0
  %2116 = vmatmul.mubr.f32.gmra.mxu0 %v1947
  %v2117 = vpop.f32.mrf.mxu0
  %v2118 = vadd.f32 0.0, %v2117
  %v2119 = vpop.f32.mrf.mxu0
  %v2120 = vadd.f32 0.0, %v2119
  %2121 = vmatprep.mubr.f32.mxu0 0.0
  %2122 = vmatmul.mubr.f32.gmra.mxu0 %v1948
  %v2123 = vpop.f32.mrf.mxu0
  %v2124 = vadd.f32 0.0, %v2123
  %v2125 = vpop.f32.mrf.mxu0
  %v2126 = vadd.f32 0.0, %v2125
  %2127 = vmatprep.mubr.f32.mxu0 0.0
  %2128 = vmatmul.mubr.f32.gmra.mxu0 %v1949
  %v2129 = vpop.f32.mrf.mxu0
  %v2130 = vadd.f32 0.0, %v2129
  %v2131 = vpop.f32.mrf.mxu0
  %v2132 = vadd.f32 0.0, %v2131
  %2133 = vmatprep.mubr.f32.mxu0 0.0
  %2134 = vmatmul.mubr.f32.gmra.mxu0 %v1950
  %v2135 = vpop.f32.mrf.mxu0
  %v2136 = vadd.f32 0.0, %v2135
  %v2137 = vpop.f32.mrf.mxu0
  %v2138 = vadd.f32 0.0, %v2137
  %2139 = vmatprep.mubr.f32.mxu0 0.0
  %2140 = vmatmul.mubr.f32.gmra.mxu0 %v1951
  %v2141 = vpop.f32.mrf.mxu0
  %v2142 = vadd.f32 0.0, %v2141
  %v2143 = vpop.f32.mrf.mxu0
  %v2144 = vadd.f32 0.0, %v2143
  %2145 = vdwg.mxu0
  %s2146 = scalar_lea.vmem %s2, 4
  %v2147 = vld [vmem:[%s2146] sm:$0x3]
  %v2149 = vlaneseq
  %v2150 = vshrl.u32 %v2149, 7
  %v2151 = vsub.s32 0, %v2150
  %v2152 = vrot.slane %v2147, %v2151
  %v2153 = vlaneseq
  %v2154 = vshrl.u32 %v2153, 7
  %v2155 = vsub.s32 1, %v2154
  %v2156 = vrot.slane %v2147, %v2155
  %v2159 = vsub.f32 %v2052, %v2152
  %v2160 = vsub.f32 %v2054, %v2156
  %v2161 = vsub.f32 %v2058, %v2152
  %v2162 = vsub.f32 %v2060, %v2156
  %v2163 = vsub.f32 %v2064, %v2152
  %v2164 = vsub.f32 %v2066, %v2156
  %v2165 = vsub.f32 %v2070, %v2152
  %v2166 = vsub.f32 %v2072, %v2156
  %v2167 = vsub.f32 %v2076, %v2152
  %v2168 = vsub.f32 %v2078, %v2156
  %v2169 = vsub.f32 %v2082, %v2152
  %v2170 = vsub.f32 %v2084, %v2156
  %v2171 = vsub.f32 %v2088, %v2152
  %v2172 = vsub.f32 %v2090, %v2156
  %v2173 = vsub.f32 %v2094, %v2152
  %v2174 = vsub.f32 %v2096, %v2156
  %v2175 = vsub.f32 %v2100, %v2152
  %v2176 = vsub.f32 %v2102, %v2156
  %v2177 = vsub.f32 %v2106, %v2152
  %v2178 = vsub.f32 %v2108, %v2156
  %v2179 = vsub.f32 %v2112, %v2152
  %v2180 = vsub.f32 %v2114, %v2156
  %v2181 = vsub.f32 %v2118, %v2152
  %v2182 = vsub.f32 %v2120, %v2156
  %v2183 = vsub.f32 %v2124, %v2152
  %v2184 = vsub.f32 %v2126, %v2156
  %v2185 = vsub.f32 %v2130, %v2152
  %v2186 = vsub.f32 %v2132, %v2156
  %v2187 = vsub.f32 %v2136, %v2152
  %v2188 = vsub.f32 %v2138, %v2156
  %v2189 = vsub.f32 %v2142, %v2152
  %v2190 = vsub.f32 %v2144, %v2156
  %v2191 = vmax.f32 %v2159, %v2160
  %2192 = vmax.xlane.f32.xlu0 %v2191
  %v2193 = vpop.xlane.xlu0 %2192
  %v2194 = vmax.f32 %v2161, %v2162
  %2195 = vmax.xlane.f32.xlu0 %v2194
  %v2196 = vpop.xlane.xlu0 %2195
  %v2197 = vmax.f32 %v2163, %v2164
  %2198 = vmax.xlane.f32.xlu0 %v2197
  %v2199 = vpop.xlane.xlu0 %2198
  %v2200 = vmax.f32 %v2165, %v2166
  %2201 = vmax.xlane.f32.xlu0 %v2200
  %v2202 = vpop.xlane.xlu0 %2201
  %v2203 = vmax.f32 %v2167, %v2168
  %2204 = vmax.xlane.f32.xlu0 %v2203
  %v2205 = vpop.xlane.xlu0 %2204
  %v2206 = vmax.f32 %v2169, %v2170
  %2207 = vmax.xlane.f32.xlu0 %v2206
  %v2208 = vpop.xlane.xlu0 %2207
  %v2209 = vmax.f32 %v2171, %v2172
  %2210 = vmax.xlane.f32.xlu0 %v2209
  %v2211 = vpop.xlane.xlu0 %2210
  %v2212 = vmax.f32 %v2173, %v2174
  %2213 = vmax.xlane.f32.xlu0 %v2212
  %v2214 = vpop.xlane.xlu0 %2213
  %v2215 = vmax.f32 %v2175, %v2176
  %2216 = vmax.xlane.f32.xlu0 %v2215
  %v2217 = vpop.xlane.xlu0 %2216
  %v2218 = vmax.f32 %v2177, %v2178
  %2219 = vmax.xlane.f32.xlu0 %v2218
  %v2220 = vpop.xlane.xlu0 %2219
  %v2221 = vmax.f32 %v2179, %v2180
  %2222 = vmax.xlane.f32.xlu0 %v2221
  %v2223 = vpop.xlane.xlu0 %2222
  %v2224 = vmax.f32 %v2181, %v2182
  %2225 = vmax.xlane.f32.xlu0 %v2224
  %v2226 = vpop.xlane.xlu0 %2225
  %v2227 = vmax.f32 %v2183, %v2184
  %2228 = vmax.xlane.f32.xlu0 %v2227
  %v2229 = vpop.xlane.xlu0 %2228
  %v2230 = vmax.f32 %v2185, %v2186
  %2231 = vmax.xlane.f32.xlu0 %v2230
  %v2232 = vpop.xlane.xlu0 %2231
  %v2233 = vmax.f32 %v2187, %v2188
  %2234 = vmax.xlane.f32.xlu0 %v2233
  %v2235 = vpop.xlane.xlu0 %2234
  %v2236 = vmax.f32 %v2189, %v2190
  %2237 = vmax.xlane.f32.xlu0 %v2236
  %v2238 = vpop.xlane.xlu0 %2237
  %vm2239 = vcmp.eq.f32.partialorder %v2159, %v2193
  %vm2240 = vcmp.eq.f32.partialorder %v2160, %v2193
  %vm2241 = vcmp.eq.f32.partialorder %v2161, %v2196
  %vm2242 = vcmp.eq.f32.partialorder %v2162, %v2196
  %vm2243 = vcmp.eq.f32.partialorder %v2163, %v2199
  %vm2244 = vcmp.eq.f32.partialorder %v2164, %v2199
  %vm2245 = vcmp.eq.f32.partialorder %v2165, %v2202
  %vm2246 = vcmp.eq.f32.partialorder %v2166, %v2202
  %vm2247 = vcmp.eq.f32.partialorder %v2167, %v2205
  %vm2248 = vcmp.eq.f32.partialorder %v2168, %v2205
  %vm2249 = vcmp.eq.f32.partialorder %v2169, %v2208
  %vm2250 = vcmp.eq.f32.partialorder %v2170, %v2208
  %vm2251 = vcmp.eq.f32.partialorder %v2171, %v2211
  %vm2252 = vcmp.eq.f32.partialorder %v2172, %v2211
  %vm2253 = vcmp.eq.f32.partialorder %v2173, %v2214
  %vm2254 = vcmp.eq.f32.partialorder %v2174, %v2214
  %vm2255 = vcmp.eq.f32.partialorder %v2175, %v2217
  %vm2256 = vcmp.eq.f32.partialorder %v2176, %v2217
  %vm2257 = vcmp.eq.f32.partialorder %v2177, %v2220
  %vm2258 = vcmp.eq.f32.partialorder %v2178, %v2220
  %vm2259 = vcmp.eq.f32.partialorder %v2179, %v2223
  %vm2260 = vcmp.eq.f32.partialorder %v2180, %v2223
  %vm2261 = vcmp.eq.f32.partialorder %v2181, %v2226
  %vm2262 = vcmp.eq.f32.partialorder %v2182, %v2226
  %vm2263 = vcmp.eq.f32.partialorder %v2183, %v2229
  %vm2264 = vcmp.eq.f32.partialorder %v2184, %v2229
  %vm2265 = vcmp.eq.f32.partialorder %v2185, %v2232
  %vm2266 = vcmp.eq.f32.partialorder %v2186, %v2232
  %vm2267 = vcmp.eq.f32.partialorder %v2187, %v2235
  %vm2268 = vcmp.eq.f32.partialorder %v2188, %v2235
  %vm2269 = vcmp.eq.f32.partialorder %v2189, %v2238
  %vm2270 = vcmp.eq.f32.partialorder %v2190, %v2238
  %v2271 = vsel %vm2239, %v33, 256
  %v2272 = vsel %vm2240, %v34, 256
  %v2273 = vsel %vm2241, %v33, 256
  %v2274 = vsel %vm2242, %v34, 256
  %v2275 = vsel %vm2243, %v33, 256
  %v2276 = vsel %vm2244, %v34, 256
  %v2277 = vsel %vm2245, %v33, 256
  %v2278 = vsel %vm2246, %v34, 256
  %v2279 = vsel %vm2247, %v33, 256
  %v2280 = vsel %vm2248, %v34, 256
  %v2281 = vsel %vm2249, %v33, 256
  %v2282 = vsel %vm2250, %v34, 256
  %v2283 = vsel %vm2251, %v33, 256
  %v2284 = vsel %vm2252, %v34, 256
  %v2285 = vsel %vm2253, %v33, 256
  %v2286 = vsel %vm2254, %v34, 256
  %v2287 = vsel %vm2255, %v33, 256
  %v2288 = vsel %vm2256, %v34, 256
  %v2289 = vsel %vm2257, %v33, 256
  %v2290 = vsel %vm2258, %v34, 256
  %v2291 = vsel %vm2259, %v33, 256
  %v2292 = vsel %vm2260, %v34, 256
  %v2293 = vsel %vm2261, %v33, 256
  %v2294 = vsel %vm2262, %v34, 256
  %v2295 = vsel %vm2263, %v33, 256
  %v2296 = vsel %vm2264, %v34, 256
  %v2297 = vsel %vm2265, %v33, 256
  %v2298 = vsel %vm2266, %v34, 256
  %v2299 = vsel %vm2267, %v33, 256
  %v2300 = vsel %vm2268, %v34, 256
  %v2301 = vsel %vm2269, %v33, 256
  %v2302 = vsel %vm2270, %v34, 256
  %vm2303 = vcmp.lt.s32.totalorder %v2271, %v2272
  %v2304 = vsel %vm2303, %v2271, %v2272
  %v2305 = vand.u32 %v2304, 65535
  %v2306 = vshra.s32 %v2304, 16
  %v2307 = vcvt.s32.f32 %v2305
  %v2308 = vcvt.s32.f32 %v2306
  %2309 = vmin.xlane.f32.xlu0 %v2308
  %v2310 = vpop.xlane.xlu0 %2309
  %vm2311 = vcmp.eq.f32.partialorder %v2308, %v2310
  %v2312 = vsel %vm2311, %v2307, inf
  %2313 = vmin.xlane.f32.xlu0 %v2312
  %v2314 = vpop.xlane.xlu0 %2313
  %v2315 = vcvt.f32.s32 %v2314
  %v2316 = vcvt.f32.s32 %v2310
  %v2317 = vshll.u32 %v2316, 16
  %v2318 = vadd.s32 %v2317, %v2315
  %vm2319 = vcmp.lt.s32.totalorder %v2273, %v2274
  %v2320 = vsel %vm2319, %v2273, %v2274
  %v2321 = vand.u32 %v2320, 65535
  %v2322 = vshra.s32 %v2320, 16
  %v2323 = vcvt.s32.f32 %v2321
  %v2324 = vcvt.s32.f32 %v2322
  %2325 = vmin.xlane.f32.xlu0 %v2324
  %v2326 = vpop.xlane.xlu0 %2325
  %vm2327 = vcmp.eq.f32.partialorder %v2324, %v2326
  %v2328 = vsel %vm2327, %v2323, inf
  %2329 = vmin.xlane.f32.xlu0 %v2328
  %v2330 = vpop.xlane.xlu0 %2329
  %v2331 = vcvt.f32.s32 %v2330
  %v2332 = vcvt.f32.s32 %v2326
  %v2333 = vshll.u32 %v2332, 16
  %v2334 = vadd.s32 %v2333, %v2331
  %vm2335 = vcmp.lt.s32.totalorder %v2275, %v2276
  %v2336 = vsel %vm2335, %v2275, %v2276
  %v2337 = vand.u32 %v2336, 65535
  %v2338 = vshra.s32 %v2336, 16
  %v2339 = vcvt.s32.f32 %v2337
  %v2340 = vcvt.s32.f32 %v2338
  %2341 = vmin.xlane.f32.xlu0 %v2340
  %v2342 = vpop.xlane.xlu0 %2341
  %vm2343 = vcmp.eq.f32.partialorder %v2340, %v2342
  %v2344 = vsel %vm2343, %v2339, inf
  %2345 = vmin.xlane.f32.xlu0 %v2344
  %v2346 = vpop.xlane.xlu0 %2345
  %v2347 = vcvt.f32.s32 %v2346
  %v2348 = vcvt.f32.s32 %v2342
  %v2349 = vshll.u32 %v2348, 16
  %v2350 = vadd.s32 %v2349, %v2347
  %vm2351 = vcmp.lt.s32.totalorder %v2277, %v2278
  %v2352 = vsel %vm2351, %v2277, %v2278
  %v2353 = vand.u32 %v2352, 65535
  %v2354 = vshra.s32 %v2352, 16
  %v2355 = vcvt.s32.f32 %v2353
  %v2356 = vcvt.s32.f32 %v2354
  %2357 = vmin.xlane.f32.xlu0 %v2356
  %v2358 = vpop.xlane.xlu0 %2357
  %vm2359 = vcmp.eq.f32.partialorder %v2356, %v2358
  %v2360 = vsel %vm2359, %v2355, inf
  %2361 = vmin.xlane.f32.xlu0 %v2360
  %v2362 = vpop.xlane.xlu0 %2361
  %v2363 = vcvt.f32.s32 %v2362
  %v2364 = vcvt.f32.s32 %v2358
  %v2365 = vshll.u32 %v2364, 16
  %v2366 = vadd.s32 %v2365, %v2363
  %vm2367 = vcmp.lt.s32.totalorder %v2279, %v2280
  %v2368 = vsel %vm2367, %v2279, %v2280
  %v2369 = vand.u32 %v2368, 65535
  %v2370 = vshra.s32 %v2368, 16
  %v2371 = vcvt.s32.f32 %v2369
  %v2372 = vcvt.s32.f32 %v2370
  %2373 = vmin.xlane.f32.xlu0 %v2372
  %v2374 = vpop.xlane.xlu0 %2373
  %vm2375 = vcmp.eq.f32.partialorder %v2372, %v2374
  %v2376 = vsel %vm2375, %v2371, inf
  %2377 = vmin.xlane.f32.xlu0 %v2376
  %v2378 = vpop.xlane.xlu0 %2377
  %v2379 = vcvt.f32.s32 %v2378
  %v2380 = vcvt.f32.s32 %v2374
  %v2381 = vshll.u32 %v2380, 16
  %v2382 = vadd.s32 %v2381, %v2379
  %vm2383 = vcmp.lt.s32.totalorder %v2281, %v2282
  %v2384 = vsel %vm2383, %v2281, %v2282
  %v2385 = vand.u32 %v2384, 65535
  %v2386 = vshra.s32 %v2384, 16
  %v2387 = vcvt.s32.f32 %v2385
  %v2388 = vcvt.s32.f32 %v2386
  %2389 = vmin.xlane.f32.xlu0 %v2388
  %v2390 = vpop.xlane.xlu0 %2389
  %vm2391 = vcmp.eq.f32.partialorder %v2388, %v2390
  %v2392 = vsel %vm2391, %v2387, inf
  %2393 = vmin.xlane.f32.xlu0 %v2392
  %v2394 = vpop.xlane.xlu0 %2393
  %v2395 = vcvt.f32.s32 %v2394
  %v2396 = vcvt.f32.s32 %v2390
  %v2397 = vshll.u32 %v2396, 16
  %v2398 = vadd.s32 %v2397, %v2395
  %vm2399 = vcmp.lt.s32.totalorder %v2283, %v2284
  %v2400 = vsel %vm2399, %v2283, %v2284
  %v2401 = vand.u32 %v2400, 65535
  %v2402 = vshra.s32 %v2400, 16
  %v2403 = vcvt.s32.f32 %v2401
  %v2404 = vcvt.s32.f32 %v2402
  %2405 = vmin.xlane.f32.xlu0 %v2404
  %v2406 = vpop.xlane.xlu0 %2405
  %vm2407 = vcmp.eq.f32.partialorder %v2404, %v2406
  %v2408 = vsel %vm2407, %v2403, inf
  %2409 = vmin.xlane.f32.xlu0 %v2408
  %v2410 = vpop.xlane.xlu0 %2409
  %v2411 = vcvt.f32.s32 %v2410
  %v2412 = vcvt.f32.s32 %v2406
  %v2413 = vshll.u32 %v2412, 16
  %v2414 = vadd.s32 %v2413, %v2411
  %vm2415 = vcmp.lt.s32.totalorder %v2285, %v2286
  %v2416 = vsel %vm2415, %v2285, %v2286
  %v2417 = vand.u32 %v2416, 65535
  %v2418 = vshra.s32 %v2416, 16
  %v2419 = vcvt.s32.f32 %v2417
  %v2420 = vcvt.s32.f32 %v2418
  %2421 = vmin.xlane.f32.xlu0 %v2420
  %v2422 = vpop.xlane.xlu0 %2421
  %vm2423 = vcmp.eq.f32.partialorder %v2420, %v2422
  %v2424 = vsel %vm2423, %v2419, inf
  %2425 = vmin.xlane.f32.xlu0 %v2424
  %v2426 = vpop.xlane.xlu0 %2425
  %v2427 = vcvt.f32.s32 %v2426
  %v2428 = vcvt.f32.s32 %v2422
  %v2429 = vshll.u32 %v2428, 16
  %v2430 = vadd.s32 %v2429, %v2427
  %vm2431 = vcmp.lt.s32.totalorder %v2287, %v2288
  %v2432 = vsel %vm2431, %v2287, %v2288
  %v2433 = vand.u32 %v2432, 65535
  %v2434 = vshra.s32 %v2432, 16
  %v2435 = vcvt.s32.f32 %v2433
  %v2436 = vcvt.s32.f32 %v2434
  %2437 = vmin.xlane.f32.xlu0 %v2436
  %v2438 = vpop.xlane.xlu0 %2437
  %vm2439 = vcmp.eq.f32.partialorder %v2436, %v2438
  %v2440 = vsel %vm2439, %v2435, inf
  %2441 = vmin.xlane.f32.xlu0 %v2440
  %v2442 = vpop.xlane.xlu0 %2441
  %v2443 = vcvt.f32.s32 %v2442
  %v2444 = vcvt.f32.s32 %v2438
  %v2445 = vshll.u32 %v2444, 16
  %v2446 = vadd.s32 %v2445, %v2443
  %vm2447 = vcmp.lt.s32.totalorder %v2289, %v2290
  %v2448 = vsel %vm2447, %v2289, %v2290
  %v2449 = vand.u32 %v2448, 65535
  %v2450 = vshra.s32 %v2448, 16
  %v2451 = vcvt.s32.f32 %v2449
  %v2452 = vcvt.s32.f32 %v2450
  %2453 = vmin.xlane.f32.xlu0 %v2452
  %v2454 = vpop.xlane.xlu0 %2453
  %vm2455 = vcmp.eq.f32.partialorder %v2452, %v2454
  %v2456 = vsel %vm2455, %v2451, inf
  %2457 = vmin.xlane.f32.xlu0 %v2456
  %v2458 = vpop.xlane.xlu0 %2457
  %v2459 = vcvt.f32.s32 %v2458
  %v2460 = vcvt.f32.s32 %v2454
  %v2461 = vshll.u32 %v2460, 16
  %v2462 = vadd.s32 %v2461, %v2459
  %vm2463 = vcmp.lt.s32.totalorder %v2291, %v2292
  %v2464 = vsel %vm2463, %v2291, %v2292
  %v2465 = vand.u32 %v2464, 65535
  %v2466 = vshra.s32 %v2464, 16
  %v2467 = vcvt.s32.f32 %v2465
  %v2468 = vcvt.s32.f32 %v2466
  %2469 = vmin.xlane.f32.xlu0 %v2468
  %v2470 = vpop.xlane.xlu0 %2469
  %vm2471 = vcmp.eq.f32.partialorder %v2468, %v2470
  %v2472 = vsel %vm2471, %v2467, inf
  %2473 = vmin.xlane.f32.xlu0 %v2472
  %v2474 = vpop.xlane.xlu0 %2473
  %v2475 = vcvt.f32.s32 %v2474
  %v2476 = vcvt.f32.s32 %v2470
  %v2477 = vshll.u32 %v2476, 16
  %v2478 = vadd.s32 %v2477, %v2475
  %vm2479 = vcmp.lt.s32.totalorder %v2293, %v2294
  %v2480 = vsel %vm2479, %v2293, %v2294
  %v2481 = vand.u32 %v2480, 65535
  %v2482 = vshra.s32 %v2480, 16
  %v2483 = vcvt.s32.f32 %v2481
  %v2484 = vcvt.s32.f32 %v2482
  %2485 = vmin.xlane.f32.xlu0 %v2484
  %v2486 = vpop.xlane.xlu0 %2485
  %vm2487 = vcmp.eq.f32.partialorder %v2484, %v2486
  %v2488 = vsel %vm2487, %v2483, inf
  %2489 = vmin.xlane.f32.xlu0 %v2488
  %v2490 = vpop.xlane.xlu0 %2489
  %v2491 = vcvt.f32.s32 %v2490
  %v2492 = vcvt.f32.s32 %v2486
  %v2493 = vshll.u32 %v2492, 16
  %v2494 = vadd.s32 %v2493, %v2491
  %vm2495 = vcmp.lt.s32.totalorder %v2295, %v2296
  %v2496 = vsel %vm2495, %v2295, %v2296
  %v2497 = vand.u32 %v2496, 65535
  %v2498 = vshra.s32 %v2496, 16
  %v2499 = vcvt.s32.f32 %v2497
  %v2500 = vcvt.s32.f32 %v2498
  %2501 = vmin.xlane.f32.xlu0 %v2500
  %v2502 = vpop.xlane.xlu0 %2501
  %vm2503 = vcmp.eq.f32.partialorder %v2500, %v2502
  %v2504 = vsel %vm2503, %v2499, inf
  %2505 = vmin.xlane.f32.xlu0 %v2504
  %v2506 = vpop.xlane.xlu0 %2505
  %v2507 = vcvt.f32.s32 %v2506
  %v2508 = vcvt.f32.s32 %v2502
  %v2509 = vshll.u32 %v2508, 16
  %v2510 = vadd.s32 %v2509, %v2507
  %vm2511 = vcmp.lt.s32.totalorder %v2297, %v2298
  %v2512 = vsel %vm2511, %v2297, %v2298
  %v2513 = vand.u32 %v2512, 65535
  %v2514 = vshra.s32 %v2512, 16
  %v2515 = vcvt.s32.f32 %v2513
  %v2516 = vcvt.s32.f32 %v2514
  %2517 = vmin.xlane.f32.xlu0 %v2516
  %v2518 = vpop.xlane.xlu0 %2517
  %vm2519 = vcmp.eq.f32.partialorder %v2516, %v2518
  %v2520 = vsel %vm2519, %v2515, inf
  %2521 = vmin.xlane.f32.xlu0 %v2520
  %v2522 = vpop.xlane.xlu0 %2521
  %v2523 = vcvt.f32.s32 %v2522
  %v2524 = vcvt.f32.s32 %v2518
  %v2525 = vshll.u32 %v2524, 16
  %v2526 = vadd.s32 %v2525, %v2523
  %vm2527 = vcmp.lt.s32.totalorder %v2299, %v2300
  %v2528 = vsel %vm2527, %v2299, %v2300
  %v2529 = vand.u32 %v2528, 65535
  %v2530 = vshra.s32 %v2528, 16
  %v2531 = vcvt.s32.f32 %v2529
  %v2532 = vcvt.s32.f32 %v2530
  %2533 = vmin.xlane.f32.xlu0 %v2532
  %v2534 = vpop.xlane.xlu0 %2533
  %vm2535 = vcmp.eq.f32.partialorder %v2532, %v2534
  %v2536 = vsel %vm2535, %v2531, inf
  %2537 = vmin.xlane.f32.xlu0 %v2536
  %v2538 = vpop.xlane.xlu0 %2537
  %v2539 = vcvt.f32.s32 %v2538
  %v2540 = vcvt.f32.s32 %v2534
  %v2541 = vshll.u32 %v2540, 16
  %v2542 = vadd.s32 %v2541, %v2539
  %vm2543 = vcmp.lt.s32.totalorder %v2301, %v2302
  %v2544 = vsel %vm2543, %v2301, %v2302
  %v2545 = vand.u32 %v2544, 65535
  %v2546 = vshra.s32 %v2544, 16
  %v2547 = vcvt.s32.f32 %v2545
  %v2548 = vcvt.s32.f32 %v2546
  %2549 = vmin.xlane.f32.xlu0 %v2548
  %v2550 = vpop.xlane.xlu0 %2549
  %vm2551 = vcmp.eq.f32.partialorder %v2548, %v2550
  %v2552 = vsel %vm2551, %v2547, inf
  %2553 = vmin.xlane.f32.xlu0 %v2552
  %v2554 = vpop.xlane.xlu0 %2553
  %v2555 = vcvt.f32.s32 %v2554
  %v2556 = vcvt.f32.s32 %v2550
  %v2557 = vshll.u32 %v2556, 16
  %v2558 = vadd.s32 %v2557, %v2555
  %vm2559 = vcmp.eq.s32.totalorder %v33, %v2318
  %vm2560 = vcmp.eq.s32.totalorder %v34, %v2318
  %vm2561 = vcmp.eq.s32.totalorder %v33, %v2334
  %vm2562 = vcmp.eq.s32.totalorder %v34, %v2334
  %vm2563 = vcmp.eq.s32.totalorder %v33, %v2350
  %vm2564 = vcmp.eq.s32.totalorder %v34, %v2350
  %vm2565 = vcmp.eq.s32.totalorder %v33, %v2366
  %vm2566 = vcmp.eq.s32.totalorder %v34, %v2366
  %vm2567 = vcmp.eq.s32.totalorder %v33, %v2382
  %vm2568 = vcmp.eq.s32.totalorder %v34, %v2382
  %vm2569 = vcmp.eq.s32.totalorder %v33, %v2398
  %vm2570 = vcmp.eq.s32.totalorder %v34, %v2398
  %vm2571 = vcmp.eq.s32.totalorder %v33, %v2414
  %vm2572 = vcmp.eq.s32.totalorder %v34, %v2414
  %vm2573 = vcmp.eq.s32.totalorder %v33, %v2430
  %vm2574 = vcmp.eq.s32.totalorder %v34, %v2430
  %vm2575 = vcmp.eq.s32.totalorder %v33, %v2446
  %vm2576 = vcmp.eq.s32.totalorder %v34, %v2446
  %vm2577 = vcmp.eq.s32.totalorder %v33, %v2462
  %vm2578 = vcmp.eq.s32.totalorder %v34, %v2462
  %vm2579 = vcmp.eq.s32.totalorder %v33, %v2478
  %vm2580 = vcmp.eq.s32.totalorder %v34, %v2478
  %vm2581 = vcmp.eq.s32.totalorder %v33, %v2494
  %vm2582 = vcmp.eq.s32.totalorder %v34, %v2494
  %vm2583 = vcmp.eq.s32.totalorder %v33, %v2510
  %vm2584 = vcmp.eq.s32.totalorder %v34, %v2510
  %vm2585 = vcmp.eq.s32.totalorder %v33, %v2526
  %vm2586 = vcmp.eq.s32.totalorder %v34, %v2526
  %vm2587 = vcmp.eq.s32.totalorder %v33, %v2542
  %vm2588 = vcmp.eq.s32.totalorder %v34, %v2542
  %vm2589 = vcmp.eq.s32.totalorder %v33, %v2558
  %vm2590 = vcmp.eq.s32.totalorder %v34, %v2558
  %v2591 = vsel %vm2559, 1, 0
  %v2592 = vsel %vm2560, 1, 0
  %v2593 = vsel %vm2561, 1, 0
  %v2594 = vsel %vm2562, 1, 0
  %v2595 = vsel %vm2563, 1, 0
  %v2596 = vsel %vm2564, 1, 0
  %v2597 = vsel %vm2565, 1, 0
  %v2598 = vsel %vm2566, 1, 0
  %v2599 = vsel %vm2567, 1, 0
  %v2600 = vsel %vm2568, 1, 0
  %v2601 = vsel %vm2569, 1, 0
  %v2602 = vsel %vm2570, 1, 0
  %v2603 = vsel %vm2571, 1, 0
  %v2604 = vsel %vm2572, 1, 0
  %v2605 = vsel %vm2573, 1, 0
  %v2606 = vsel %vm2574, 1, 0
  %v2607 = vsel %vm2575, 1, 0
  %v2608 = vsel %vm2576, 1, 0
  %v2609 = vsel %vm2577, 1, 0
  %v2610 = vsel %vm2578, 1, 0
  %v2611 = vsel %vm2579, 1, 0
  %v2612 = vsel %vm2580, 1, 0
  %v2613 = vsel %vm2581, 1, 0
  %v2614 = vsel %vm2582, 1, 0
  %v2615 = vsel %vm2583, 1, 0
  %v2616 = vsel %vm2584, 1, 0
  %v2617 = vsel %vm2585, 1, 0
  %v2618 = vsel %vm2586, 1, 0
  %v2619 = vsel %vm2587, 1, 0
  %v2620 = vsel %vm2588, 1, 0
  %v2621 = vsel %vm2589, 1, 0
  %v2622 = vsel %vm2590, 1, 0
  %v2623 = vcvt.s32.f32 %v2591
  %v2624 = vcvt.s32.f32 %v2592
  %v2625 = vcvt.s32.f32 %v2593
  %v2626 = vcvt.s32.f32 %v2594
  %v2627 = vcvt.s32.f32 %v2595
  %v2628 = vcvt.s32.f32 %v2596
  %v2629 = vcvt.s32.f32 %v2597
  %v2630 = vcvt.s32.f32 %v2598
  %v2631 = vcvt.s32.f32 %v2599
  %v2632 = vcvt.s32.f32 %v2600
  %v2633 = vcvt.s32.f32 %v2601
  %v2634 = vcvt.s32.f32 %v2602
  %v2635 = vcvt.s32.f32 %v2603
  %v2636 = vcvt.s32.f32 %v2604
  %v2637 = vcvt.s32.f32 %v2605
  %v2638 = vcvt.s32.f32 %v2606
  %v2639 = vcvt.s32.f32 %v2607
  %v2640 = vcvt.s32.f32 %v2608
  %v2641 = vcvt.s32.f32 %v2609
  %v2642 = vcvt.s32.f32 %v2610
  %v2643 = vcvt.s32.f32 %v2611
  %v2644 = vcvt.s32.f32 %v2612
  %v2645 = vcvt.s32.f32 %v2613
  %v2646 = vcvt.s32.f32 %v2614
  %v2647 = vcvt.s32.f32 %v2615
  %v2648 = vcvt.s32.f32 %v2616
  %v2649 = vcvt.s32.f32 %v2617
  %v2650 = vcvt.s32.f32 %v2618
  %v2651 = vcvt.s32.f32 %v2619
  %v2652 = vcvt.s32.f32 %v2620
  %v2653 = vcvt.s32.f32 %v2621
  %v2654 = vcvt.s32.f32 %v2622
  %2655 = vmatprep.subr.mxu0 0.0
  %2656 = vmatpush1.msra.mxu0 %v1968
  %2657 = vmatprep.subr.mxu0 0.0
  %2658 = vmatpush1.msra.mxu0 %v1967
  %2659 = vmatprep.subr.mxu0 0.0
  %2660 = vmatpush1.msra.mxu0 %v1966
  %2661 = vmatprep.subr.mxu0 0.0
  %2662 = vmatpush1.msra.mxu0 %v1965
  %2663 = vmatprep.subr.mxu0 0.0
  %2664 = vmatpush1.msra.mxu0 %v1964
  %2665 = vmatprep.subr.mxu0 0.0
  %2666 = vmatpush1.msra.mxu0 %v1963
  %2667 = vmatprep.subr.mxu0 0.0
  %2668 = vmatpush1.msra.mxu0 %v1962
  %2669 = vmatprep.subr.mxu0 0.0
  %2670 = vmatpush1.msra.mxu0 %v1961
  %2671 = vmatprep.subr.mxu0 0.0
  %2672 = vmatpush1.msra.mxu0 %v1960
  %2673 = vmatprep.subr.mxu0 0.0
  %2674 = vmatpush1.msra.mxu0 %v1959
  %2675 = vmatprep.subr.mxu0 0.0
  %2676 = vmatpush1.msra.mxu0 %v1958
  %2677 = vmatprep.subr.mxu0 0.0
  %2678 = vmatpush1.msra.mxu0 %v1957
  %2679 = vmatprep.subr.mxu0 0.0
  %2680 = vmatpush1.msra.mxu0 %v1956
  %2681 = vmatprep.subr.mxu0 0.0
  %2682 = vmatpush1.msra.mxu0 %v1955
  %2683 = vmatprep.subr.mxu0 0.0
  %2684 = vmatpush1.msra.mxu0 %v1954
  %2685 = vmatprep.subr.mxu0 0.0
  %2686 = vmatpush1.msra.mxu0 %v1953
  %2687 = vmatprep.subr.mxu0 0.0
  %2688 = vmatpush2.msra.mxu0 %v1984
  %2689 = vmatprep.subr.mxu0 0.0
  %2690 = vmatpush2.msra.mxu0 %v1983
  %2691 = vmatprep.subr.mxu0 0.0
  %2692 = vmatpush2.msra.mxu0 %v1982
  %2693 = vmatprep.subr.mxu0 0.0
  %2694 = vmatpush2.msra.mxu0 %v1981
  %2695 = vmatprep.subr.mxu0 0.0
  %2696 = vmatpush2.msra.mxu0 %v1980
  %2697 = vmatprep.subr.mxu0 0.0
  %2698 = vmatpush2.msra.mxu0 %v1979
  %2699 = vmatprep.subr.mxu0 0.0
  %2700 = vmatpush2.msra.mxu0 %v1978
  %2701 = vmatprep.subr.mxu0 0.0
  %2702 = vmatpush2.msra.mxu0 %v1977
  %2703 = vmatprep.subr.mxu0 0.0
  %2704 = vmatpush2.msra.mxu0 %v1976
  %2705 = vmatprep.subr.mxu0 0.0
  %2706 = vmatpush2.msra.mxu0 %v1975
  %2707 = vmatprep.subr.mxu0 0.0
  %2708 = vmatpush2.msra.mxu0 %v1974
  %2709 = vmatprep.subr.mxu0 0.0
  %2710 = vmatpush2.msra.mxu0 %v1973
  %2711 = vmatprep.subr.mxu0 0.0
  %2712 = vmatpush2.msra.mxu0 %v1972
  %2713 = vmatprep.subr.mxu0 0.0
  %2714 = vmatpush2.msra.mxu0 %v1971
  %2715 = vmatprep.subr.mxu0 0.0
  %2716 = vmatpush2.msra.mxu0 %v1970
  %2717 = vmatprep.subr.mxu0 0.0
  %2718 = vmatpush2.msra.mxu0 %v1969
  %2719 = vmatprep.mubr.f32.mxu0 %v2624
  %2720 = vmatmul.mubr.f32.gmra.mxu0 %v2623
  %v2721 = vpop.f32.mrf.mxu0
  %v2722 = vadd.f32 0.0, %v2721
  %v2723 = vpop.f32.mrf.mxu0
  %2724 = vmatprep.mubr.f32.mxu0 %v2626
  %2725 = vmatmul.mubr.f32.gmra.mxu0 %v2625
  %v2726 = vpop.f32.mrf.mxu0
  %v2727 = vadd.f32 0.0, %v2726
  %v2728 = vpop.f32.mrf.mxu0
  %2729 = vmatprep.mubr.f32.mxu0 %v2628
  %2730 = vmatmul.mubr.f32.gmra.mxu0 %v2627
  %v2731 = vpop.f32.mrf.mxu0
  %v2732 = vadd.f32 0.0, %v2731
  %v2733 = vpop.f32.mrf.mxu0
  %2734 = vmatprep.mubr.f32.mxu0 %v2630
  %2735 = vmatmul.mubr.f32.gmra.mxu0 %v2629
  %v2736 = vpop.f32.mrf.mxu0
  %v2737 = vadd.f32 0.0, %v2736
  %v2738 = vpop.f32.mrf.mxu0
  %2739 = vmatprep.mubr.f32.mxu0 %v2632
  %2740 = vmatmul.mubr.f32.gmra.mxu0 %v2631
  %v2741 = vpop.f32.mrf.mxu0
  %v2742 = vadd.f32 0.0, %v2741
  %v2743 = vpop.f32.mrf.mxu0
  %2744 = vmatprep.mubr.f32.mxu0 %v2634
  %2745 = vmatmul.mubr.f32.gmra.mxu0 %v2633
  %v2746 = vpop.f32.mrf.mxu0
  %v2747 = vadd.f32 0.0, %v2746
  %v2748 = vpop.f32.mrf.mxu0
  %2749 = vmatprep.mubr.f32.mxu0 %v2636
  %2750 = vmatmul.mubr.f32.gmra.mxu0 %v2635
  %v2751 = vpop.f32.mrf.mxu0
  %v2752 = vadd.f32 0.0, %v2751
  %v2753 = vpop.f32.mrf.mxu0
  %2754 = vmatprep.mubr.f32.mxu0 %v2638
  %2755 = vmatmul.mubr.f32.gmra.mxu0 %v2637
  %v2756 = vpop.f32.mrf.mxu0
  %v2757 = vadd.f32 0.0, %v2756
  %v2758 = vpop.f32.mrf.mxu0
  %2759 = vmatprep.mubr.f32.mxu0 %v2640
  %2760 = vmatmul.mubr.f32.gmra.mxu0 %v2639
  %v2761 = vpop.f32.mrf.mxu0
  %v2762 = vadd.f32 0.0, %v2761
  %v2763 = vpop.f32.mrf.mxu0
  %2764 = vmatprep.mubr.f32.mxu0 %v2642
  %2765 = vmatmul.mubr.f32.gmra.mxu0 %v2641
  %v2766 = vpop.f32.mrf.mxu0
  %v2767 = vadd.f32 0.0, %v2766
  %v2768 = vpop.f32.mrf.mxu0
  %2769 = vmatprep.mubr.f32.mxu0 %v2644
  %2770 = vmatmul.mubr.f32.gmra.mxu0 %v2643
  %v2771 = vpop.f32.mrf.mxu0
  %v2772 = vadd.f32 0.0, %v2771
  %v2773 = vpop.f32.mrf.mxu0
  %2774 = vmatprep.mubr.f32.mxu0 %v2646
  %2775 = vmatmul.mubr.f32.gmra.mxu0 %v2645
  %v2776 = vpop.f32.mrf.mxu0
  %v2777 = vadd.f32 0.0, %v2776
  %v2778 = vpop.f32.mrf.mxu0
  %2779 = vmatprep.mubr.f32.mxu0 %v2648
  %2780 = vmatmul.mubr.f32.gmra.mxu0 %v2647
  %v2781 = vpop.f32.mrf.mxu0
  %v2782 = vadd.f32 0.0, %v2781
  %v2783 = vpop.f32.mrf.mxu0
  %2784 = vmatprep.mubr.f32.mxu0 %v2650
  %2785 = vmatmul.mubr.f32.gmra.mxu0 %v2649
  %v2786 = vpop.f32.mrf.mxu0
  %v2787 = vadd.f32 0.0, %v2786
  %v2788 = vpop.f32.mrf.mxu0
  %2789 = vmatprep.mubr.f32.mxu0 %v2652
  %2790 = vmatmul.mubr.f32.gmra.mxu0 %v2651
  %v2791 = vpop.f32.mrf.mxu0
  %v2792 = vadd.f32 0.0, %v2791
  %v2793 = vpop.f32.mrf.mxu0
  %2794 = vmatprep.mubr.f32.mxu0 %v2654
  %2795 = vmatmul.mubr.f32.gmra.mxu0 %v2653
  %v2796 = vpop.f32.mrf.mxu0
  %v2797 = vadd.f32 0.0, %v2796
  %v2798 = vpop.f32.mrf.mxu0
  %2799 = vdwg.mxu0
  %v2800 = vlaneseq
  %v2801 = vshrl.u32 %v2800, 7
  %v2802 = vsub.s32 %v33, %v2801
  %v2803 = vrot.slane %v2318, %v2802
  %v2804 = vlaneseq
  %v2805 = vshrl.u32 %v2804, 7
  %v2806 = vsub.s32 %v885, %v2805
  %v2807 = vrot.slane %v2334, %v2806
  %v2808 = vsel %vm890, %v2807, %v2803
  %v2809 = vlaneseq
  %v2810 = vshrl.u32 %v2809, 7
  %v2811 = vsub.s32 %v892, %v2810
  %v2812 = vrot.slane %v2350, %v2811
  %v2813 = vsel %vm897, %v2812, %v2808
  %v2814 = vlaneseq
  %v2815 = vshrl.u32 %v2814, 7
  %v2816 = vsub.s32 %v899, %v2815
  %v2817 = vrot.slane %v2366, %v2816
  %v2818 = vsel %vm904, %v2817, %v2813
  %v2819 = vlaneseq
  %v2820 = vshrl.u32 %v2819, 7
  %v2821 = vsub.s32 %v906, %v2820
  %v2822 = vrot.slane %v2382, %v2821
  %v2823 = vsel %vm911, %v2822, %v2818
  %v2824 = vlaneseq
  %v2825 = vshrl.u32 %v2824, 7
  %v2826 = vsub.s32 %v913, %v2825
  %v2827 = vrot.slane %v2398, %v2826
  %v2828 = vsel %vm918, %v2827, %v2823
  %v2829 = vlaneseq
  %v2830 = vshrl.u32 %v2829, 7
  %v2831 = vsub.s32 %v920, %v2830
  %v2832 = vrot.slane %v2414, %v2831
  %v2833 = vsel %vm925, %v2832, %v2828
  %v2834 = vlaneseq
  %v2835 = vshrl.u32 %v2834, 7
  %v2836 = vsub.s32 %v927, %v2835
  %v2837 = vrot.slane %v2430, %v2836
  %v2838 = vsel %vm932, %v2837, %v2833
  %v2839 = vlaneseq
  %v2840 = vshrl.u32 %v2839, 7
  %v2841 = vsub.s32 %v934, %v2840
  %v2842 = vrot.slane %v2446, %v2841
  %v2843 = vsel %vm939, %v2842, %v2838
  %v2844 = vlaneseq
  %v2845 = vshrl.u32 %v2844, 7
  %v2846 = vsub.s32 %v941, %v2845
  %v2847 = vrot.slane %v2462, %v2846
  %v2848 = vsel %vm946, %v2847, %v2843
  %v2849 = vlaneseq
  %v2850 = vshrl.u32 %v2849, 7
  %v2851 = vsub.s32 %v948, %v2850
  %v2852 = vrot.slane %v2478, %v2851
  %v2853 = vsel %vm953, %v2852, %v2848
  %v2854 = vlaneseq
  %v2855 = vshrl.u32 %v2854, 7
  %v2856 = vsub.s32 %v955, %v2855
  %v2857 = vrot.slane %v2494, %v2856
  %v2858 = vsel %vm960, %v2857, %v2853
  %v2859 = vlaneseq
  %v2860 = vshrl.u32 %v2859, 7
  %v2861 = vsub.s32 %v962, %v2860
  %v2862 = vrot.slane %v2510, %v2861
  %v2863 = vsel %vm967, %v2862, %v2858
  %v2864 = vlaneseq
  %v2865 = vshrl.u32 %v2864, 7
  %v2866 = vsub.s32 %v969, %v2865
  %v2867 = vrot.slane %v2526, %v2866
  %v2868 = vsel %vm974, %v2867, %v2863
  %v2869 = vlaneseq
  %v2870 = vshrl.u32 %v2869, 7
  %v2871 = vsub.s32 %v976, %v2870
  %v2872 = vrot.slane %v2542, %v2871
  %v2873 = vsel %vm981, %v2872, %v2868
  %v2874 = vlaneseq
  %v2875 = vshrl.u32 %v2874, 7
  %v2876 = vsub.s32 %v983, %v2875
  %v2877 = vrot.slane %v2558, %v2876
  %v2878 = vsel %vm988, %v2877, %v2873
  %s2879 = scalar_lea.vmem %s4, 2
  %2880 = vst [vmem:[%s2879] sm:$0x1] %v2878
  %v2881 = vsub.f32 %v1936, %v2722
  %v2882 = vsub.f32 %v1937, %v2727
  %v2883 = vsub.f32 %v1938, %v2732
  %v2884 = vsub.f32 %v1939, %v2737
  %v2885 = vsub.f32 %v1940, %v2742
  %v2886 = vsub.f32 %v1941, %v2747
  %v2887 = vsub.f32 %v1942, %v2752
  %v2888 = vsub.f32 %v1943, %v2757
  %v2889 = vsub.f32 %v1944, %v2762
  %v2890 = vsub.f32 %v1945, %v2767
  %v2891 = vsub.f32 %v1946, %v2772
  %v2892 = vsub.f32 %v1947, %v2777
  %v2893 = vsub.f32 %v1948, %v2782
  %v2894 = vsub.f32 %v1949, %v2787
  %v2895 = vsub.f32 %v1950, %v2792
  %v2896 = vsub.f32 %v1951, %v2797
  %s2897 = scalar_lea.vmem %s1, 768
  %v2898 = vld [vmem:[%s2897] sm:$0xff]
  %v2899 = vld [vmem:[%s2897 + $0x8] sm:$0xff]
  %v2900 = vld [vmem:[%s2897 + $0x10] sm:$0xff]
  %v2901 = vld [vmem:[%s2897 + $0x18] sm:$0xff]
  %v2902 = vld [vmem:[%s2897 + $0x20] sm:$0xff]
  %v2903 = vld [vmem:[%s2897 + $0x28] sm:$0xff]
  %v2904 = vld [vmem:[%s2897 + $0x30] sm:$0xff]
  %v2905 = vld [vmem:[%s2897 + $0x38] sm:$0xff]
  %v2906 = vld [vmem:[%s2897 + $0x40] sm:$0xff]
  %v2907 = vld [vmem:[%s2897 + $0x48] sm:$0xff]
  %v2908 = vld [vmem:[%s2897 + $0x50] sm:$0xff]
  %v2909 = vld [vmem:[%s2897 + $0x58] sm:$0xff]
  %v2910 = vld [vmem:[%s2897 + $0x60] sm:$0xff]
  %v2911 = vld [vmem:[%s2897 + $0x68] sm:$0xff]
  %v2912 = vld [vmem:[%s2897 + $0x70] sm:$0xff]
  %v2913 = vld [vmem:[%s2897 + $0x78] sm:$0xff]
  %v2914 = vld [vmem:[%s2897 + $0x80] sm:$0xff]
  %v2915 = vld [vmem:[%s2897 + $0x88] sm:$0xff]
  %v2916 = vld [vmem:[%s2897 + $0x90] sm:$0xff]
  %v2917 = vld [vmem:[%s2897 + $0x98] sm:$0xff]
  %v2918 = vld [vmem:[%s2897 + $0xa0] sm:$0xff]
  %v2919 = vld [vmem:[%s2897 + $0xa8] sm:$0xff]
  %v2920 = vld [vmem:[%s2897 + $0xb0] sm:$0xff]
  %v2921 = vld [vmem:[%s2897 + $0xb8] sm:$0xff]
  %v2922 = vld [vmem:[%s2897 + $0xc0] sm:$0xff]
  %v2923 = vld [vmem:[%s2897 + $0xc8] sm:$0xff]
  %v2924 = vld [vmem:[%s2897 + $0xd0] sm:$0xff]
  %v2925 = vld [vmem:[%s2897 + $0xd8] sm:$0xff]
  %v2926 = vld [vmem:[%s2897 + $0xe0] sm:$0xff]
  %v2927 = vld [vmem:[%s2897 + $0xe8] sm:$0xff]
  %v2928 = vld [vmem:[%s2897 + $0xf0] sm:$0xff]
  %v2929 = vld [vmem:[%s2897 + $0xf8] sm:$0xff]
  %2930 = vmatprep.subr.mxu0 0.0
  %2931 = vmatpush1.xpose.msra.mxu0 %v2913
  %2932 = vmatprep.subr.mxu0 0.0
  %2933 = vmatpush1.xpose.msra.mxu0 %v2912
  %2934 = vmatprep.subr.mxu0 0.0
  %2935 = vmatpush1.xpose.msra.mxu0 %v2911
  %2936 = vmatprep.subr.mxu0 0.0
  %2937 = vmatpush1.xpose.msra.mxu0 %v2910
  %2938 = vmatprep.subr.mxu0 0.0
  %2939 = vmatpush1.xpose.msra.mxu0 %v2909
  %2940 = vmatprep.subr.mxu0 0.0
  %2941 = vmatpush1.xpose.msra.mxu0 %v2908
  %2942 = vmatprep.subr.mxu0 0.0
  %2943 = vmatpush1.xpose.msra.mxu0 %v2907
  %2944 = vmatprep.subr.mxu0 0.0
  %2945 = vmatpush1.xpose.msra.mxu0 %v2906
  %2946 = vmatprep.subr.mxu0 0.0
  %2947 = vmatpush1.xpose.msra.mxu0 %v2905
  %2948 = vmatprep.subr.mxu0 0.0
  %2949 = vmatpush1.xpose.msra.mxu0 %v2904
  %2950 = vmatprep.subr.mxu0 0.0
  %2951 = vmatpush1.xpose.msra.mxu0 %v2903
  %2952 = vmatprep.subr.mxu0 0.0
  %2953 = vmatpush1.xpose.msra.mxu0 %v2902
  %2954 = vmatprep.subr.mxu0 0.0
  %2955 = vmatpush1.xpose.msra.mxu0 %v2901
  %2956 = vmatprep.subr.mxu0 0.0
  %2957 = vmatpush1.xpose.msra.mxu0 %v2900
  %2958 = vmatprep.subr.mxu0 0.0
  %2959 = vmatpush1.xpose.msra.mxu0 %v2899
  %2960 = vmatprep.subr.mxu0 0.0
  %2961 = vmatpush1.xpose.msra.mxu0 %v2898
  %2962 = vmatprep.subr.mxu0 0.0
  %2963 = vmatpush2.xpose.msra.mxu0 %v2929
  %2964 = vmatprep.subr.mxu0 0.0
  %2965 = vmatpush2.xpose.msra.mxu0 %v2928
  %2966 = vmatprep.subr.mxu0 0.0
  %2967 = vmatpush2.xpose.msra.mxu0 %v2927
  %2968 = vmatprep.subr.mxu0 0.0
  %2969 = vmatpush2.xpose.msra.mxu0 %v2926
  %2970 = vmatprep.subr.mxu0 0.0
  %2971 = vmatpush2.xpose.msra.mxu0 %v2925
  %2972 = vmatprep.subr.mxu0 0.0
  %2973 = vmatpush2.xpose.msra.mxu0 %v2924
  %2974 = vmatprep.subr.mxu0 0.0
  %2975 = vmatpush2.xpose.msra.mxu0 %v2923
  %2976 = vmatprep.subr.mxu0 0.0
  %2977 = vmatpush2.xpose.msra.mxu0 %v2922
  %2978 = vmatprep.subr.mxu0 0.0
  %2979 = vmatpush2.xpose.msra.mxu0 %v2921
  %2980 = vmatprep.subr.mxu0 0.0
  %2981 = vmatpush2.xpose.msra.mxu0 %v2920
  %2982 = vmatprep.subr.mxu0 0.0
  %2983 = vmatpush2.xpose.msra.mxu0 %v2919
  %2984 = vmatprep.subr.mxu0 0.0
  %2985 = vmatpush2.xpose.msra.mxu0 %v2918
  %2986 = vmatprep.subr.mxu0 0.0
  %2987 = vmatpush2.xpose.msra.mxu0 %v2917
  %2988 = vmatprep.subr.mxu0 0.0
  %2989 = vmatpush2.xpose.msra.mxu0 %v2916
  %2990 = vmatprep.subr.mxu0 0.0
  %2991 = vmatpush2.xpose.msra.mxu0 %v2915
  %2992 = vmatprep.subr.mxu0 0.0
  %2993 = vmatpush2.xpose.msra.mxu0 %v2914
  %2994 = vmatprep.mubr.f32.mxu0 0.0
  %2995 = vmatmul.mubr.f32.gmra.mxu0 %v2881
  %v2996 = vpop.f32.mrf.mxu0
  %v2997 = vadd.f32 0.0, %v2996
  %v2998 = vpop.f32.mrf.mxu0
  %v2999 = vadd.f32 0.0, %v2998
  %3000 = vmatprep.mubr.f32.mxu0 0.0
  %3001 = vmatmul.mubr.f32.gmra.mxu0 %v2882
  %v3002 = vpop.f32.mrf.mxu0
  %v3003 = vadd.f32 0.0, %v3002
  %v3004 = vpop.f32.mrf.mxu0
  %v3005 = vadd.f32 0.0, %v3004
  %3006 = vmatprep.mubr.f32.mxu0 0.0
  %3007 = vmatmul.mubr.f32.gmra.mxu0 %v2883
  %v3008 = vpop.f32.mrf.mxu0
  %v3009 = vadd.f32 0.0, %v3008
  %v3010 = vpop.f32.mrf.mxu0
  %v3011 = vadd.f32 0.0, %v3010
  %3012 = vmatprep.mubr.f32.mxu0 0.0
  %3013 = vmatmul.mubr.f32.gmra.mxu0 %v2884
  %v3014 = vpop.f32.mrf.mxu0
  %v3015 = vadd.f32 0.0, %v3014
  %v3016 = vpop.f32.mrf.mxu0
  %v3017 = vadd.f32 0.0, %v3016
  %3018 = vmatprep.mubr.f32.mxu0 0.0
  %3019 = vmatmul.mubr.f32.gmra.mxu0 %v2885
  %v3020 = vpop.f32.mrf.mxu0
  %v3021 = vadd.f32 0.0, %v3020
  %v3022 = vpop.f32.mrf.mxu0
  %v3023 = vadd.f32 0.0, %v3022
  %3024 = vmatprep.mubr.f32.mxu0 0.0
  %3025 = vmatmul.mubr.f32.gmra.mxu0 %v2886
  %v3026 = vpop.f32.mrf.mxu0
  %v3027 = vadd.f32 0.0, %v3026
  %v3028 = vpop.f32.mrf.mxu0
  %v3029 = vadd.f32 0.0, %v3028
  %3030 = vmatprep.mubr.f32.mxu0 0.0
  %3031 = vmatmul.mubr.f32.gmra.mxu0 %v2887
  %v3032 = vpop.f32.mrf.mxu0
  %v3033 = vadd.f32 0.0, %v3032
  %v3034 = vpop.f32.mrf.mxu0
  %v3035 = vadd.f32 0.0, %v3034
  %3036 = vmatprep.mubr.f32.mxu0 0.0
  %3037 = vmatmul.mubr.f32.gmra.mxu0 %v2888
  %v3038 = vpop.f32.mrf.mxu0
  %v3039 = vadd.f32 0.0, %v3038
  %v3040 = vpop.f32.mrf.mxu0
  %v3041 = vadd.f32 0.0, %v3040
  %3042 = vmatprep.mubr.f32.mxu0 0.0
  %3043 = vmatmul.mubr.f32.gmra.mxu0 %v2889
  %v3044 = vpop.f32.mrf.mxu0
  %v3045 = vadd.f32 0.0, %v3044
  %v3046 = vpop.f32.mrf.mxu0
  %v3047 = vadd.f32 0.0, %v3046
  %3048 = vmatprep.mubr.f32.mxu0 0.0
  %3049 = vmatmul.mubr.f32.gmra.mxu0 %v2890
  %v3050 = vpop.f32.mrf.mxu0
  %v3051 = vadd.f32 0.0, %v3050
  %v3052 = vpop.f32.mrf.mxu0
  %v3053 = vadd.f32 0.0, %v3052
  %3054 = vmatprep.mubr.f32.mxu0 0.0
  %3055 = vmatmul.mubr.f32.gmra.mxu0 %v2891
  %v3056 = vpop.f32.mrf.mxu0
  %v3057 = vadd.f32 0.0, %v3056
  %v3058 = vpop.f32.mrf.mxu0
  %v3059 = vadd.f32 0.0, %v3058
  %3060 = vmatprep.mubr.f32.mxu0 0.0
  %3061 = vmatmul.mubr.f32.gmra.mxu0 %v2892
  %v3062 = vpop.f32.mrf.mxu0
  %v3063 = vadd.f32 0.0, %v3062
  %v3064 = vpop.f32.mrf.mxu0
  %v3065 = vadd.f32 0.0, %v3064
  %3066 = vmatprep.mubr.f32.mxu0 0.0
  %3067 = vmatmul.mubr.f32.gmra.mxu0 %v2893
  %v3068 = vpop.f32.mrf.mxu0
  %v3069 = vadd.f32 0.0, %v3068
  %v3070 = vpop.f32.mrf.mxu0
  %v3071 = vadd.f32 0.0, %v3070
  %3072 = vmatprep.mubr.f32.mxu0 0.0
  %3073 = vmatmul.mubr.f32.gmra.mxu0 %v2894
  %v3074 = vpop.f32.mrf.mxu0
  %v3075 = vadd.f32 0.0, %v3074
  %v3076 = vpop.f32.mrf.mxu0
  %v3077 = vadd.f32 0.0, %v3076
  %3078 = vmatprep.mubr.f32.mxu0 0.0
  %3079 = vmatmul.mubr.f32.gmra.mxu0 %v2895
  %v3080 = vpop.f32.mrf.mxu0
  %v3081 = vadd.f32 0.0, %v3080
  %v3082 = vpop.f32.mrf.mxu0
  %v3083 = vadd.f32 0.0, %v3082
  %3084 = vmatprep.mubr.f32.mxu0 0.0
  %3085 = vmatmul.mubr.f32.gmra.mxu0 %v2896
  %v3086 = vpop.f32.mrf.mxu0
  %v3087 = vadd.f32 0.0, %v3086
  %v3088 = vpop.f32.mrf.mxu0
  %v3089 = vadd.f32 0.0, %v3088
  %3090 = vdwg.mxu0
  %s3091 = scalar_lea.vmem %s2, 6
  %v3092 = vld [vmem:[%s3091] sm:$0x3]
  %v3094 = vlaneseq
  %v3095 = vshrl.u32 %v3094, 7
  %v3096 = vsub.s32 0, %v3095
  %v3097 = vrot.slane %v3092, %v3096
  %v3098 = vlaneseq
  %v3099 = vshrl.u32 %v3098, 7
  %v3100 = vsub.s32 1, %v3099
  %v3101 = vrot.slane %v3092, %v3100
  %v3104 = vsub.f32 %v2997, %v3097
  %v3105 = vsub.f32 %v2999, %v3101
  %v3106 = vsub.f32 %v3003, %v3097
  %v3107 = vsub.f32 %v3005, %v3101
  %v3108 = vsub.f32 %v3009, %v3097
  %v3109 = vsub.f32 %v3011, %v3101
  %v3110 = vsub.f32 %v3015, %v3097
  %v3111 = vsub.f32 %v3017, %v3101
  %v3112 = vsub.f32 %v3021, %v3097
  %v3113 = vsub.f32 %v3023, %v3101
  %v3114 = vsub.f32 %v3027, %v3097
  %v3115 = vsub.f32 %v3029, %v3101
  %v3116 = vsub.f32 %v3033, %v3097
  %v3117 = vsub.f32 %v3035, %v3101
  %v3118 = vsub.f32 %v3039, %v3097
  %v3119 = vsub.f32 %v3041, %v3101
  %v3120 = vsub.f32 %v3045, %v3097
  %v3121 = vsub.f32 %v3047, %v3101
  %v3122 = vsub.f32 %v3051, %v3097
  %v3123 = vsub.f32 %v3053, %v3101
  %v3124 = vsub.f32 %v3057, %v3097
  %v3125 = vsub.f32 %v3059, %v3101
  %v3126 = vsub.f32 %v3063, %v3097
  %v3127 = vsub.f32 %v3065, %v3101
  %v3128 = vsub.f32 %v3069, %v3097
  %v3129 = vsub.f32 %v3071, %v3101
  %v3130 = vsub.f32 %v3075, %v3097
  %v3131 = vsub.f32 %v3077, %v3101
  %v3132 = vsub.f32 %v3081, %v3097
  %v3133 = vsub.f32 %v3083, %v3101
  %v3134 = vsub.f32 %v3087, %v3097
  %v3135 = vsub.f32 %v3089, %v3101
  %v3136 = vmax.f32 %v3104, %v3105
  %3137 = vmax.xlane.f32.xlu0 %v3136
  %v3138 = vpop.xlane.xlu0 %3137
  %v3139 = vmax.f32 %v3106, %v3107
  %3140 = vmax.xlane.f32.xlu0 %v3139
  %v3141 = vpop.xlane.xlu0 %3140
  %v3142 = vmax.f32 %v3108, %v3109
  %3143 = vmax.xlane.f32.xlu0 %v3142
  %v3144 = vpop.xlane.xlu0 %3143
  %v3145 = vmax.f32 %v3110, %v3111
  %3146 = vmax.xlane.f32.xlu0 %v3145
  %v3147 = vpop.xlane.xlu0 %3146
  %v3148 = vmax.f32 %v3112, %v3113
  %3149 = vmax.xlane.f32.xlu0 %v3148
  %v3150 = vpop.xlane.xlu0 %3149
  %v3151 = vmax.f32 %v3114, %v3115
  %3152 = vmax.xlane.f32.xlu0 %v3151
  %v3153 = vpop.xlane.xlu0 %3152
  %v3154 = vmax.f32 %v3116, %v3117
  %3155 = vmax.xlane.f32.xlu0 %v3154
  %v3156 = vpop.xlane.xlu0 %3155
  %v3157 = vmax.f32 %v3118, %v3119
  %3158 = vmax.xlane.f32.xlu0 %v3157
  %v3159 = vpop.xlane.xlu0 %3158
  %v3160 = vmax.f32 %v3120, %v3121
  %3161 = vmax.xlane.f32.xlu0 %v3160
  %v3162 = vpop.xlane.xlu0 %3161
  %v3163 = vmax.f32 %v3122, %v3123
  %3164 = vmax.xlane.f32.xlu0 %v3163
  %v3165 = vpop.xlane.xlu0 %3164
  %v3166 = vmax.f32 %v3124, %v3125
  %3167 = vmax.xlane.f32.xlu0 %v3166
  %v3168 = vpop.xlane.xlu0 %3167
  %v3169 = vmax.f32 %v3126, %v3127
  %3170 = vmax.xlane.f32.xlu0 %v3169
  %v3171 = vpop.xlane.xlu0 %3170
  %v3172 = vmax.f32 %v3128, %v3129
  %3173 = vmax.xlane.f32.xlu0 %v3172
  %v3174 = vpop.xlane.xlu0 %3173
  %v3175 = vmax.f32 %v3130, %v3131
  %3176 = vmax.xlane.f32.xlu0 %v3175
  %v3177 = vpop.xlane.xlu0 %3176
  %v3178 = vmax.f32 %v3132, %v3133
  %3179 = vmax.xlane.f32.xlu0 %v3178
  %v3180 = vpop.xlane.xlu0 %3179
  %v3181 = vmax.f32 %v3134, %v3135
  %3182 = vmax.xlane.f32.xlu0 %v3181
  %v3183 = vpop.xlane.xlu0 %3182
  %vm3184 = vcmp.eq.f32.partialorder %v3104, %v3138
  %vm3185 = vcmp.eq.f32.partialorder %v3105, %v3138
  %vm3186 = vcmp.eq.f32.partialorder %v3106, %v3141
  %vm3187 = vcmp.eq.f32.partialorder %v3107, %v3141
  %vm3188 = vcmp.eq.f32.partialorder %v3108, %v3144
  %vm3189 = vcmp.eq.f32.partialorder %v3109, %v3144
  %vm3190 = vcmp.eq.f32.partialorder %v3110, %v3147
  %vm3191 = vcmp.eq.f32.partialorder %v3111, %v3147
  %vm3192 = vcmp.eq.f32.partialorder %v3112, %v3150
  %vm3193 = vcmp.eq.f32.partialorder %v3113, %v3150
  %vm3194 = vcmp.eq.f32.partialorder %v3114, %v3153
  %vm3195 = vcmp.eq.f32.partialorder %v3115, %v3153
  %vm3196 = vcmp.eq.f32.partialorder %v3116, %v3156
  %vm3197 = vcmp.eq.f32.partialorder %v3117, %v3156
  %vm3198 = vcmp.eq.f32.partialorder %v3118, %v3159
  %vm3199 = vcmp.eq.f32.partialorder %v3119, %v3159
  %vm3200 = vcmp.eq.f32.partialorder %v3120, %v3162
  %vm3201 = vcmp.eq.f32.partialorder %v3121, %v3162
  %vm3202 = vcmp.eq.f32.partialorder %v3122, %v3165
  %vm3203 = vcmp.eq.f32.partialorder %v3123, %v3165
  %vm3204 = vcmp.eq.f32.partialorder %v3124, %v3168
  %vm3205 = vcmp.eq.f32.partialorder %v3125, %v3168
  %vm3206 = vcmp.eq.f32.partialorder %v3126, %v3171
  %vm3207 = vcmp.eq.f32.partialorder %v3127, %v3171
  %vm3208 = vcmp.eq.f32.partialorder %v3128, %v3174
  %vm3209 = vcmp.eq.f32.partialorder %v3129, %v3174
  %vm3210 = vcmp.eq.f32.partialorder %v3130, %v3177
  %vm3211 = vcmp.eq.f32.partialorder %v3131, %v3177
  %vm3212 = vcmp.eq.f32.partialorder %v3132, %v3180
  %vm3213 = vcmp.eq.f32.partialorder %v3133, %v3180
  %vm3214 = vcmp.eq.f32.partialorder %v3134, %v3183
  %vm3215 = vcmp.eq.f32.partialorder %v3135, %v3183
  %v3216 = vsel %vm3184, %v33, 256
  %v3217 = vsel %vm3185, %v34, 256
  %v3218 = vsel %vm3186, %v33, 256
  %v3219 = vsel %vm3187, %v34, 256
  %v3220 = vsel %vm3188, %v33, 256
  %v3221 = vsel %vm3189, %v34, 256
  %v3222 = vsel %vm3190, %v33, 256
  %v3223 = vsel %vm3191, %v34, 256
  %v3224 = vsel %vm3192, %v33, 256
  %v3225 = vsel %vm3193, %v34, 256
  %v3226 = vsel %vm3194, %v33, 256
  %v3227 = vsel %vm3195, %v34, 256
  %v3228 = vsel %vm3196, %v33, 256
  %v3229 = vsel %vm3197, %v34, 256
  %v3230 = vsel %vm3198, %v33, 256
  %v3231 = vsel %vm3199, %v34, 256
  %v3232 = vsel %vm3200, %v33, 256
  %v3233 = vsel %vm3201, %v34, 256
  %v3234 = vsel %vm3202, %v33, 256
  %v3235 = vsel %vm3203, %v34, 256
  %v3236 = vsel %vm3204, %v33, 256
  %v3237 = vsel %vm3205, %v34, 256
  %v3238 = vsel %vm3206, %v33, 256
  %v3239 = vsel %vm3207, %v34, 256
  %v3240 = vsel %vm3208, %v33, 256
  %v3241 = vsel %vm3209, %v34, 256
  %v3242 = vsel %vm3210, %v33, 256
  %v3243 = vsel %vm3211, %v34, 256
  %v3244 = vsel %vm3212, %v33, 256
  %v3245 = vsel %vm3213, %v34, 256
  %v3246 = vsel %vm3214, %v33, 256
  %v3247 = vsel %vm3215, %v34, 256
  %vm3248 = vcmp.lt.s32.totalorder %v3216, %v3217
  %v3249 = vsel %vm3248, %v3216, %v3217
  %v3250 = vand.u32 %v3249, 65535
  %v3251 = vshra.s32 %v3249, 16
  %v3252 = vcvt.s32.f32 %v3250
  %v3253 = vcvt.s32.f32 %v3251
  %3254 = vmin.xlane.f32.xlu0 %v3253
  %v3255 = vpop.xlane.xlu0 %3254
  %vm3256 = vcmp.eq.f32.partialorder %v3253, %v3255
  %v3257 = vsel %vm3256, %v3252, inf
  %3258 = vmin.xlane.f32.xlu0 %v3257
  %v3259 = vpop.xlane.xlu0 %3258
  %v3260 = vcvt.f32.s32 %v3259
  %v3261 = vcvt.f32.s32 %v3255
  %v3262 = vshll.u32 %v3261, 16
  %v3263 = vadd.s32 %v3262, %v3260
  %vm3264 = vcmp.lt.s32.totalorder %v3218, %v3219
  %v3265 = vsel %vm3264, %v3218, %v3219
  %v3266 = vand.u32 %v3265, 65535
  %v3267 = vshra.s32 %v3265, 16
  %v3268 = vcvt.s32.f32 %v3266
  %v3269 = vcvt.s32.f32 %v3267
  %3270 = vmin.xlane.f32.xlu0 %v3269
  %v3271 = vpop.xlane.xlu0 %3270
  %vm3272 = vcmp.eq.f32.partialorder %v3269, %v3271
  %v3273 = vsel %vm3272, %v3268, inf
  %3274 = vmin.xlane.f32.xlu0 %v3273
  %v3275 = vpop.xlane.xlu0 %3274
  %v3276 = vcvt.f32.s32 %v3275
  %v3277 = vcvt.f32.s32 %v3271
  %v3278 = vshll.u32 %v3277, 16
  %v3279 = vadd.s32 %v3278, %v3276
  %vm3280 = vcmp.lt.s32.totalorder %v3220, %v3221
  %v3281 = vsel %vm3280, %v3220, %v3221
  %v3282 = vand.u32 %v3281, 65535
  %v3283 = vshra.s32 %v3281, 16
  %v3284 = vcvt.s32.f32 %v3282
  %v3285 = vcvt.s32.f32 %v3283
  %3286 = vmin.xlane.f32.xlu0 %v3285
  %v3287 = vpop.xlane.xlu0 %3286
  %vm3288 = vcmp.eq.f32.partialorder %v3285, %v3287
  %v3289 = vsel %vm3288, %v3284, inf
  %3290 = vmin.xlane.f32.xlu0 %v3289
  %v3291 = vpop.xlane.xlu0 %3290
  %v3292 = vcvt.f32.s32 %v3291
  %v3293 = vcvt.f32.s32 %v3287
  %v3294 = vshll.u32 %v3293, 16
  %v3295 = vadd.s32 %v3294, %v3292
  %vm3296 = vcmp.lt.s32.totalorder %v3222, %v3223
  %v3297 = vsel %vm3296, %v3222, %v3223
  %v3298 = vand.u32 %v3297, 65535
  %v3299 = vshra.s32 %v3297, 16
  %v3300 = vcvt.s32.f32 %v3298
  %v3301 = vcvt.s32.f32 %v3299
  %3302 = vmin.xlane.f32.xlu0 %v3301
  %v3303 = vpop.xlane.xlu0 %3302
  %vm3304 = vcmp.eq.f32.partialorder %v3301, %v3303
  %v3305 = vsel %vm3304, %v3300, inf
  %3306 = vmin.xlane.f32.xlu0 %v3305
  %v3307 = vpop.xlane.xlu0 %3306
  %v3308 = vcvt.f32.s32 %v3307
  %v3309 = vcvt.f32.s32 %v3303
  %v3310 = vshll.u32 %v3309, 16
  %v3311 = vadd.s32 %v3310, %v3308
  %vm3312 = vcmp.lt.s32.totalorder %v3224, %v3225
  %v3313 = vsel %vm3312, %v3224, %v3225
  %v3314 = vand.u32 %v3313, 65535
  %v3315 = vshra.s32 %v3313, 16
  %v3316 = vcvt.s32.f32 %v3314
  %v3317 = vcvt.s32.f32 %v3315
  %3318 = vmin.xlane.f32.xlu0 %v3317
  %v3319 = vpop.xlane.xlu0 %3318
  %vm3320 = vcmp.eq.f32.partialorder %v3317, %v3319
  %v3321 = vsel %vm3320, %v3316, inf
  %3322 = vmin.xlane.f32.xlu0 %v3321
  %v3323 = vpop.xlane.xlu0 %3322
  %v3324 = vcvt.f32.s32 %v3323
  %v3325 = vcvt.f32.s32 %v3319
  %v3326 = vshll.u32 %v3325, 16
  %v3327 = vadd.s32 %v3326, %v3324
  %vm3328 = vcmp.lt.s32.totalorder %v3226, %v3227
  %v3329 = vsel %vm3328, %v3226, %v3227
  %v3330 = vand.u32 %v3329, 65535
  %v3331 = vshra.s32 %v3329, 16
  %v3332 = vcvt.s32.f32 %v3330
  %v3333 = vcvt.s32.f32 %v3331
  %3334 = vmin.xlane.f32.xlu0 %v3333
  %v3335 = vpop.xlane.xlu0 %3334
  %vm3336 = vcmp.eq.f32.partialorder %v3333, %v3335
  %v3337 = vsel %vm3336, %v3332, inf
  %3338 = vmin.xlane.f32.xlu0 %v3337
  %v3339 = vpop.xlane.xlu0 %3338
  %v3340 = vcvt.f32.s32 %v3339
  %v3341 = vcvt.f32.s32 %v3335
  %v3342 = vshll.u32 %v3341, 16
  %v3343 = vadd.s32 %v3342, %v3340
  %vm3344 = vcmp.lt.s32.totalorder %v3228, %v3229
  %v3345 = vsel %vm3344, %v3228, %v3229
  %v3346 = vand.u32 %v3345, 65535
  %v3347 = vshra.s32 %v3345, 16
  %v3348 = vcvt.s32.f32 %v3346
  %v3349 = vcvt.s32.f32 %v3347
  %3350 = vmin.xlane.f32.xlu0 %v3349
  %v3351 = vpop.xlane.xlu0 %3350
  %vm3352 = vcmp.eq.f32.partialorder %v3349, %v3351
  %v3353 = vsel %vm3352, %v3348, inf
  %3354 = vmin.xlane.f32.xlu0 %v3353
  %v3355 = vpop.xlane.xlu0 %3354
  %v3356 = vcvt.f32.s32 %v3355
  %v3357 = vcvt.f32.s32 %v3351
  %v3358 = vshll.u32 %v3357, 16
  %v3359 = vadd.s32 %v3358, %v3356
  %vm3360 = vcmp.lt.s32.totalorder %v3230, %v3231
  %v3361 = vsel %vm3360, %v3230, %v3231
  %v3362 = vand.u32 %v3361, 65535
  %v3363 = vshra.s32 %v3361, 16
  %v3364 = vcvt.s32.f32 %v3362
  %v3365 = vcvt.s32.f32 %v3363
  %3366 = vmin.xlane.f32.xlu0 %v3365
  %v3367 = vpop.xlane.xlu0 %3366
  %vm3368 = vcmp.eq.f32.partialorder %v3365, %v3367
  %v3369 = vsel %vm3368, %v3364, inf
  %3370 = vmin.xlane.f32.xlu0 %v3369
  %v3371 = vpop.xlane.xlu0 %3370
  %v3372 = vcvt.f32.s32 %v3371
  %v3373 = vcvt.f32.s32 %v3367
  %v3374 = vshll.u32 %v3373, 16
  %v3375 = vadd.s32 %v3374, %v3372
  %vm3376 = vcmp.lt.s32.totalorder %v3232, %v3233
  %v3377 = vsel %vm3376, %v3232, %v3233
  %v3378 = vand.u32 %v3377, 65535
  %v3379 = vshra.s32 %v3377, 16
  %v3380 = vcvt.s32.f32 %v3378
  %v3381 = vcvt.s32.f32 %v3379
  %3382 = vmin.xlane.f32.xlu0 %v3381
  %v3383 = vpop.xlane.xlu0 %3382
  %vm3384 = vcmp.eq.f32.partialorder %v3381, %v3383
  %v3385 = vsel %vm3384, %v3380, inf
  %3386 = vmin.xlane.f32.xlu0 %v3385
  %v3387 = vpop.xlane.xlu0 %3386
  %v3388 = vcvt.f32.s32 %v3387
  %v3389 = vcvt.f32.s32 %v3383
  %v3390 = vshll.u32 %v3389, 16
  %v3391 = vadd.s32 %v3390, %v3388
  %vm3392 = vcmp.lt.s32.totalorder %v3234, %v3235
  %v3393 = vsel %vm3392, %v3234, %v3235
  %v3394 = vand.u32 %v3393, 65535
  %v3395 = vshra.s32 %v3393, 16
  %v3396 = vcvt.s32.f32 %v3394
  %v3397 = vcvt.s32.f32 %v3395
  %3398 = vmin.xlane.f32.xlu0 %v3397
  %v3399 = vpop.xlane.xlu0 %3398
  %vm3400 = vcmp.eq.f32.partialorder %v3397, %v3399
  %v3401 = vsel %vm3400, %v3396, inf
  %3402 = vmin.xlane.f32.xlu0 %v3401
  %v3403 = vpop.xlane.xlu0 %3402
  %v3404 = vcvt.f32.s32 %v3403
  %v3405 = vcvt.f32.s32 %v3399
  %v3406 = vshll.u32 %v3405, 16
  %v3407 = vadd.s32 %v3406, %v3404
  %vm3408 = vcmp.lt.s32.totalorder %v3236, %v3237
  %v3409 = vsel %vm3408, %v3236, %v3237
  %v3410 = vand.u32 %v3409, 65535
  %v3411 = vshra.s32 %v3409, 16
  %v3412 = vcvt.s32.f32 %v3410
  %v3413 = vcvt.s32.f32 %v3411
  %3414 = vmin.xlane.f32.xlu0 %v3413
  %v3415 = vpop.xlane.xlu0 %3414
  %vm3416 = vcmp.eq.f32.partialorder %v3413, %v3415
  %v3417 = vsel %vm3416, %v3412, inf
  %3418 = vmin.xlane.f32.xlu0 %v3417
  %v3419 = vpop.xlane.xlu0 %3418
  %v3420 = vcvt.f32.s32 %v3419
  %v3421 = vcvt.f32.s32 %v3415
  %v3422 = vshll.u32 %v3421, 16
  %v3423 = vadd.s32 %v3422, %v3420
  %vm3424 = vcmp.lt.s32.totalorder %v3238, %v3239
  %v3425 = vsel %vm3424, %v3238, %v3239
  %v3426 = vand.u32 %v3425, 65535
  %v3427 = vshra.s32 %v3425, 16
  %v3428 = vcvt.s32.f32 %v3426
  %v3429 = vcvt.s32.f32 %v3427
  %3430 = vmin.xlane.f32.xlu0 %v3429
  %v3431 = vpop.xlane.xlu0 %3430
  %vm3432 = vcmp.eq.f32.partialorder %v3429, %v3431
  %v3433 = vsel %vm3432, %v3428, inf
  %3434 = vmin.xlane.f32.xlu0 %v3433
  %v3435 = vpop.xlane.xlu0 %3434
  %v3436 = vcvt.f32.s32 %v3435
  %v3437 = vcvt.f32.s32 %v3431
  %v3438 = vshll.u32 %v3437, 16
  %v3439 = vadd.s32 %v3438, %v3436
  %vm3440 = vcmp.lt.s32.totalorder %v3240, %v3241
  %v3441 = vsel %vm3440, %v3240, %v3241
  %v3442 = vand.u32 %v3441, 65535
  %v3443 = vshra.s32 %v3441, 16
  %v3444 = vcvt.s32.f32 %v3442
  %v3445 = vcvt.s32.f32 %v3443
  %3446 = vmin.xlane.f32.xlu0 %v3445
  %v3447 = vpop.xlane.xlu0 %3446
  %vm3448 = vcmp.eq.f32.partialorder %v3445, %v3447
  %v3449 = vsel %vm3448, %v3444, inf
  %3450 = vmin.xlane.f32.xlu0 %v3449
  %v3451 = vpop.xlane.xlu0 %3450
  %v3452 = vcvt.f32.s32 %v3451
  %v3453 = vcvt.f32.s32 %v3447
  %v3454 = vshll.u32 %v3453, 16
  %v3455 = vadd.s32 %v3454, %v3452
  %vm3456 = vcmp.lt.s32.totalorder %v3242, %v3243
  %v3457 = vsel %vm3456, %v3242, %v3243
  %v3458 = vand.u32 %v3457, 65535
  %v3459 = vshra.s32 %v3457, 16
  %v3460 = vcvt.s32.f32 %v3458
  %v3461 = vcvt.s32.f32 %v3459
  %3462 = vmin.xlane.f32.xlu0 %v3461
  %v3463 = vpop.xlane.xlu0 %3462
  %vm3464 = vcmp.eq.f32.partialorder %v3461, %v3463
  %v3465 = vsel %vm3464, %v3460, inf
  %3466 = vmin.xlane.f32.xlu0 %v3465
  %v3467 = vpop.xlane.xlu0 %3466
  %v3468 = vcvt.f32.s32 %v3467
  %v3469 = vcvt.f32.s32 %v3463
  %v3470 = vshll.u32 %v3469, 16
  %v3471 = vadd.s32 %v3470, %v3468
  %vm3472 = vcmp.lt.s32.totalorder %v3244, %v3245
  %v3473 = vsel %vm3472, %v3244, %v3245
  %v3474 = vand.u32 %v3473, 65535
  %v3475 = vshra.s32 %v3473, 16
  %v3476 = vcvt.s32.f32 %v3474
  %v3477 = vcvt.s32.f32 %v3475
  %3478 = vmin.xlane.f32.xlu0 %v3477
  %v3479 = vpop.xlane.xlu0 %3478
  %vm3480 = vcmp.eq.f32.partialorder %v3477, %v3479
  %v3481 = vsel %vm3480, %v3476, inf
  %3482 = vmin.xlane.f32.xlu0 %v3481
  %v3483 = vpop.xlane.xlu0 %3482
  %v3484 = vcvt.f32.s32 %v3483
  %v3485 = vcvt.f32.s32 %v3479
  %v3486 = vshll.u32 %v3485, 16
  %v3487 = vadd.s32 %v3486, %v3484
  %vm3488 = vcmp.lt.s32.totalorder %v3246, %v3247
  %v3489 = vsel %vm3488, %v3246, %v3247
  %v3490 = vand.u32 %v3489, 65535
  %v3491 = vshra.s32 %v3489, 16
  %v3492 = vcvt.s32.f32 %v3490
  %v3493 = vcvt.s32.f32 %v3491
  %3494 = vmin.xlane.f32.xlu0 %v3493
  %v3495 = vpop.xlane.xlu0 %3494
  %vm3496 = vcmp.eq.f32.partialorder %v3493, %v3495
  %v3497 = vsel %vm3496, %v3492, inf
  %3498 = vmin.xlane.f32.xlu0 %v3497
  %v3499 = vpop.xlane.xlu0 %3498
  %v3500 = vcvt.f32.s32 %v3499
  %v3501 = vcvt.f32.s32 %v3495
  %v3502 = vshll.u32 %v3501, 16
  %v3503 = vadd.s32 %v3502, %v3500
  %vm3504 = vcmp.eq.s32.totalorder %v33, %v3263
  %vm3505 = vcmp.eq.s32.totalorder %v34, %v3263
  %vm3506 = vcmp.eq.s32.totalorder %v33, %v3279
  %vm3507 = vcmp.eq.s32.totalorder %v34, %v3279
  %vm3508 = vcmp.eq.s32.totalorder %v33, %v3295
  %vm3509 = vcmp.eq.s32.totalorder %v34, %v3295
  %vm3510 = vcmp.eq.s32.totalorder %v33, %v3311
  %vm3511 = vcmp.eq.s32.totalorder %v34, %v3311
  %vm3512 = vcmp.eq.s32.totalorder %v33, %v3327
  %vm3513 = vcmp.eq.s32.totalorder %v34, %v3327
  %vm3514 = vcmp.eq.s32.totalorder %v33, %v3343
  %vm3515 = vcmp.eq.s32.totalorder %v34, %v3343
  %vm3516 = vcmp.eq.s32.totalorder %v33, %v3359
  %vm3517 = vcmp.eq.s32.totalorder %v34, %v3359
  %vm3518 = vcmp.eq.s32.totalorder %v33, %v3375
  %vm3519 = vcmp.eq.s32.totalorder %v34, %v3375
  %vm3520 = vcmp.eq.s32.totalorder %v33, %v3391
  %vm3521 = vcmp.eq.s32.totalorder %v34, %v3391
  %vm3522 = vcmp.eq.s32.totalorder %v33, %v3407
  %vm3523 = vcmp.eq.s32.totalorder %v34, %v3407
  %vm3524 = vcmp.eq.s32.totalorder %v33, %v3423
  %vm3525 = vcmp.eq.s32.totalorder %v34, %v3423
  %vm3526 = vcmp.eq.s32.totalorder %v33, %v3439
  %vm3527 = vcmp.eq.s32.totalorder %v34, %v3439
  %vm3528 = vcmp.eq.s32.totalorder %v33, %v3455
  %vm3529 = vcmp.eq.s32.totalorder %v34, %v3455
  %vm3530 = vcmp.eq.s32.totalorder %v33, %v3471
  %vm3531 = vcmp.eq.s32.totalorder %v34, %v3471
  %vm3532 = vcmp.eq.s32.totalorder %v33, %v3487
  %vm3533 = vcmp.eq.s32.totalorder %v34, %v3487
  %vm3534 = vcmp.eq.s32.totalorder %v33, %v3503
  %vm3535 = vcmp.eq.s32.totalorder %v34, %v3503
  %v3536 = vsel %vm3504, 1, 0
  %v3537 = vsel %vm3505, 1, 0
  %v3538 = vsel %vm3506, 1, 0
  %v3539 = vsel %vm3507, 1, 0
  %v3540 = vsel %vm3508, 1, 0
  %v3541 = vsel %vm3509, 1, 0
  %v3542 = vsel %vm3510, 1, 0
  %v3543 = vsel %vm3511, 1, 0
  %v3544 = vsel %vm3512, 1, 0
  %v3545 = vsel %vm3513, 1, 0
  %v3546 = vsel %vm3514, 1, 0
  %v3547 = vsel %vm3515, 1, 0
  %v3548 = vsel %vm3516, 1, 0
  %v3549 = vsel %vm3517, 1, 0
  %v3550 = vsel %vm3518, 1, 0
  %v3551 = vsel %vm3519, 1, 0
  %v3552 = vsel %vm3520, 1, 0
  %v3553 = vsel %vm3521, 1, 0
  %v3554 = vsel %vm3522, 1, 0
  %v3555 = vsel %vm3523, 1, 0
  %v3556 = vsel %vm3524, 1, 0
  %v3557 = vsel %vm3525, 1, 0
  %v3558 = vsel %vm3526, 1, 0
  %v3559 = vsel %vm3527, 1, 0
  %v3560 = vsel %vm3528, 1, 0
  %v3561 = vsel %vm3529, 1, 0
  %v3562 = vsel %vm3530, 1, 0
  %v3563 = vsel %vm3531, 1, 0
  %v3564 = vsel %vm3532, 1, 0
  %v3565 = vsel %vm3533, 1, 0
  %v3566 = vsel %vm3534, 1, 0
  %v3567 = vsel %vm3535, 1, 0
  %v3568 = vcvt.s32.f32 %v3536
  %v3569 = vcvt.s32.f32 %v3537
  %v3570 = vcvt.s32.f32 %v3538
  %v3571 = vcvt.s32.f32 %v3539
  %v3572 = vcvt.s32.f32 %v3540
  %v3573 = vcvt.s32.f32 %v3541
  %v3574 = vcvt.s32.f32 %v3542
  %v3575 = vcvt.s32.f32 %v3543
  %v3576 = vcvt.s32.f32 %v3544
  %v3577 = vcvt.s32.f32 %v3545
  %v3578 = vcvt.s32.f32 %v3546
  %v3579 = vcvt.s32.f32 %v3547
  %v3580 = vcvt.s32.f32 %v3548
  %v3581 = vcvt.s32.f32 %v3549
  %v3582 = vcvt.s32.f32 %v3550
  %v3583 = vcvt.s32.f32 %v3551
  %v3584 = vcvt.s32.f32 %v3552
  %v3585 = vcvt.s32.f32 %v3553
  %v3586 = vcvt.s32.f32 %v3554
  %v3587 = vcvt.s32.f32 %v3555
  %v3588 = vcvt.s32.f32 %v3556
  %v3589 = vcvt.s32.f32 %v3557
  %v3590 = vcvt.s32.f32 %v3558
  %v3591 = vcvt.s32.f32 %v3559
  %v3592 = vcvt.s32.f32 %v3560
  %v3593 = vcvt.s32.f32 %v3561
  %v3594 = vcvt.s32.f32 %v3562
  %v3595 = vcvt.s32.f32 %v3563
  %v3596 = vcvt.s32.f32 %v3564
  %v3597 = vcvt.s32.f32 %v3565
  %v3598 = vcvt.s32.f32 %v3566
  %v3599 = vcvt.s32.f32 %v3567
  %3600 = vmatprep.subr.mxu0 0.0
  %3601 = vmatpush1.msra.mxu0 %v2913
  %3602 = vmatprep.subr.mxu0 0.0
  %3603 = vmatpush1.msra.mxu0 %v2912
  %3604 = vmatprep.subr.mxu0 0.0
  %3605 = vmatpush1.msra.mxu0 %v2911
  %3606 = vmatprep.subr.mxu0 0.0
  %3607 = vmatpush1.msra.mxu0 %v2910
  %3608 = vmatprep.subr.mxu0 0.0
  %3609 = vmatpush1.msra.mxu0 %v2909
  %3610 = vmatprep.subr.mxu0 0.0
  %3611 = vmatpush1.msra.mxu0 %v2908
  %3612 = vmatprep.subr.mxu0 0.0
  %3613 = vmatpush1.msra.mxu0 %v2907
  %3614 = vmatprep.subr.mxu0 0.0
  %3615 = vmatpush1.msra.mxu0 %v2906
  %3616 = vmatprep.subr.mxu0 0.0
  %3617 = vmatpush1.msra.mxu0 %v2905
  %3618 = vmatprep.subr.mxu0 0.0
  %3619 = vmatpush1.msra.mxu0 %v2904
  %3620 = vmatprep.subr.mxu0 0.0
  %3621 = vmatpush1.msra.mxu0 %v2903
  %3622 = vmatprep.subr.mxu0 0.0
  %3623 = vmatpush1.msra.mxu0 %v2902
  %3624 = vmatprep.subr.mxu0 0.0
  %3625 = vmatpush1.msra.mxu0 %v2901
  %3626 = vmatprep.subr.mxu0 0.0
  %3627 = vmatpush1.msra.mxu0 %v2900
  %3628 = vmatprep.subr.mxu0 0.0
  %3629 = vmatpush1.msra.mxu0 %v2899
  %3630 = vmatprep.subr.mxu0 0.0
  %3631 = vmatpush1.msra.mxu0 %v2898
  %3632 = vmatprep.subr.mxu0 0.0
  %3633 = vmatpush2.msra.mxu0 %v2929
  %3634 = vmatprep.subr.mxu0 0.0
  %3635 = vmatpush2.msra.mxu0 %v2928
  %3636 = vmatprep.subr.mxu0 0.0
  %3637 = vmatpush2.msra.mxu0 %v2927
  %3638 = vmatprep.subr.mxu0 0.0
  %3639 = vmatpush2.msra.mxu0 %v2926
  %3640 = vmatprep.subr.mxu0 0.0
  %3641 = vmatpush2.msra.mxu0 %v2925
  %3642 = vmatprep.subr.mxu0 0.0
  %3643 = vmatpush2.msra.mxu0 %v2924
  %3644 = vmatprep.subr.mxu0 0.0
  %3645 = vmatpush2.msra.mxu0 %v2923
  %3646 = vmatprep.subr.mxu0 0.0
  %3647 = vmatpush2.msra.mxu0 %v2922
  %3648 = vmatprep.subr.mxu0 0.0
  %3649 = vmatpush2.msra.mxu0 %v2921
  %3650 = vmatprep.subr.mxu0 0.0
  %3651 = vmatpush2.msra.mxu0 %v2920
  %3652 = vmatprep.subr.mxu0 0.0
  %3653 = vmatpush2.msra.mxu0 %v2919
  %3654 = vmatprep.subr.mxu0 0.0
  %3655 = vmatpush2.msra.mxu0 %v2918
  %3656 = vmatprep.subr.mxu0 0.0
  %3657 = vmatpush2.msra.mxu0 %v2917
  %3658 = vmatprep.subr.mxu0 0.0
  %3659 = vmatpush2.msra.mxu0 %v2916
  %3660 = vmatprep.subr.mxu0 0.0
  %3661 = vmatpush2.msra.mxu0 %v2915
  %3662 = vmatprep.subr.mxu0 0.0
  %3663 = vmatpush2.msra.mxu0 %v2914
  %3664 = vmatprep.mubr.f32.mxu0 %v3569
  %3665 = vmatmul.mubr.f32.gmra.mxu0 %v3568
  %v3666 = vpop.f32.mrf.mxu0
  %v3667 = vadd.f32 0.0, %v3666
  %v3668 = vpop.f32.mrf.mxu0
  %3669 = vmatprep.mubr.f32.mxu0 %v3571
  %3670 = vmatmul.mubr.f32.gmra.mxu0 %v3570
  %v3671 = vpop.f32.mrf.mxu0
  %v3672 = vadd.f32 0.0, %v3671
  %v3673 = vpop.f32.mrf.mxu0
  %3674 = vmatprep.mubr.f32.mxu0 %v3573
  %3675 = vmatmul.mubr.f32.gmra.mxu0 %v3572
  %v3676 = vpop.f32.mrf.mxu0
  %v3677 = vadd.f32 0.0, %v3676
  %v3678 = vpop.f32.mrf.mxu0
  %3679 = vmatprep.mubr.f32.mxu0 %v3575
  %3680 = vmatmul.mubr.f32.gmra.mxu0 %v3574
  %v3681 = vpop.f32.mrf.mxu0
  %v3682 = vadd.f32 0.0, %v3681
  %v3683 = vpop.f32.mrf.mxu0
  %3684 = vmatprep.mubr.f32.mxu0 %v3577
  %3685 = vmatmul.mubr.f32.gmra.mxu0 %v3576
  %v3686 = vpop.f32.mrf.mxu0
  %v3687 = vadd.f32 0.0, %v3686
  %v3688 = vpop.f32.mrf.mxu0
  %3689 = vmatprep.mubr.f32.mxu0 %v3579
  %3690 = vmatmul.mubr.f32.gmra.mxu0 %v3578
  %v3691 = vpop.f32.mrf.mxu0
  %v3692 = vadd.f32 0.0, %v3691
  %v3693 = vpop.f32.mrf.mxu0
  %3694 = vmatprep.mubr.f32.mxu0 %v3581
  %3695 = vmatmul.mubr.f32.gmra.mxu0 %v3580
  %v3696 = vpop.f32.mrf.mxu0
  %v3697 = vadd.f32 0.0, %v3696
  %v3698 = vpop.f32.mrf.mxu0
  %3699 = vmatprep.mubr.f32.mxu0 %v3583
  %3700 = vmatmul.mubr.f32.gmra.mxu0 %v3582
  %v3701 = vpop.f32.mrf.mxu0
  %v3702 = vadd.f32 0.0, %v3701
  %v3703 = vpop.f32.mrf.mxu0
  %3704 = vmatprep.mubr.f32.mxu0 %v3585
  %3705 = vmatmul.mubr.f32.gmra.mxu0 %v3584
  %v3706 = vpop.f32.mrf.mxu0
  %v3707 = vadd.f32 0.0, %v3706
  %v3708 = vpop.f32.mrf.mxu0
  %3709 = vmatprep.mubr.f32.mxu0 %v3587
  %3710 = vmatmul.mubr.f32.gmra.mxu0 %v3586
  %v3711 = vpop.f32.mrf.mxu0
  %v3712 = vadd.f32 0.0, %v3711
  %v3713 = vpop.f32.mrf.mxu0
  %3714 = vmatprep.mubr.f32.mxu0 %v3589
  %3715 = vmatmul.mubr.f32.gmra.mxu0 %v3588
  %v3716 = vpop.f32.mrf.mxu0
  %v3717 = vadd.f32 0.0, %v3716
  %v3718 = vpop.f32.mrf.mxu0
  %3719 = vmatprep.mubr.f32.mxu0 %v3591
  %3720 = vmatmul.mubr.f32.gmra.mxu0 %v3590
  %v3721 = vpop.f32.mrf.mxu0
  %v3722 = vadd.f32 0.0, %v3721
  %v3723 = vpop.f32.mrf.mxu0
  %3724 = vmatprep.mubr.f32.mxu0 %v3593
  %3725 = vmatmul.mubr.f32.gmra.mxu0 %v3592
  %v3726 = vpop.f32.mrf.mxu0
  %v3727 = vadd.f32 0.0, %v3726
  %v3728 = vpop.f32.mrf.mxu0
  %3729 = vmatprep.mubr.f32.mxu0 %v3595
  %3730 = vmatmul.mubr.f32.gmra.mxu0 %v3594
  %v3731 = vpop.f32.mrf.mxu0
  %v3732 = vadd.f32 0.0, %v3731
  %v3733 = vpop.f32.mrf.mxu0
  %3734 = vmatprep.mubr.f32.mxu0 %v3597
  %3735 = vmatmul.mubr.f32.gmra.mxu0 %v3596
  %v3736 = vpop.f32.mrf.mxu0
  %v3737 = vadd.f32 0.0, %v3736
  %v3738 = vpop.f32.mrf.mxu0
  %3739 = vmatprep.mubr.f32.mxu0 %v3599
  %3740 = vmatmul.mubr.f32.gmra.mxu0 %v3598
  %v3741 = vpop.f32.mrf.mxu0
  %v3742 = vadd.f32 0.0, %v3741
  %v3743 = vpop.f32.mrf.mxu0
  %3744 = vdwg.mxu0
  %v3745 = vlaneseq
  %v3746 = vshrl.u32 %v3745, 7
  %v3747 = vsub.s32 %v33, %v3746
  %v3748 = vrot.slane %v3263, %v3747
  %v3749 = vlaneseq
  %v3750 = vshrl.u32 %v3749, 7
  %v3751 = vsub.s32 %v885, %v3750
  %v3752 = vrot.slane %v3279, %v3751
  %v3753 = vsel %vm890, %v3752, %v3748
  %v3754 = vlaneseq
  %v3755 = vshrl.u32 %v3754, 7
  %v3756 = vsub.s32 %v892, %v3755
  %v3757 = vrot.slane %v3295, %v3756
  %v3758 = vsel %vm897, %v3757, %v3753
  %v3759 = vlaneseq
  %v3760 = vshrl.u32 %v3759, 7
  %v3761 = vsub.s32 %v899, %v3760
  %v3762 = vrot.slane %v3311, %v3761
  %v3763 = vsel %vm904, %v3762, %v3758
  %v3764 = vlaneseq
  %v3765 = vshrl.u32 %v3764, 7
  %v3766 = vsub.s32 %v906, %v3765
  %v3767 = vrot.slane %v3327, %v3766
  %v3768 = vsel %vm911, %v3767, %v3763
  %v3769 = vlaneseq
  %v3770 = vshrl.u32 %v3769, 7
  %v3771 = vsub.s32 %v913, %v3770
  %v3772 = vrot.slane %v3343, %v3771
  %v3773 = vsel %vm918, %v3772, %v3768
  %v3774 = vlaneseq
  %v3775 = vshrl.u32 %v3774, 7
  %v3776 = vsub.s32 %v920, %v3775
  %v3777 = vrot.slane %v3359, %v3776
  %v3778 = vsel %vm925, %v3777, %v3773
  %v3779 = vlaneseq
  %v3780 = vshrl.u32 %v3779, 7
  %v3781 = vsub.s32 %v927, %v3780
  %v3782 = vrot.slane %v3375, %v3781
  %v3783 = vsel %vm932, %v3782, %v3778
  %v3784 = vlaneseq
  %v3785 = vshrl.u32 %v3784, 7
  %v3786 = vsub.s32 %v934, %v3785
  %v3787 = vrot.slane %v3391, %v3786
  %v3788 = vsel %vm939, %v3787, %v3783
  %v3789 = vlaneseq
  %v3790 = vshrl.u32 %v3789, 7
  %v3791 = vsub.s32 %v941, %v3790
  %v3792 = vrot.slane %v3407, %v3791
  %v3793 = vsel %vm946, %v3792, %v3788
  %v3794 = vlaneseq
  %v3795 = vshrl.u32 %v3794, 7
  %v3796 = vsub.s32 %v948, %v3795
  %v3797 = vrot.slane %v3423, %v3796
  %v3798 = vsel %vm953, %v3797, %v3793
  %v3799 = vlaneseq
  %v3800 = vshrl.u32 %v3799, 7
  %v3801 = vsub.s32 %v955, %v3800
  %v3802 = vrot.slane %v3439, %v3801
  %v3803 = vsel %vm960, %v3802, %v3798
  %v3804 = vlaneseq
  %v3805 = vshrl.u32 %v3804, 7
  %v3806 = vsub.s32 %v962, %v3805
  %v3807 = vrot.slane %v3455, %v3806
  %v3808 = vsel %vm967, %v3807, %v3803
  %v3809 = vlaneseq
  %v3810 = vshrl.u32 %v3809, 7
  %v3811 = vsub.s32 %v969, %v3810
  %v3812 = vrot.slane %v3471, %v3811
  %v3813 = vsel %vm974, %v3812, %v3808
  %v3814 = vlaneseq
  %v3815 = vshrl.u32 %v3814, 7
  %v3816 = vsub.s32 %v976, %v3815
  %v3817 = vrot.slane %v3487, %v3816
  %v3818 = vsel %vm981, %v3817, %v3813
  %v3819 = vlaneseq
  %v3820 = vshrl.u32 %v3819, 7
  %v3821 = vsub.s32 %v983, %v3820
  %v3822 = vrot.slane %v3503, %v3821
  %v3823 = vsel %vm988, %v3822, %v3818
  %s3824 = scalar_lea.vmem %s4, 3
  %3825 = vst [vmem:[%s3824] sm:$0x1] %v3823
  %v3826 = vsub.f32 %v2881, %v3667
  %v3827 = vsub.f32 %v2882, %v3672
  %v3828 = vsub.f32 %v2883, %v3677
  %v3829 = vsub.f32 %v2884, %v3682
  %v3830 = vsub.f32 %v2885, %v3687
  %v3831 = vsub.f32 %v2886, %v3692
  %v3832 = vsub.f32 %v2887, %v3697
  %v3833 = vsub.f32 %v2888, %v3702
  %v3834 = vsub.f32 %v2889, %v3707
  %v3835 = vsub.f32 %v2890, %v3712
  %v3836 = vsub.f32 %v2891, %v3717
  %v3837 = vsub.f32 %v2892, %v3722
  %v3838 = vsub.f32 %v2893, %v3727
  %v3839 = vsub.f32 %v2894, %v3732
  %v3840 = vsub.f32 %v2895, %v3737
  %v3841 = vsub.f32 %v2896, %v3742
  %v3842 = vsub.f32 %v16, %v3826
  %v3843 = vsub.f32 %v17, %v3827
  %v3844 = vsub.f32 %v18, %v3828
  %v3845 = vsub.f32 %v19, %v3829
  %v3846 = vsub.f32 %v20, %v3830
  %v3847 = vsub.f32 %v21, %v3831
  %v3848 = vsub.f32 %v22, %v3832
  %v3849 = vsub.f32 %v23, %v3833
  %v3850 = vsub.f32 %v24, %v3834
  %v3851 = vsub.f32 %v25, %v3835
  %v3852 = vsub.f32 %v26, %v3836
  %v3853 = vsub.f32 %v27, %v3837
  %v3854 = vsub.f32 %v28, %v3838
  %v3855 = vsub.f32 %v29, %v3839
  %v3856 = vsub.f32 %v30, %v3840
  %v3857 = vsub.f32 %v31, %v3841
  %3858 = vst [vmem:[%s3] sm:$0xff] %v3842
  %3859 = vst [vmem:[%s3 + $0x8] sm:$0xff] %v3843
  %3860 = vst [vmem:[%s3 + $0x10] sm:$0xff] %v3844
  %3861 = vst [vmem:[%s3 + $0x18] sm:$0xff] %v3845
  %3862 = vst [vmem:[%s3 + $0x20] sm:$0xff] %v3846
  %3863 = vst [vmem:[%s3 + $0x28] sm:$0xff] %v3847
  %3864 = vst [vmem:[%s3 + $0x30] sm:$0xff] %v3848
  %3865 = vst [vmem:[%s3 + $0x38] sm:$0xff] %v3849
  %3866 = vst [vmem:[%s3 + $0x40] sm:$0xff] %v3850
  %3867 = vst [vmem:[%s3 + $0x48] sm:$0xff] %v3851
  %3868 = vst [vmem:[%s3 + $0x50] sm:$0xff] %v3852
  %3869 = vst [vmem:[%s3 + $0x58] sm:$0xff] %v3853
  %3870 = vst [vmem:[%s3 + $0x60] sm:$0xff] %v3854
  %3871 = vst [vmem:[%s3 + $0x68] sm:$0xff] %v3855
  %3872 = vst [vmem:[%s3 + $0x70] sm:$0xff] %v3856
  %3873 = vst [vmem:[%s3 + $0x78] sm:$0xff] %v3857
  // Predicated region
  $region14: #{residual_vector_quantization_forward.1} parent=0 // pred_check
    _
  $region15: #{residual_vector_quantization_forward.1} parent=0 // pred_check_branch
    %3875 = sbr.rel (0) target = $region17
  $region16: #{residual_vector_quantization_forward.1} parent=0 // pred_region
    _
  $region17: #{residual_vector_quantization_forward.1} parent=0 // pred_fallthru
    _
  // Predicated region
  $region18: #{residual_vector_quantization_forward.1} parent=0 // pred_check
    _
  $region19: #{residual_vector_quantization_forward.1} parent=0 // pred_check_branch
    %3877 = sbr.rel (0) target = $region21
  $region20: #{residual_vector_quantization_forward.1} parent=0 // pred_region
    _
  $region21: #{residual_vector_quantization_forward.1} parent=0 // pred_fallthru
    _
  // Predicated region
  $region22: #{residual_vector_quantization_forward.1} parent=0 // pred_check
    _
  $region23: #{residual_vector_quantization_forward.1} parent=0 // pred_check_branch
    %3879 = sbr.rel (0) target = $region25
  $region24: #{residual_vector_quantization_forward.1} parent=0 // pred_region
    _
  $region25: #{residual_vector_quantization_forward.1} parent=0 // pred_fallthru
    _
  // Predicated region
  $region26: #{residual_vector_quantization_forward.1} parent=0 // pred_check
    _
  $region27: #{residual_vector_quantization_forward.1} parent=0 // pred_check_branch
    %3881 = sbr.rel (0) target = $region29
  $region28: #{residual_vector_quantization_forward.1} parent=0 // pred_region
    _
  $region29: #{residual_vector_quantization_forward.1} parent=0 // pred_fallthru
    _

</llo_original>
